<compile_context>
chip_gen: v5e
topology: v5e:2x2
jax: 0.10.0
libtpu: 0.0.40
codegen_flags: <defaults>
</compile_context>

<pallas_src>
import math
import functools

import jax
import jax.numpy as jnp
from jax import lax
from jax.experimental import pallas as pl
from jax.experimental.pallas import tpu as pltpu

_EPS = 1e-7


def _round_up(x, m):
    return ((x + m - 1) // m) * m


def _atan_f32(x):
    """Cephes-style single-precision atan from abs/mul/where + EUP reciprocals."""
    ax = jnp.abs(x)
    t3p8 = jnp.float32(2.414213562373095)   # tan(3*pi/8)
    tp8 = jnp.float32(0.4142135623730950)   # tan(pi/8)
    big = ax > t3p8
    mid = jnp.logical_and(jnp.logical_not(big), ax > tp8)
    y0 = jnp.where(big, jnp.float32(math.pi / 2.0),
                   jnp.where(mid, jnp.float32(math.pi / 4.0), jnp.float32(0.0)))
    z = jnp.where(big, -pl.reciprocal(ax + jnp.float32(1e-30), approx=True),
                  jnp.where(mid, (ax - 1.0) * pl.reciprocal(ax + 1.0, approx=True), ax))
    zz = z * z
    p = (((jnp.float32(8.05374449538e-2) * zz - jnp.float32(1.38776856032e-1)) * zz
          + jnp.float32(1.99777106478e-1)) * zz
         - jnp.float32(3.33329491539e-1)) * zz * z + z
    y = y0 + p
    return jnp.where(x < 0, -y, y)


def _bbox_loss_kernel(pd_ref, pb_ref, tbl_ref, tbr_ref, an_ref, wml_ref, wmr_ref,
                      iou_out_ref, dfl_out_ref, acc_ref, *, reg_max):
    f32 = jnp.float32
    eps = f32(_EPS)
    step = pl.program_id(1)
    n_steps = pl.num_programs(1)

    @pl.when(step == 0)
    def _init():
        acc_ref[0] = f32(0.0)
        acc_ref[1] = f32(0.0)

    # ------------------- CIoU term (lane-dense (k, TILE_M) layout) -------------------
    pb = pb_ref[...].astype(f32)          # (4, T)  pred boxes  xyxy
    tb = tbl_ref[...].astype(f32)         # (4, T)  target boxes xyxy
    wm = wml_ref[...].astype(f32)         # (1, T)  weight * fg_mask

    b1_x1, b1_y1, b1_x2, b1_y2 = pb[0:1], pb[1:2], pb[2:3], pb[3:4]
    b2_x1, b2_y1, b2_x2, b2_y2 = tb[0:1], tb[1:2], tb[2:3], tb[3:4]

    w1 = b1_x2 - b1_x1
    h1 = b1_y2 - b1_y1 + eps
    w2 = b2_x2 - b2_x1
    h2 = b2_y2 - b2_y1 + eps

    inter = (jnp.maximum(jnp.minimum(b1_x2, b2_x2) - jnp.maximum(b1_x1, b2_x1), 0.0) *
             jnp.maximum(jnp.minimum(b1_y2, b2_y2) - jnp.maximum(b1_y1, b2_y1), 0.0))
    union = w1 * h1 + w2 * h2 - inter + eps
    iou = inter * pl.reciprocal(union, approx=True)

    cw = jnp.maximum(b1_x2, b2_x2) - jnp.minimum(b1_x1, b2_x1)
    ch = jnp.maximum(b1_y2, b2_y2) - jnp.minimum(b1_y1, b2_y1)
    c2 = cw * cw + ch * ch + eps
    rho2 = (jnp.square(b2_x1 + b2_x2 - b1_x1 - b1_x2) +
            jnp.square(b2_y1 + b2_y2 - b1_y1 - b1_y2)) * f32(0.25)
    v = f32(4.0 / math.pi ** 2) * jnp.square(
        _atan_f32(w2 * pl.reciprocal(h2, approx=True)) -
        _atan_f32(w1 * pl.reciprocal(h1, approx=True)))
    # forward value of the torch.no_grad alpha; denominator clamped for numerical safety
    alpha = v * pl.reciprocal(jnp.maximum(v - iou + (1.0 + eps), eps), approx=True)
    ciou = iou - (rho2 * pl.reciprocal(c2, approx=True) + v * alpha)

    iou_partial = jnp.sum(jnp.where(wm > 0.0, (1.0 - ciou) * wm, 0.0))

    # ------------------- DFL term (pred_dist in its native (T, 4*reg_max) slab) -------------------
    W = 4 * reg_max
    pd = pd_ref[...].astype(f32)          # (T, W)
    an = an_ref[...].astype(f32)          # (T, 2)
    tbr = tbr_ref[...].astype(f32)        # (T, 4)
    wmr = wmr_ref[...].astype(f32)        # (T, 1)

    ax, ay = an[:, 0:1], an[:, 1:2]
    tx1, ty1, tx2, ty2 = tbr[:, 0:1], tbr[:, 1:2], tbr[:, 2:3], tbr[:, 3:4]

    lane = lax.broadcasted_iota(jnp.int32, (1, W), 1)
    side = ((lane >= reg_max).astype(jnp.int32)
            + (lane >= 2 * reg_max).astype(jnp.int32)
            + (lane >= 3 * reg_max).astype(jnp.int32))          # 0..3 (l,t,r,b)
    binf = (lane - side * reg_max).astype(f32)                  # bin index within a side

    # bbox2dist targets replicated across each side's reg_max lanes
    tgt = jnp.where(side == 0, ax - tx1,
          jnp.where(side == 1, ay - ty1,
          jnp.where(side == 2, tx2 - ax, ty2 - ay)))            # (T, W)
    tgt = jnp.clip(tgt, 0.0, reg_max - 1 - 0.01)
    tl = tgt.astype(jnp.int32).astype(f32)                      # trunc == floor (tgt >= 0)
    wl = tl + 1.0 - tgt
    wr = 1.0 - wl
    # fused left/right selection coefficients
    coef = wl * (binf == tl).astype(f32) + wr * (binf == tl + 1.0).astype(f32)

    # per-(row,side) log-sum-exp: row-max stabilization + per-side sums on the MXU
    rowmax = jnp.max(pd, axis=-1, keepdims=True)                # (T, 1)
    e = jnp.exp(pd - rowmax)                                    # (T, W)
    gi = lax.broadcasted_iota(jnp.int32, (W, W), 0)
    gj = lax.broadcasted_iota(jnp.int32, (W, W), 1)
    side_i = ((gi >= reg_max).astype(jnp.int32) + (gi >= 2 * reg_max).astype(jnp.int32)
              + (gi >= 3 * reg_max).astype(jnp.int32))
    side_j = ((gj >= reg_max).astype(jnp.int32) + (gj >= 2 * reg_max).astype(jnp.int32)
              + (gj >= 3 * reg_max).astype(jnp.int32))
    G = (side_i == side_j).astype(f32)                          # (W, W) block-diagonal ones
    S = jnp.dot(e, G, preferred_element_type=f32,
                precision=lax.Precision.HIGHEST)                # per-side sum(exp), broadcast
    logS = jnp.log(jnp.maximum(S, f32(1e-30)))                  # underflow guard

    # dfl_row = rowmax + 0.25 * sum_j(logS/reg_max - coef*pd)   (== mean over 4 sides of CE)
    z = logS * f32(1.0 / reg_max) - coef * pd
    guard = wmr > 0.0
    dfl_partial = (jnp.sum(jnp.where(guard, wmr * rowmax, 0.0)) +
                   f32(0.25) * jnp.sum(jnp.where(guard, wmr * z, 0.0)))

    acc_ref[0] = acc_ref[0] + iou_partial
    acc_ref[1] = acc_ref[1] + dfl_partial

    @pl.when(step == n_steps - 1)
    def _finish():
        iou_out_ref[...] = jnp.full(iou_out_ref.shape, acc_ref[0], f32)
        dfl_out_ref[...] = jnp.full(dfl_out_ref.shape, acc_ref[1], f32)


def bbox_loss(pred_dist, pred_bboxes, anchor_points, target_bboxes,
              target_scores, target_scores_sum, fg_mask, *,
              reg_max=16, tile_m=4096, n_cores=2):
    """Forward pass of BboxLoss: returns (loss_iou, loss_dfl)."""
    # TODO(synk): reg_max == 1 (DFL disabled) path is not implemented.
    B, N, _ = pred_bboxes.shape
    M = B * N
    W = 4 * reg_max

    # Only the per-row class-score sum (times fg mask) is needed by the kernel; the full
    # (M, C) score matrix never enters it.  Inputs stay in their native dtype.
    wm = (target_scores.sum(-1) * fg_mask.astype(target_scores.dtype)).reshape(M)

    pd = pred_dist.reshape(M, W)                    # native slab, no transpose
    pb_l = pred_bboxes.reshape(M, 4).T              # (4, M) lane-dense (layout plumbing only)
    tb_l = target_bboxes.reshape(M, 4).T            # (4, M) lane-dense
    tb_r = target_bboxes.reshape(M, 4)              # (M, 4) row layout for DFL targets
    an_r = jnp.broadcast_to(anchor_points[None], (B, N, 2)).reshape(M, 2)

    # grid / tile selection: pad M only up to the (n_cores * steps * tile) granularity
    steps = -(-M // (n_cores * tile_m))
    tile = _round_up(-(-M // (n_cores * steps)), 256)
    mp = n_cores * steps * tile
    pad = mp - M
    if pad:
        pd = jnp.pad(pd, ((0, pad), (0, 0)))
        pb_l = jnp.pad(pb_l, ((0, 0), (0, pad)))
        tb_l = jnp.pad(tb_l, ((0, 0), (0, pad)))
        tb_r = jnp.pad(tb_r, ((0, pad), (0, 0)))
        an_r = jnp.pad(an_r, ((0, pad), (0, 0)))
        wm = jnp.pad(wm, ((0, pad),))
    wm_l = wm.reshape(1, mp)                        # lane-dense copy (CIoU)
    wm_r = wm.reshape(mp, 1)                        # row copy (DFL)

    def row_map(c, i):
        return (c * steps + i, 0)

    def lane_map(c, i):
        return (0, c * steps + i)

    kernel = functools.partial(_bbox_loss_kernel, reg_max=reg_max)
    f32 = jnp.float32

    iou_part, dfl_part = pl.pallas_call(
        kernel,
        out_shape=(jax.ShapeDtypeStruct((n_cores, 8, 128), f32),
                   jax.ShapeDtypeStruct((n_cores, 8, 128), f32)),
        grid=(n_cores, steps),
        in_specs=[
            pl.BlockSpec((tile, W), row_map),       # pred_dist, native layout
            pl.BlockSpec((4, tile), lane_map),      # pred boxes, lane-dense
            pl.BlockSpec((4, tile), lane_map),      # target boxes, lane-dense
            pl.BlockSpec((tile, 4), row_map),       # target boxes, row layout (DFL)
            pl.BlockSpec((tile, 2), row_map),       # anchors, row layout (DFL)
            pl.BlockSpec((1, tile), lane_map),      # weight*fg, lane-dense
            pl.BlockSpec((tile, 1), row_map),       # weight*fg, row layout
        ],
        out_specs=(pl.BlockSpec((1, 8, 128), lambda c, i: (c, 0, 0)),
                   pl.BlockSpec((1, 8, 128), lambda c, i: (c, 0, 0))),
        scratch_shapes=[pltpu.SMEM((2,), f32)],
        compiler_params=pltpu.CompilerParams(
            dimension_semantics=("parallel", "arbitrary"),
            vmem_limit_bytes=48 * 1024 * 1024),
    )(pd, pb_l, tb_l, tb_r, an_r, wm_l, wm_r)

    tss = jnp.asarray(target_scores_sum, f32)
    loss_iou = iou_part[:, 0, 0].sum() / tss
    loss_dfl = dfl_part[:, 0, 0].sum() / tss
    return loss_iou, loss_dfl


def _reference(pred_dist, pred_bboxes, anchor_points, target_bboxes,
               target_scores, target_scores_sum, fg_mask, reg_max=16):
    """Pure-JAX reference mirroring the PyTorch math (masked form of the boolean gather)."""
    eps = 1e-7
    m = fg_mask[..., None].astype(jnp.float32)
    weight = target_scores.sum(-1)[..., None]
    b1_x1, b1_y1, b1_x2, b1_y2 = jnp.split(pred_bboxes, 4, -1)
    b2_x1, b2_y1, b2_x2, b2_y2 = jnp.split(target_bboxes, 4, -1)
    w1, h1 = b1_x2 - b1_x1, b1_y2 - b1_y1 + eps
    w2, h2 = b2_x2 - b2_x1, b2_y2 - b2_y1 + eps
    inter = (jnp.clip(jnp.minimum(b1_x2, b2_x2) - jnp.maximum(b1_x1, b2_x1), 0) *
             jnp.clip(jnp.minimum(b1_y2, b2_y2) - jnp.maximum(b1_y1, b2_y1), 0))
    union = w1 * h1 + w2 * h2 - inter + eps
    iou = inter / union
    cw = jnp.maximum(b1_x2, b2_x2) - jnp.minimum(b1_x1, b2_x1)
    ch = jnp.maximum(b1_y2, b2_y2) - jnp.minimum(b1_y1, b2_y1)
    c2 = cw ** 2 + ch ** 2 + eps
    rho2 = ((b2_x1 + b2_x2 - b1_x1 - b1_x2) ** 2 + (b2_y1 + b2_y2 - b1_y1 - b1_y2) ** 2) / 4
    v = (4 / math.pi ** 2) * (jnp.arctan(w2 / h2) - jnp.arctan(w1 / h1)) ** 2
    alpha = v / (v - iou + (1 + eps))
    ciou = iou - (rho2 / c2 + v * alpha)
    loss_iou = jnp.sum((1.0 - ciou) * weight * m) / target_scores_sum

    ap = anchor_points[None]
    tgt = jnp.clip(jnp.concatenate([ap - target_bboxes[..., :2],
                                    target_bboxes[..., 2:] - ap], -1),
                   0, reg_max - 1 - 0.01)
    tl = tgt.astype(jnp.int32)
    tr = tl + 1
    wl = tl.astype(jnp.float32) + 1 - tgt
    wr = 1 - wl
    logp = jax.nn.log_softmax(pred_dist.reshape(*pred_dist.shape[:2], 4, reg_max), axis=-1)
    ce_l = -jnp.take_along_axis(logp, tl[..., None], -1)[..., 0]
    ce_r = -jnp.take_along_axis(logp, tr[..., None], -1)[..., 0]
    dfl = (ce_l * wl + ce_r * wr).mean(-1, keepdims=True)
    loss_dfl = jnp.sum(dfl * weight * m) / target_scores_sum
    return loss_iou, loss_dfl


if __name__ == "__main__":
    key = jax.random.PRNGKey(0)
    B, N, C, reg_max = 2, 64, 8, 16
    ks = jax.random.split(key, 6)

    # 8x8 anchor grid -> N = 64 anchors
    xs = jnp.arange(8, dtype=jnp.float32) + 0.5
    gx, gy = jnp.meshgrid(xs, xs, indexing="xy")
    anchor_points = jnp.stack([gx.reshape(-1), gy.reshape(-1)], -1)          # (64, 2)

    def rand_boxes(k):
        d = jax.random.uniform(k, (B, N, 4), minval=0.5, maxval=12.0, dtype=jnp.float32)
        ap = anchor_points[None]
        return jnp.concatenate([ap - d[..., :2], ap + d[..., 2:]], -1)       # xyxy

    pred_bboxes = rand_boxes(ks[0])                                          # (2, 64, 4)
    target_bboxes = rand_boxes(ks[1])                                        # (2, 64, 4)
    pred_dist = jax.random.normal(ks[2], (B, N, 4 * reg_max), jnp.float32)   # (2, 64, 64)
    target_scores = jax.random.uniform(ks[3], (B, N, C), dtype=jnp.float32)  # (2, 64, 8)
    fg_mask = jax.random.uniform(ks[4], (B, N)) > 0.5                        # (2, 64) bool
    target_scores_sum = jnp.maximum(target_scores.sum(), 1.0)

    loss_iou, loss_dfl = bbox_loss(pred_dist, pred_bboxes, anchor_points,
                                   target_bboxes, target_scores,
                                   target_scores_sum, fg_mask, reg_max=reg_max)
    jax.block_until_ready((loss_iou, loss_dfl))

    ref_iou, ref_dfl = _reference(pred_dist, pred_bboxes, anchor_points,
                                  target_bboxes, target_scores,
                                  target_scores_sum, fg_mask, reg_max=reg_max)
    # approx reciprocals / MXU group-sums trade ~1e-4 relative accuracy
    assert jnp.allclose(loss_iou, ref_iou, rtol=1e-2, atol=1e-3), (loss_iou, ref_iou)
    assert jnp.allclose(loss_dfl, ref_dfl, rtol=1e-2, atol=1e-3), (loss_dfl, ref_dfl)

    print("KERNEL_OK")
</pallas_src>

<mosaic_0001>
module attributes {stable_mosaic.version = 11 : i64} {
  func.func @_bbox_loss_kernel(%arg0: i32, %arg1: i32, %arg2: memref<256x64xf32, #tpu.memory_space<vmem>>, %arg3: memref<4x256xf32, #tpu.memory_space<vmem>>, %arg4: memref<4x256xf32, #tpu.memory_space<vmem>>, %arg5: memref<256x4xf32, #tpu.memory_space<vmem>>, %arg6: memref<256x2xf32, #tpu.memory_space<vmem>>, %arg7: memref<1x256xf32, #tpu.memory_space<vmem>>, %arg8: memref<256x1xf32, #tpu.memory_space<vmem>>, %arg9: memref<1x8x128xf32, #tpu.memory_space<vmem>>, %arg10: memref<1x8x128xf32, #tpu.memory_space<vmem>>, %arg11: memref<2xf32, #tpu.memory_space<smem>>) attributes {dimension_semantics = [#tpu.dimension_semantics<parallel>, #tpu.dimension_semantics<arbitrary>], iteration_bounds = array<i64: 2, 1>, scalar_prefetch = 0 : i64, scratch_operands = 1 : i64, tpu.core_type = #tpu.core_type<tc>, window_params = [{transform_indices = @transform_0, window_bounds = array<i64: 256, 64>}, {transform_indices = @transform_1, window_bounds = array<i64: 4, 256>}, {transform_indices = @transform_2, window_bounds = array<i64: 4, 256>}, {transform_indices = @transform_3, window_bounds = array<i64: 256, 4>}, {transform_indices = @transform_4, window_bounds = array<i64: 256, 2>}, {transform_indices = @transform_5, window_bounds = array<i64: 1, 256>}, {transform_indices = @transform_6, window_bounds = array<i64: 256, 1>}, {transform_indices = @transform_7, window_bounds = array<i64: 1, 8, 128>}, {transform_indices = @transform_8, window_bounds = array<i64: 1, 8, 128>}]} {
    %c0_i32 = arith.constant 0 : i32
    %0 = arith.cmpi eq, %arg1, %c0_i32 : i32
    %1 = arith.extui %0 : i1 to i32
    %c0_i32_0 = arith.constant 0 : i32
    %2 = arith.cmpi ne, %1, %c0_i32_0 : i32
    scf.if %2 {
      %cst_88 = arith.constant 0.000000e+00 : f32
      %c0_89 = arith.constant 0 : index
      %332 = memref.load %arg11[%c0_89] : memref<2xf32, #tpu.memory_space<smem>>
      memref.store %cst_88, %arg11[%c0_89] : memref<2xf32, #tpu.memory_space<smem>>
      %cst_90 = arith.constant 0.000000e+00 : f32
      %c1_91 = arith.constant 1 : index
      %333 = memref.load %arg11[%c1_91] : memref<2xf32, #tpu.memory_space<smem>>
      memref.store %cst_90, %arg11[%c1_91] : memref<2xf32, #tpu.memory_space<smem>>
    } else {
    }
    %c0 = arith.constant 0 : index
    %c0_1 = arith.constant 0 : index
    %3 = vector.load %arg3[%c0, %c0_1] : memref<4x256xf32, #tpu.memory_space<vmem>>, vector<4x256xf32>
    %c0_2 = arith.constant 0 : index
    %c0_3 = arith.constant 0 : index
    %4 = vector.load %arg4[%c0_2, %c0_3] : memref<4x256xf32, #tpu.memory_space<vmem>>, vector<4x256xf32>
    %c0_4 = arith.constant 0 : index
    %c0_5 = arith.constant 0 : index
    %5 = vector.load %arg7[%c0_4, %c0_5] : memref<1x256xf32, #tpu.memory_space<vmem>>, vector<1x256xf32>
    %6 = vector.extract_strided_slice %3 {offsets = [0, 0], sizes = [1, 256], strides = [1, 1]} : vector<4x256xf32> to vector<1x256xf32>
    %7 = vector.extract_strided_slice %3 {offsets = [1, 0], sizes = [1, 256], strides = [1, 1]} : vector<4x256xf32> to vector<1x256xf32>
    %8 = vector.extract_strided_slice %3 {offsets = [2, 0], sizes = [1, 256], strides = [1, 1]} : vector<4x256xf32> to vector<1x256xf32>
    %9 = vector.extract_strided_slice %3 {offsets = [3, 0], sizes = [1, 256], strides = [1, 1]} : vector<4x256xf32> to vector<1x256xf32>
    %10 = vector.extract_strided_slice %4 {offsets = [0, 0], sizes = [1, 256], strides = [1, 1]} : vector<4x256xf32> to vector<1x256xf32>
    %11 = vector.extract_strided_slice %4 {offsets = [1, 0], sizes = [1, 256], strides = [1, 1]} : vector<4x256xf32> to vector<1x256xf32>
    %12 = vector.extract_strided_slice %4 {offsets = [2, 0], sizes = [1, 256], strides = [1, 1]} : vector<4x256xf32> to vector<1x256xf32>
    %13 = vector.extract_strided_slice %4 {offsets = [3, 0], sizes = [1, 256], strides = [1, 1]} : vector<4x256xf32> to vector<1x256xf32>
    %14 = arith.subf %8, %6 : vector<1x256xf32>
    %15 = arith.subf %9, %7 : vector<1x256xf32>
    %cst = arith.constant 1.000000e-07 : f32
    %16 = vector.broadcast %cst : f32 to vector<1x256xf32>
    %17 = arith.addf %15, %16 : vector<1x256xf32>
    %18 = arith.subf %12, %10 : vector<1x256xf32>
    %19 = arith.subf %13, %11 : vector<1x256xf32>
    %cst_6 = arith.constant 1.000000e-07 : f32
    %20 = vector.broadcast %cst_6 : f32 to vector<1x256xf32>
    %21 = arith.addf %19, %20 : vector<1x256xf32>
    %22 = arith.minimumf %8, %12 : vector<1x256xf32>
    %23 = arith.maximumf %6, %10 : vector<1x256xf32>
    %24 = arith.subf %22, %23 : vector<1x256xf32>
    %cst_7 = arith.constant 0.000000e+00 : f32
    %25 = vector.broadcast %cst_7 : f32 to vector<1x256xf32>
    %26 = arith.maximumf %24, %25 : vector<1x256xf32>
    %27 = arith.minimumf %9, %13 : vector<1x256xf32>
    %28 = arith.maximumf %7, %11 : vector<1x256xf32>
    %29 = arith.subf %27, %28 : vector<1x256xf32>
    %cst_8 = arith.constant 0.000000e+00 : f32
    %30 = vector.broadcast %cst_8 : f32 to vector<1x256xf32>
    %31 = arith.maximumf %29, %30 : vector<1x256xf32>
    %32 = arith.mulf %26, %31 : vector<1x256xf32>
    %33 = arith.mulf %14, %17 : vector<1x256xf32>
    %34 = arith.mulf %18, %21 : vector<1x256xf32>
    %35 = arith.addf %33, %34 : vector<1x256xf32>
    %36 = arith.subf %35, %32 : vector<1x256xf32>
    %cst_9 = arith.constant 1.000000e-07 : f32
    %37 = vector.broadcast %cst_9 : f32 to vector<1x256xf32>
    %38 = arith.addf %36, %37 : vector<1x256xf32>
    %39 = tpu.reciprocal %38 {approx = true} : vector<1x256xf32> -> vector<1x256xf32>
    %40 = arith.mulf %32, %39 : vector<1x256xf32>
    %41 = arith.maximumf %8, %12 : vector<1x256xf32>
    %42 = arith.minimumf %6, %10 : vector<1x256xf32>
    %43 = arith.subf %41, %42 : vector<1x256xf32>
    %44 = arith.maximumf %9, %13 : vector<1x256xf32>
    %45 = arith.minimumf %7, %11 : vector<1x256xf32>
    %46 = arith.subf %44, %45 : vector<1x256xf32>
    %47 = arith.mulf %43, %43 : vector<1x256xf32>
    %48 = arith.mulf %46, %46 : vector<1x256xf32>
    %49 = arith.addf %47, %48 : vector<1x256xf32>
    %cst_10 = arith.constant 1.000000e-07 : f32
    %50 = vector.broadcast %cst_10 : f32 to vector<1x256xf32>
    %51 = arith.addf %49, %50 : vector<1x256xf32>
    %52 = arith.addf %10, %12 : vector<1x256xf32>
    %53 = arith.subf %52, %6 : vector<1x256xf32>
    %54 = arith.subf %53, %8 : vector<1x256xf32>
    %55 = arith.mulf %54, %54 : vector<1x256xf32>
    %56 = arith.addf %11, %13 : vector<1x256xf32>
    %57 = arith.subf %56, %7 : vector<1x256xf32>
    %58 = arith.subf %57, %9 : vector<1x256xf32>
    %59 = arith.mulf %58, %58 : vector<1x256xf32>
    %60 = arith.addf %55, %59 : vector<1x256xf32>
    %cst_11 = arith.constant 2.500000e-01 : f32
    %61 = vector.broadcast %cst_11 : f32 to vector<1x256xf32>
    %62 = arith.mulf %60, %61 : vector<1x256xf32>
    %63 = tpu.reciprocal %21 {approx = true} : vector<1x256xf32> -> vector<1x256xf32>
    %64 = arith.mulf %18, %63 : vector<1x256xf32>
    %65 = math.absf %64 : vector<1x256xf32>
    %cst_12 = arith.constant 2.41421366 : f32
    %66 = vector.broadcast %cst_12 : f32 to vector<1x256xf32>
    %67 = arith.cmpf ogt, %65, %66 : vector<1x256xf32>
    %cst_13 = arith.constant dense<true> : vector<1x256xi1>
    %68 = arith.xori %67, %cst_13 : vector<1x256xi1>
    %cst_14 = arith.constant 0.414213568 : f32
    %69 = vector.broadcast %cst_14 : f32 to vector<1x256xf32>
    %70 = arith.cmpf ogt, %65, %69 : vector<1x256xf32>
    %71 = arith.andi %68, %70 : vector<1x256xi1>
    %cst_15 = arith.constant 0.785398185 : f32
    %cst_16 = arith.constant 0.000000e+00 : f32
    %72 = vector.broadcast %cst_15 : f32 to vector<1x256xf32>
    %73 = vector.broadcast %cst_16 : f32 to vector<1x256xf32>
    %74 = arith.select %71, %72, %73 : vector<1x256xi1>, vector<1x256xf32>
    %cst_17 = arith.constant 1.57079637 : f32
    %75 = vector.broadcast %cst_17 : f32 to vector<1x256xf32>
    %76 = arith.select %67, %75, %74 : vector<1x256xi1>, vector<1x256xf32>
    %cst_18 = arith.constant 1.000000e-30 : f32
    %77 = vector.broadcast %cst_18 : f32 to vector<1x256xf32>
    %78 = arith.addf %65, %77 : vector<1x256xf32>
    %79 = tpu.reciprocal %78 {approx = true} : vector<1x256xf32> -> vector<1x256xf32>
    %cst_19 = arith.constant 0.000000e+00 : f32
    %80 = vector.broadcast %cst_19 : f32 to vector<1x256xf32>
    %81 = arith.subf %80, %79 : vector<1x256xf32>
    %cst_20 = arith.constant 1.000000e+00 : f32
    %82 = vector.broadcast %cst_20 : f32 to vector<1x256xf32>
    %83 = arith.subf %65, %82 : vector<1x256xf32>
    %cst_21 = arith.constant 1.000000e+00 : f32
    %84 = vector.broadcast %cst_21 : f32 to vector<1x256xf32>
    %85 = arith.addf %65, %84 : vector<1x256xf32>
    %86 = tpu.reciprocal %85 {approx = true} : vector<1x256xf32> -> vector<1x256xf32>
    %87 = arith.mulf %83, %86 : vector<1x256xf32>
    %88 = arith.select %71, %87, %65 : vector<1x256xi1>, vector<1x256xf32>
    %89 = arith.select %67, %81, %88 : vector<1x256xi1>, vector<1x256xf32>
    %90 = arith.mulf %89, %89 : vector<1x256xf32>
    %cst_22 = arith.constant 0.0805374458 : f32
    %91 = vector.broadcast %cst_22 : f32 to vector<1x256xf32>
    %92 = arith.mulf %91, %90 : vector<1x256xf32>
    %cst_23 = arith.constant 0.138776854 : f32
    %93 = vector.broadcast %cst_23 : f32 to vector<1x256xf32>
    %94 = arith.subf %92, %93 : vector<1x256xf32>
    %95 = arith.mulf %94, %90 : vector<1x256xf32>
    %cst_24 = arith.constant 0.199777111 : f32
    %96 = vector.broadcast %cst_24 : f32 to vector<1x256xf32>
    %97 = arith.addf %95, %96 : vector<1x256xf32>
    %98 = arith.mulf %97, %90 : vector<1x256xf32>
    %cst_25 = arith.constant 0.333329499 : f32
    %99 = vector.broadcast %cst_25 : f32 to vector<1x256xf32>
    %100 = arith.subf %98, %99 : vector<1x256xf32>
    %101 = arith.mulf %100, %90 : vector<1x256xf32>
    %102 = arith.mulf %101, %89 : vector<1x256xf32>
    %103 = arith.addf %102, %89 : vector<1x256xf32>
    %104 = arith.addf %76, %103 : vector<1x256xf32>
    %cst_26 = arith.constant 0.000000e+00 : f32
    %105 = vector.broadcast %cst_26 : f32 to vector<1x256xf32>
    %106 = arith.cmpf olt, %64, %105 : vector<1x256xf32>
    %cst_27 = arith.constant 0.000000e+00 : f32
    %107 = vector.broadcast %cst_27 : f32 to vector<1x256xf32>
    %108 = arith.subf %107, %104 : vector<1x256xf32>
    %109 = arith.select %106, %108, %104 : vector<1x256xi1>, vector<1x256xf32>
    %110 = tpu.reciprocal %17 {approx = true} : vector<1x256xf32> -> vector<1x256xf32>
    %111 = arith.mulf %14, %110 : vector<1x256xf32>
    %112 = math.absf %111 : vector<1x256xf32>
    %cst_28 = arith.constant 2.41421366 : f32
    %113 = vector.broadcast %cst_28 : f32 to vector<1x256xf32>
    %114 = arith.cmpf ogt, %112, %113 : vector<1x256xf32>
    %cst_29 = arith.constant dense<true> : vector<1x256xi1>
    %115 = arith.xori %114, %cst_29 : vector<1x256xi1>
    %cst_30 = arith.constant 0.414213568 : f32
    %116 = vector.broadcast %cst_30 : f32 to vector<1x256xf32>
    %117 = arith.cmpf ogt, %112, %116 : vector<1x256xf32>
    %118 = arith.andi %115, %117 : vector<1x256xi1>
    %cst_31 = arith.constant 0.785398185 : f32
    %cst_32 = arith.constant 0.000000e+00 : f32
    %119 = vector.broadcast %cst_31 : f32 to vector<1x256xf32>
    %120 = vector.broadcast %cst_32 : f32 to vector<1x256xf32>
    %121 = arith.select %118, %119, %120 : vector<1x256xi1>, vector<1x256xf32>
    %cst_33 = arith.constant 1.57079637 : f32
    %122 = vector.broadcast %cst_33 : f32 to vector<1x256xf32>
    %123 = arith.select %114, %122, %121 : vector<1x256xi1>, vector<1x256xf32>
    %cst_34 = arith.constant 1.000000e-30 : f32
    %124 = vector.broadcast %cst_34 : f32 to vector<1x256xf32>
    %125 = arith.addf %112, %124 : vector<1x256xf32>
    %126 = tpu.reciprocal %125 {approx = true} : vector<1x256xf32> -> vector<1x256xf32>
    %cst_35 = arith.constant 0.000000e+00 : f32
    %127 = vector.broadcast %cst_35 : f32 to vector<1x256xf32>
    %128 = arith.subf %127, %126 : vector<1x256xf32>
    %cst_36 = arith.constant 1.000000e+00 : f32
    %129 = vector.broadcast %cst_36 : f32 to vector<1x256xf32>
    %130 = arith.subf %112, %129 : vector<1x256xf32>
    %cst_37 = arith.constant 1.000000e+00 : f32
    %131 = vector.broadcast %cst_37 : f32 to vector<1x256xf32>
    %132 = arith.addf %112, %131 : vector<1x256xf32>
    %133 = tpu.reciprocal %132 {approx = true} : vector<1x256xf32> -> vector<1x256xf32>
    %134 = arith.mulf %130, %133 : vector<1x256xf32>
    %135 = arith.select %118, %134, %112 : vector<1x256xi1>, vector<1x256xf32>
    %136 = arith.select %114, %128, %135 : vector<1x256xi1>, vector<1x256xf32>
    %137 = arith.mulf %136, %136 : vector<1x256xf32>
    %cst_38 = arith.constant 0.0805374458 : f32
    %138 = vector.broadcast %cst_38 : f32 to vector<1x256xf32>
    %139 = arith.mulf %138, %137 : vector<1x256xf32>
    %cst_39 = arith.constant 0.138776854 : f32
    %140 = vector.broadcast %cst_39 : f32 to vector<1x256xf32>
    %141 = arith.subf %139, %140 : vector<1x256xf32>
    %142 = arith.mulf %141, %137 : vector<1x256xf32>
    %cst_40 = arith.constant 0.199777111 : f32
    %143 = vector.broadcast %cst_40 : f32 to vector<1x256xf32>
    %144 = arith.addf %142, %143 : vector<1x256xf32>
    %145 = arith.mulf %144, %137 : vector<1x256xf32>
    %cst_41 = arith.constant 0.333329499 : f32
    %146 = vector.broadcast %cst_41 : f32 to vector<1x256xf32>
    %147 = arith.subf %145, %146 : vector<1x256xf32>
    %148 = arith.mulf %147, %137 : vector<1x256xf32>
    %149 = arith.mulf %148, %136 : vector<1x256xf32>
    %150 = arith.addf %149, %136 : vector<1x256xf32>
    %151 = arith.addf %123, %150 : vector<1x256xf32>
    %cst_42 = arith.constant 0.000000e+00 : f32
    %152 = vector.broadcast %cst_42 : f32 to vector<1x256xf32>
    %153 = arith.cmpf olt, %111, %152 : vector<1x256xf32>
    %cst_43 = arith.constant 0.000000e+00 : f32
    %154 = vector.broadcast %cst_43 : f32 to vector<1x256xf32>
    %155 = arith.subf %154, %151 : vector<1x256xf32>
    %156 = arith.select %153, %155, %151 : vector<1x256xi1>, vector<1x256xf32>
    %157 = arith.subf %109, %156 : vector<1x256xf32>
    %158 = arith.mulf %157, %157 : vector<1x256xf32>
    %cst_44 = arith.constant 0.405284733 : f32
    %159 = vector.broadcast %cst_44 : f32 to vector<1x256xf32>
    %160 = arith.mulf %159, %158 : vector<1x256xf32>
    %161 = arith.subf %160, %40 : vector<1x256xf32>
    %cst_45 = arith.constant 1.000000e+00 : f32
    %cst_46 = arith.constant 1.000000e-07 : f32
    %162 = arith.addf %cst_45, %cst_46 : f32
    %163 = vector.broadcast %162 : f32 to vector<1x256xf32>
    %164 = arith.addf %161, %163 : vector<1x256xf32>
    %cst_47 = arith.constant 1.000000e-07 : f32
    %165 = vector.broadcast %cst_47 : f32 to vector<1x256xf32>
    %166 = arith.maximumf %164, %165 : vector<1x256xf32>
    %167 = tpu.reciprocal %166 {approx = true} : vector<1x256xf32> -> vector<1x256xf32>
    %168 = arith.mulf %160, %167 : vector<1x256xf32>
    %169 = tpu.reciprocal %51 {approx = true} : vector<1x256xf32> -> vector<1x256xf32>
    %170 = arith.mulf %62, %169 : vector<1x256xf32>
    %171 = arith.mulf %160, %168 : vector<1x256xf32>
    %172 = arith.addf %170, %171 : vector<1x256xf32>
    %173 = arith.subf %40, %172 : vector<1x256xf32>
    %cst_48 = arith.constant 0.000000e+00 : f32
    %174 = vector.broadcast %cst_48 : f32 to vector<1x256xf32>
    %175 = arith.cmpf ogt, %5, %174 : vector<1x256xf32>
    %cst_49 = arith.constant 1.000000e+00 : f32
    %176 = vector.broadcast %cst_49 : f32 to vector<1x256xf32>
    %177 = arith.subf %176, %173 : vector<1x256xf32>
    %178 = arith.mulf %177, %5 : vector<1x256xf32>
    %cst_50 = arith.constant 0.000000e+00 : f32
    %179 = vector.broadcast %cst_50 : f32 to vector<1x256xf32>
    %180 = arith.select %175, %178, %179 : vector<1x256xi1>, vector<1x256xf32>
    %181 = vector.shape_cast %180 : vector<1x256xf32> to vector<1x1x256xf32>
    %cst_51 = arith.constant dense<0.000000e+00> : vector<1xf32>
    %182 = vector.multi_reduction <add>, %181, %cst_51 [1, 2] : vector<1x1x256xf32> to vector<1xf32>
    %183 = vector.shape_cast %182 : vector<1xf32> to vector<1x1x1xf32>
    %184 = vector.extract %183[0, 0, 0] : f32 from vector<1x1x1xf32>
    %c0_52 = arith.constant 0 : index
    %c0_53 = arith.constant 0 : index
    %185 = vector.load %arg2[%c0_52, %c0_53] : memref<256x64xf32, #tpu.memory_space<vmem>>, vector<256x64xf32>
    %c0_54 = arith.constant 0 : index
    %c0_55 = arith.constant 0 : index
    %186 = vector.load %arg6[%c0_54, %c0_55] : memref<256x2xf32, #tpu.memory_space<vmem>>, vector<256x2xf32>
    %c0_56 = arith.constant 0 : index
    %c0_57 = arith.constant 0 : index
    %187 = vector.load %arg5[%c0_56, %c0_57] : memref<256x4xf32, #tpu.memory_space<vmem>>, vector<256x4xf32>
    %c0_58 = arith.constant 0 : index
    %c0_59 = arith.constant 0 : index
    %188 = vector.load %arg8[%c0_58, %c0_59] : memref<256x1xf32, #tpu.memory_space<vmem>>, vector<256x1xf32>
    %189 = vector.extract_strided_slice %186 {offsets = [0, 0], sizes = [256, 1], strides = [1, 1]} : vector<256x2xf32> to vector<256x1xf32>
    %190 = vector.extract_strided_slice %186 {offsets = [0, 1], sizes = [256, 1], strides = [1, 1]} : vector<256x2xf32> to vector<256x1xf32>
    %191 = vector.extract_strided_slice %187 {offsets = [0, 0], sizes = [256, 1], strides = [1, 1]} : vector<256x4xf32> to vector<256x1xf32>
    %192 = vector.extract_strided_slice %187 {offsets = [0, 1], sizes = [256, 1], strides = [1, 1]} : vector<256x4xf32> to vector<256x1xf32>
    %193 = vector.extract_strided_slice %187 {offsets = [0, 2], sizes = [256, 1], strides = [1, 1]} : vector<256x4xf32> to vector<256x1xf32>
    %194 = vector.extract_strided_slice %187 {offsets = [0, 3], sizes = [256, 1], strides = [1, 1]} : vector<256x4xf32> to vector<256x1xf32>
    %195 = tpu.iota {dimensions = array<i32: 1>} : vector<1x64xi32>
    %c16_i32 = arith.constant 16 : i32
    %196 = vector.broadcast %c16_i32 : i32 to vector<1x64xi32>
    %197 = arith.cmpi sge, %195, %196 : vector<1x64xi32>
    %198 = arith.extui %197 : vector<1x64xi1> to vector<1x64xi32>
    %c32_i32 = arith.constant 32 : i32
    %199 = vector.broadcast %c32_i32 : i32 to vector<1x64xi32>
    %200 = arith.cmpi sge, %195, %199 : vector<1x64xi32>
    %201 = arith.extui %200 : vector<1x64xi1> to vector<1x64xi32>
    %202 = arith.addi %198, %201 : vector<1x64xi32>
    %c48_i32 = arith.constant 48 : i32
    %203 = vector.broadcast %c48_i32 : i32 to vector<1x64xi32>
    %204 = arith.cmpi sge, %195, %203 : vector<1x64xi32>
    %205 = arith.extui %204 : vector<1x64xi1> to vector<1x64xi32>
    %206 = arith.addi %202, %205 : vector<1x64xi32>
    %c16_i32_60 = arith.constant 16 : i32
    %207 = vector.broadcast %c16_i32_60 : i32 to vector<1x64xi32>
    %208 = arith.muli %206, %207 : vector<1x64xi32>
    %209 = arith.subi %195, %208 : vector<1x64xi32>
    %210 = arith.sitofp %209 : vector<1x64xi32> to vector<1x64xf32>
    %c0_i32_61 = arith.constant 0 : i32
    %211 = vector.broadcast %c0_i32_61 : i32 to vector<1x64xi32>
    %212 = arith.cmpi eq, %206, %211 : vector<1x64xi32>
    %213 = arith.subf %189, %191 : vector<256x1xf32>
    %c1_i32 = arith.constant 1 : i32
    %214 = vector.broadcast %c1_i32 : i32 to vector<1x64xi32>
    %215 = arith.cmpi eq, %206, %214 : vector<1x64xi32>
    %216 = arith.subf %190, %192 : vector<256x1xf32>
    %c2_i32 = arith.constant 2 : i32
    %217 = vector.broadcast %c2_i32 : i32 to vector<1x64xi32>
    %218 = arith.cmpi eq, %206, %217 : vector<1x64xi32>
    %219 = arith.subf %193, %189 : vector<256x1xf32>
    %220 = arith.subf %194, %190 : vector<256x1xf32>
    %221 = vector.shape_cast %218 : vector<1x64xi1> to vector<1x64xi1>
    %222 = vector.broadcast %221 : vector<1x64xi1> to vector<256x64xi1>
    %223 = vector.shape_cast %219 : vector<256x1xf32> to vector<256x1xf32>
    %224 = vector.broadcast %223 : vector<256x1xf32> to vector<256x64xf32>
    %225 = vector.shape_cast %220 : vector<256x1xf32> to vector<256x1xf32>
    %226 = vector.broadcast %225 : vector<256x1xf32> to vector<256x64xf32>
    %227 = arith.select %222, %224, %226 : vector<256x64xi1>, vector<256x64xf32>
    %228 = vector.shape_cast %215 : vector<1x64xi1> to vector<1x64xi1>
    %229 = vector.broadcast %228 : vector<1x64xi1> to vector<256x64xi1>
    %230 = vector.shape_cast %216 : vector<256x1xf32> to vector<256x1xf32>
    %231 = vector.broadcast %230 : vector<256x1xf32> to vector<256x64xf32>
    %232 = arith.select %229, %231, %227 : vector<256x64xi1>, vector<256x64xf32>
    %233 = vector.shape_cast %212 : vector<1x64xi1> to vector<1x64xi1>
    %234 = vector.broadcast %233 : vector<1x64xi1> to vector<256x64xi1>
    %235 = vector.shape_cast %213 : vector<256x1xf32> to vector<256x1xf32>
    %236 = vector.broadcast %235 : vector<256x1xf32> to vector<256x64xf32>
    %237 = arith.select %234, %236, %232 : vector<256x64xi1>, vector<256x64xf32>
    %cst_62 = arith.constant 0.000000e+00 : f32
    %cst_63 = arith.constant 1.499000e+01 : f32
    %238 = vector.broadcast %cst_62 : f32 to vector<256x64xf32>
    %239 = arith.maximumf %238, %237 : vector<256x64xf32>
    %240 = vector.broadcast %cst_63 : f32 to vector<256x64xf32>
    %241 = arith.minimumf %240, %239 : vector<256x64xf32>
    %242 = arith.fptosi %241 : vector<256x64xf32> to vector<256x64xi32>
    %243 = arith.sitofp %242 : vector<256x64xi32> to vector<256x64xf32>
    %cst_64 = arith.constant 1.000000e+00 : f32
    %244 = vector.broadcast %cst_64 : f32 to vector<256x64xf32>
    %245 = arith.addf %243, %244 : vector<256x64xf32>
    %246 = arith.subf %245, %241 : vector<256x64xf32>
    %cst_65 = arith.constant 1.000000e+00 : f32
    %247 = vector.broadcast %cst_65 : f32 to vector<256x64xf32>
    %248 = arith.subf %247, %246 : vector<256x64xf32>
    %249 = vector.broadcast %210 : vector<1x64xf32> to vector<256x64xf32>
    %250 = arith.cmpf oeq, %249, %243 : vector<256x64xf32>
    %251 = arith.extui %250 : vector<256x64xi1> to vector<256x64xi32>
    %252 = arith.sitofp %251 : vector<256x64xi32> to vector<256x64xf32>
    %253 = arith.mulf %246, %252 : vector<256x64xf32>
    %cst_66 = arith.constant 1.000000e+00 : f32
    %254 = vector.broadcast %cst_66 : f32 to vector<256x64xf32>
    %255 = arith.addf %243, %254 : vector<256x64xf32>
    %256 = vector.broadcast %210 : vector<1x64xf32> to vector<256x64xf32>
    %257 = arith.cmpf oeq, %256, %255 : vector<256x64xf32>
    %258 = arith.extui %257 : vector<256x64xi1> to vector<256x64xi32>
    %259 = arith.sitofp %258 : vector<256x64xi32> to vector<256x64xf32>
    %260 = arith.mulf %248, %259 : vector<256x64xf32>
    %261 = arith.addf %253, %260 : vector<256x64xf32>
    %cst_67 = arith.constant dense<0xFF800000> : vector<256xf32>
    %262 = vector.multi_reduction <maximumf>, %185, %cst_67 [1] : vector<256x64xf32> to vector<256xf32>
    %263 = vector.shape_cast %262 : vector<256xf32> to vector<256x1xf32>
    %264 = vector.broadcast %263 : vector<256x1xf32> to vector<256x64xf32>
    %265 = arith.subf %185, %264 : vector<256x64xf32>
    %266 = math.exp %265 : vector<256x64xf32>
    %267 = tpu.iota {dimensions = array<i32: 0>} : vector<64x64xi32>
    %268 = tpu.iota {dimensions = array<i32: 1>} : vector<64x64xi32>
    %c16_i32_68 = arith.constant 16 : i32
    %269 = vector.broadcast %c16_i32_68 : i32 to vector<64x64xi32>
    %270 = arith.cmpi sge, %267, %269 : vector<64x64xi32>
    %271 = arith.extui %270 : vector<64x64xi1> to vector<64x64xi32>
    %c32_i32_69 = arith.constant 32 : i32
    %272 = vector.broadcast %c32_i32_69 : i32 to vector<64x64xi32>
    %273 = arith.cmpi sge, %267, %272 : vector<64x64xi32>
    %274 = arith.extui %273 : vector<64x64xi1> to vector<64x64xi32>
    %275 = arith.addi %271, %274 : vector<64x64xi32>
    %c48_i32_70 = arith.constant 48 : i32
    %276 = vector.broadcast %c48_i32_70 : i32 to vector<64x64xi32>
    %277 = arith.cmpi sge, %267, %276 : vector<64x64xi32>
    %278 = arith.extui %277 : vector<64x64xi1> to vector<64x64xi32>
    %279 = arith.addi %275, %278 : vector<64x64xi32>
    %c16_i32_71 = arith.constant 16 : i32
    %280 = vector.broadcast %c16_i32_71 : i32 to vector<64x64xi32>
    %281 = arith.cmpi sge, %268, %280 : vector<64x64xi32>
    %282 = arith.extui %281 : vector<64x64xi1> to vector<64x64xi32>
    %c32_i32_72 = arith.constant 32 : i32
    %283 = vector.broadcast %c32_i32_72 : i32 to vector<64x64xi32>
    %284 = arith.cmpi sge, %268, %283 : vector<64x64xi32>
    %285 = arith.extui %284 : vector<64x64xi1> to vector<64x64xi32>
    %286 = arith.addi %282, %285 : vector<64x64xi32>
    %c48_i32_73 = arith.constant 48 : i32
    %287 = vector.broadcast %c48_i32_73 : i32 to vector<64x64xi32>
    %288 = arith.cmpi sge, %268, %287 : vector<64x64xi32>
    %289 = arith.extui %288 : vector<64x64xi1> to vector<64x64xi32>
    %290 = arith.addi %286, %289 : vector<64x64xi32>
    %291 = arith.cmpi eq, %279, %290 : vector<64x64xi32>
    %292 = arith.extui %291 : vector<64x64xi1> to vector<64x64xi32>
    %293 = arith.sitofp %292 : vector<64x64xi32> to vector<64x64xf32>
    %cst_74 = arith.constant dense<0.000000e+00> : vector<256x64xf32>
    %294 = tpu.matmul %266, %293, %cst_74 {dimension_numbers = #tpu.dot_dimension_numbers<[1], [0], [0], [1], [0, 0, 1, 1], [], []>, precision = #tpu.contract_precision<fp32>} : vector<256x64xf32>, vector<64x64xf32>, vector<256x64xf32> -> vector<256x64xf32>
    %cst_75 = arith.constant 1.000000e-30 : f32
    %295 = vector.broadcast %cst_75 : f32 to vector<256x64xf32>
    %296 = arith.maximumf %294, %295 : vector<256x64xf32>
    %297 = math.log %296 : vector<256x64xf32>
    %cst_76 = arith.constant 6.250000e-02 : f32
    %298 = vector.broadcast %cst_76 : f32 to vector<256x64xf32>
    %299 = arith.mulf %297, %298 : vector<256x64xf32>
    %300 = arith.mulf %261, %185 : vector<256x64xf32>
    %301 = arith.subf %299, %300 : vector<256x64xf32>
    %cst_77 = arith.constant 0.000000e+00 : f32
    %302 = vector.broadcast %cst_77 : f32 to vector<256x1xf32>
    %303 = arith.cmpf ogt, %188, %302 : vector<256x1xf32>
    %304 = arith.mulf %188, %263 : vector<256x1xf32>
    %cst_78 = arith.constant 0.000000e+00 : f32
    %305 = vector.broadcast %cst_78 : f32 to vector<256x1xf32>
    %306 = arith.select %303, %304, %305 : vector<256x1xi1>, vector<256x1xf32>
    %307 = vector.shape_cast %306 : vector<256x1xf32> to vector<1x256x1xf32>
    %cst_79 = arith.constant dense<0.000000e+00> : vector<1xf32>
    %308 = vector.multi_reduction <add>, %307, %cst_79 [1, 2] : vector<1x256x1xf32> to vector<1xf32>
    %309 = vector.shape_cast %308 : vector<1xf32> to vector<1x1x1xf32>
    %310 = vector.extract %309[0, 0, 0] : f32 from vector<1x1x1xf32>
    %311 = vector.broadcast %188 : vector<256x1xf32> to vector<256x64xf32>
    %312 = arith.mulf %311, %301 : vector<256x64xf32>
    %cst_80 = arith.constant 0.000000e+00 : f32
    %313 = vector.shape_cast %303 : vector<256x1xi1> to vector<256x1xi1>
    %314 = vector.broadcast %313 : vector<256x1xi1> to vector<256x64xi1>
    %315 = vector.broadcast %cst_80 : f32 to vector<256x64xf32>
    %316 = arith.select %314, %312, %315 : vector<256x64xi1>, vector<256x64xf32>
    %317 = vector.shape_cast %316 : vector<256x64xf32> to vector<1x256x64xf32>
    %cst_81 = arith.constant dense<0.000000e+00> : vector<1xf32>
    %318 = vector.multi_reduction <add>, %317, %cst_81 [1, 2] : vector<1x256x64xf32> to vector<1xf32>
    %319 = vector.shape_cast %318 : vector<1xf32> to vector<1x1x1xf32>
    %320 = vector.extract %319[0, 0, 0] : f32 from vector<1x1x1xf32>
    %cst_82 = arith.constant 2.500000e-01 : f32
    %321 = arith.mulf %cst_82, %320 : f32
    %322 = arith.addf %310, %321 : f32
    %c0_83 = arith.constant 0 : index
    %323 = memref.load %arg11[%c0_83] : memref<2xf32, #tpu.memory_space<smem>>
    %324 = arith.addf %323, %184 : f32
    %c0_84 = arith.constant 0 : index
    %325 = memref.load %arg11[%c0_84] : memref<2xf32, #tpu.memory_space<smem>>
    memref.store %324, %arg11[%c0_84] : memref<2xf32, #tpu.memory_space<smem>>
    %c1 = arith.constant 1 : index
    %326 = memref.load %arg11[%c1] : memref<2xf32, #tpu.memory_space<smem>>
    %327 = arith.addf %326, %322 : f32
    %c1_85 = arith.constant 1 : index
    %328 = memref.load %arg11[%c1_85] : memref<2xf32, #tpu.memory_space<smem>>
    memref.store %327, %arg11[%c1_85] : memref<2xf32, #tpu.memory_space<smem>>
    %c0_i32_86 = arith.constant 0 : i32
    %329 = arith.cmpi eq, %arg1, %c0_i32_86 : i32
    %330 = arith.extui %329 : i1 to i32
    %c0_i32_87 = arith.constant 0 : i32
    %331 = arith.cmpi ne, %330, %c0_i32_87 : i32
    scf.if %331 {
      %c0_88 = arith.constant 0 : index
      %332 = memref.load %arg11[%c0_88] : memref<2xf32, #tpu.memory_space<smem>>
      %333 = vector.broadcast %332 : f32 to vector<1x8x128xf32>
      %c0_89 = arith.constant 0 : index
      %c0_90 = arith.constant 0 : index
      %c0_91 = arith.constant 0 : index
      %334 = vector.load %arg9[%c0_89, %c0_90, %c0_91] : memref<1x8x128xf32, #tpu.memory_space<vmem>>, vector<1x8x128xf32>
      tpu.vector_store %arg9[%c0_89, %c0_90, %c0_91], %333 {strides = array<i32>} : memref<1x8x128xf32, #tpu.memory_space<vmem>>, vector<1x8x128xf32>,
      %c1_92 = arith.constant 1 : index
      %335 = memref.load %arg11[%c1_92] : memref<2xf32, #tpu.memory_space<smem>>
      %336 = vector.broadcast %335 : f32 to vector<1x8x128xf32>
      %c0_93 = arith.constant 0 : index
      %c0_94 = arith.constant 0 : index
      %c0_95 = arith.constant 0 : index
      %337 = vector.load %arg10[%c0_93, %c0_94, %c0_95] : memref<1x8x128xf32, #tpu.memory_space<vmem>>, vector<1x8x128xf32>
      tpu.vector_store %arg10[%c0_93, %c0_94, %c0_95], %336 {strides = array<i32>} : memref<1x8x128xf32, #tpu.memory_space<vmem>>, vector<1x8x128xf32>,
    } else {
    }
    return
  }
  func.func @transform_0(%arg0: i32, %arg1: i32) -> (i32, i32) {
    %c1_i32 = arith.constant 1 : i32
    %0 = arith.muli %arg0, %c1_i32 : i32
    %1 = arith.addi %0, %arg1 : i32
    %c0_i32 = arith.constant 0 : i32
    %c0_i32_0 = arith.constant 0 : i32
    return %1, %c0_i32 : i32, i32
  }
  func.func @transform_1(%arg0: i32, %arg1: i32) -> (i32, i32) {
    %c1_i32 = arith.constant 1 : i32
    %0 = arith.muli %arg0, %c1_i32 : i32
    %1 = arith.addi %0, %arg1 : i32
    %c0_i32 = arith.constant 0 : i32
    %c0_i32_0 = arith.constant 0 : i32
    return %c0_i32, %1 : i32, i32
  }
  func.func @transform_2(%arg0: i32, %arg1: i32) -> (i32, i32) {
    %c1_i32 = arith.constant 1 : i32
    %0 = arith.muli %arg0, %c1_i32 : i32
    %1 = arith.addi %0, %arg1 : i32
    %c0_i32 = arith.constant 0 : i32
    %c0_i32_0 = arith.constant 0 : i32
    return %c0_i32, %1 : i32, i32
  }
  func.func @transform_3(%arg0: i32, %arg1: i32) -> (i32, i32) {
    %c1_i32 = arith.constant 1 : i32
    %0 = arith.muli %arg0, %c1_i32 : i32
    %1 = arith.addi %0, %arg1 : i32
    %c0_i32 = arith.constant 0 : i32
    %c0_i32_0 = arith.constant 0 : i32
    return %1, %c0_i32 : i32, i32
  }
  func.func @transform_4(%arg0: i32, %arg1: i32) -> (i32, i32) {
    %c1_i32 = arith.constant 1 : i32
    %0 = arith.muli %arg0, %c1_i32 : i32
    %1 = arith.addi %0, %arg1 : i32
    %c0_i32 = arith.constant 0 : i32
    %c0_i32_0 = arith.constant 0 : i32
    return %1, %c0_i32 : i32, i32
  }
  func.func @transform_5(%arg0: i32, %arg1: i32) -> (i32, i32) {
    %c1_i32 = arith.constant 1 : i32
    %0 = arith.muli %arg0, %c1_i32 : i32
    %1 = arith.addi %0, %arg1 : i32
    %c0_i32 = arith.constant 0 : i32
    %c0_i32_0 = arith.constant 0 : i32
    return %c0_i32, %1 : i32, i32
  }
  func.func @transform_6(%arg0: i32, %arg1: i32) -> (i32, i32) {
    %c1_i32 = arith.constant 1 : i32
    %0 = arith.muli %arg0, %c1_i32 : i32
    %1 = arith.addi %0, %arg1 : i32
    %c0_i32 = arith.constant 0 : i32
    %c0_i32_0 = arith.constant 0 : i32
    return %1, %c0_i32 : i32, i32
  }
  func.func @transform_7(%arg0: i32, %arg1: i32) -> (i32, i32, i32) {
    %c0_i32 = arith.constant 0 : i32
    %c0_i32_0 = arith.constant 0 : i32
    %c0_i32_1 = arith.constant 0 : i32
    return %arg0, %c0_i32, %c0_i32_0 : i32, i32, i32
  }
  func.func @transform_8(%arg0: i32, %arg1: i32) -> (i32, i32, i32) {
    %c0_i32 = arith.constant 0 : i32
    %c0_i32_0 = arith.constant 0 : i32
    %c0_i32_1 = arith.constant 0 : i32
    return %arg0, %c0_i32, %c0_i32_0 : i32, i32, i32
  }
}

</mosaic_0001>

<llo_original>
// kernel: tpu_custom_call.1
$region0: #{tpu_custom_call.1}
  #allocation0 [shape = 'u32[]', space=smem, size = 0x4, offset = 0x4, fixed_abs, tag = 'smem constant byte address 0x4 - core index']
  #allocation1 [shape = 'u32[72,128]{1,0:T(1,128)}', space=vmem, size = 0x9000, scoped, tag = 'internal scratch']
  #allocation2 [shape = 'f32[2]{0:T(128)}', space=smem, size = 0x200, scoped, tag = 'scratch operand']
  %s0 = inlined_call_operand.vmem [shape: f32[512,64], index: 0, kind: input, shape index: {}]
  %s1 = inlined_call_operand.vmem [shape: f32[4,512], index: 1, kind: input, shape index: {}]
  %s2 = inlined_call_operand.vmem [shape: f32[4,512], index: 2, kind: input, shape index: {}]
  %s3 = inlined_call_operand.vmem [shape: f32[512,4], index: 3, kind: input, shape index: {}]
  %s4 = inlined_call_operand.vmem [shape: f32[512,2], index: 4, kind: input, shape index: {}]
  %s5 = inlined_call_operand.vmem [shape: f32[1,512], index: 5, kind: input, shape index: {}]
  %s6 = inlined_call_operand.vmem [shape: f32[512,1], index: 6, kind: input, shape index: {}]
  %s7 = inlined_call_operand.hbm [shape: f32[2,8,128], index: 7, kind: output, shape index: {0}]
  %s8 = inlined_call_operand.hbm [shape: f32[2,8,128], index: 8, kind: output, shape index: {1}]
  %9 = xla_tuple %s7, %s8
  %s10 = sld [smem:[#allocation0]]
  $region77: #{tpu_custom_call.1} parent=0
    _
  %s12 = ssub.s32 1, %s10
  %s13 = scalar_select 0, %s12, %s10
  $region1: #{tpu_custom_call.1} parent=0
    #allocation3 [shape = 'u8[8192]{0}', space=vmem, size = 0x2000, scoped, tag = 'output window, operand 0']
    #allocation4 [shape = 's32[2]{0}', space=sflag, size = 0x8, scoped, tag = 'scoped memory for tpu_custom_call.1']
    #allocation5 [shape = 'u8[8192]{0}', space=vmem, size = 0x2000, scoped, tag = 'output window, operand 1']
    #allocation6 [shape = 's32[2]{0}', space=sflag, size = 0x8, scoped, tag = 'scoped memory for tpu_custom_call.1']
    %14 = vsyncpa [#allocation4], 0
    %s15 = scalar_lea.sflag [#allocation4], 1
    %16 = vsyncpa %s15, 0
    %17 = vsyncpa [#allocation6], 0
    %s18 = scalar_lea.sflag [#allocation6], 1
    %19 = vsyncpa %s18, 0
    loop: start=0, step=1, limit=4
    $region2: #{tpu_custom_call.1} parent=1 // loop_pre_header
      _
    $region3: #{tpu_custom_call.1} parent=1 // loop_header
      %s21 = sphi 0, %s25
      %p22 = scmp.ge.s32.totalorder %s21, 4
      %s28 = sphi 0, %s40
      %s29 = sphi 0, %s36
      %s30 = sphi 0, %s28
      %s31 = sphi 0, %s29
      %s32 = sphi 0, %s30
      %s33 = sphi 0, %s31
      %s45 = sphi 0, %s47
      %s48 = sphi 0, %s45
      %s49 = sphi 0, %s48
      %s65 = sphi 0, %s49
      %s73 = sphi 0, %s75
      %s76 = sphi 0, %s73
      %s77 = sphi 0, %s76
      %s93 = sphi 0, %s77
      %s101 = sphi 0, %s103
      %s104 = sphi 0, %s101
      %s105 = sphi 0, %s104
      %s121 = sphi 0, %s105
      %s129 = sphi 0, %s131
      %s132 = sphi 0, %s129
      %s133 = sphi 0, %s132
      %s149 = sphi 0, %s133
      %s157 = sphi 0, %s159
      %s160 = sphi 0, %s157
      %s161 = sphi 0, %s160
      %s177 = sphi 0, %s161
      %s185 = sphi 0, %s187
      %s188 = sphi 0, %s185
      %s189 = sphi 0, %s188
      %s205 = sphi 0, %s189
      %s213 = sphi 0, %s215
      %s216 = sphi 0, %s213
      %s217 = sphi 0, %s216
      %s233 = sphi 0, %s217
      %s239 = sphi 0, %s241
      %s242 = sphi 0, %s239
      %s243 = sphi 0, %s242
      %s259 = sphi 0, %s243
      %s265 = sphi 0, %s267
      %s268 = sphi 0, %s265
      %s269 = sphi 0, %s268
      %s285 = sphi 0, %s269
    $region4: #{tpu_custom_call.1} parent=1 // loop_header_branch
      %24 = sbr.rel (%p22) target = $region8
    $region5: #{tpu_custom_call.1} parent=1 // loop_body
      %s26 = ssub.s32 %s21, 1
      %s27 = ssub.s32 %s21, 2
      %s34 = sadd.s32 1, %s29
      %p35 = scmp.ge.s32.totalorder %s34, 1
      %s36 = scalar_select %p35, 0, %s34
      %s37 = sadd.s32 1, %s28
      %s38 = scalar_select %p35, %s37, %s28
      %p39 = scmp.ge.s32.totalorder %s38, 2
      %s40 = scalar_select %p39, 0, %s38
      %s41 = sadd.s32 %s28, %s29
      %s42 = sadd.s32 %s40, %s36
      %s43 = ssub.s32 %s41, %s42
      %p44 = scmp.eq.s32.totalorder %s43, 0
      %s46 = sadd.s32 %s45, 1
      %s47 = scalar_select %p44, %s45, %s46
      %p50 = pneg %p44
      %p51 = scmp.eq.s32.totalorder %s21, 1
      %p52 = por %p50, %p51
      %p53 = scmp.ne.s32.totalorder %s45, %s48
      %p54 = scmp.eq.s32.totalorder %s21, 0
      %p55 = por %p53, %p54
      %p56 = scmp.ne.s32.totalorder %s45, %s48
      %p57 = scmp.eq.s32.totalorder %s26, 1
      %p58 = por %p56, %p57
      %p59 = scmp.ne.s32.totalorder %s48, %s49
      %p60 = scmp.eq.s32.totalorder %s26, 0
      %p61 = por %p59, %p60
      %p62 = scmp.ne.s32.totalorder %s48, %s49
      %p63 = scmp.eq.s32.totalorder %s27, 1
      %p64 = por %p62, %p63
      %p66 = scmp.ne.s32.totalorder %s49, %s65
      %p67 = scmp.eq.s32.totalorder %s27, 0
      %p68 = por %p66, %p67
      %s69 = sadd.s32 %s28, %s29
      %s70 = sadd.s32 %s40, %s36
      %s71 = ssub.s32 %s69, %s70
      %p72 = scmp.eq.s32.totalorder %s71, 0
      %s74 = sadd.s32 %s73, 1
      %s75 = scalar_select %p72, %s73, %s74
      %p78 = pneg %p72
      %p79 = scmp.eq.s32.totalorder %s21, 1
      %p80 = por %p78, %p79
      %p81 = scmp.ne.s32.totalorder %s73, %s76
      %p82 = scmp.eq.s32.totalorder %s21, 0
      %p83 = por %p81, %p82
      %p84 = scmp.ne.s32.totalorder %s73, %s76
      %p85 = scmp.eq.s32.totalorder %s26, 1
      %p86 = por %p84, %p85
      %p87 = scmp.ne.s32.totalorder %s76, %s77
      %p88 = scmp.eq.s32.totalorder %s26, 0
      %p89 = por %p87, %p88
      %p90 = scmp.ne.s32.totalorder %s76, %s77
      %p91 = scmp.eq.s32.totalorder %s27, 1
      %p92 = por %p90, %p91
      %p94 = scmp.ne.s32.totalorder %s77, %s93
      %p95 = scmp.eq.s32.totalorder %s27, 0
      %p96 = por %p94, %p95
      %s97 = sadd.s32 %s28, %s29
      %s98 = sadd.s32 %s40, %s36
      %s99 = ssub.s32 %s97, %s98
      %p100 = scmp.eq.s32.totalorder %s99, 0
      %s102 = sadd.s32 %s101, 1
      %s103 = scalar_select %p100, %s101, %s102
      %p106 = pneg %p100
      %p107 = scmp.eq.s32.totalorder %s21, 1
      %p108 = por %p106, %p107
      %p109 = scmp.ne.s32.totalorder %s101, %s104
      %p110 = scmp.eq.s32.totalorder %s21, 0
      %p111 = por %p109, %p110
      %p112 = scmp.ne.s32.totalorder %s101, %s104
      %p113 = scmp.eq.s32.totalorder %s26, 1
      %p114 = por %p112, %p113
      %p115 = scmp.ne.s32.totalorder %s104, %s105
      %p116 = scmp.eq.s32.totalorder %s26, 0
      %p117 = por %p115, %p116
      %p118 = scmp.ne.s32.totalorder %s104, %s105
      %p119 = scmp.eq.s32.totalorder %s27, 1
      %p120 = por %p118, %p119
      %p122 = scmp.ne.s32.totalorder %s105, %s121
      %p123 = scmp.eq.s32.totalorder %s27, 0
      %p124 = por %p122, %p123
      %s125 = sadd.s32 %s28, %s29
      %s126 = sadd.s32 %s40, %s36
      %s127 = ssub.s32 %s125, %s126
      %p128 = scmp.eq.s32.totalorder %s127, 0
      %s130 = sadd.s32 %s129, 1
      %s131 = scalar_select %p128, %s129, %s130
      %p134 = pneg %p128
      %p135 = scmp.eq.s32.totalorder %s21, 1
      %p136 = por %p134, %p135
      %p137 = scmp.ne.s32.totalorder %s129, %s132
      %p138 = scmp.eq.s32.totalorder %s21, 0
      %p139 = por %p137, %p138
      %p140 = scmp.ne.s32.totalorder %s129, %s132
      %p141 = scmp.eq.s32.totalorder %s26, 1
      %p142 = por %p140, %p141
      %p143 = scmp.ne.s32.totalorder %s132, %s133
      %p144 = scmp.eq.s32.totalorder %s26, 0
      %p145 = por %p143, %p144
      %p146 = scmp.ne.s32.totalorder %s132, %s133
      %p147 = scmp.eq.s32.totalorder %s27, 1
      %p148 = por %p146, %p147
      %p150 = scmp.ne.s32.totalorder %s133, %s149
      %p151 = scmp.eq.s32.totalorder %s27, 0
      %p152 = por %p150, %p151
      %s153 = sadd.s32 %s28, %s29
      %s154 = sadd.s32 %s40, %s36
      %s155 = ssub.s32 %s153, %s154
      %p156 = scmp.eq.s32.totalorder %s155, 0
      %s158 = sadd.s32 %s157, 1
      %s159 = scalar_select %p156, %s157, %s158
      %p162 = pneg %p156
      %p163 = scmp.eq.s32.totalorder %s21, 1
      %p164 = por %p162, %p163
      %p165 = scmp.ne.s32.totalorder %s157, %s160
      %p166 = scmp.eq.s32.totalorder %s21, 0
      %p167 = por %p165, %p166
      %p168 = scmp.ne.s32.totalorder %s157, %s160
      %p169 = scmp.eq.s32.totalorder %s26, 1
      %p170 = por %p168, %p169
      %p171 = scmp.ne.s32.totalorder %s160, %s161
      %p172 = scmp.eq.s32.totalorder %s26, 0
      %p173 = por %p171, %p172
      %p174 = scmp.ne.s32.totalorder %s160, %s161
      %p175 = scmp.eq.s32.totalorder %s27, 1
      %p176 = por %p174, %p175
      %p178 = scmp.ne.s32.totalorder %s161, %s177
      %p179 = scmp.eq.s32.totalorder %s27, 0
      %p180 = por %p178, %p179
      %s181 = sadd.s32 %s28, %s29
      %s182 = sadd.s32 %s40, %s36
      %s183 = ssub.s32 %s181, %s182
      %p184 = scmp.eq.s32.totalorder %s183, 0
      %s186 = sadd.s32 %s185, 1
      %s187 = scalar_select %p184, %s185, %s186
      %p190 = pneg %p184
      %p191 = scmp.eq.s32.totalorder %s21, 1
      %p192 = por %p190, %p191
      %p193 = scmp.ne.s32.totalorder %s185, %s188
      %p194 = scmp.eq.s32.totalorder %s21, 0
      %p195 = por %p193, %p194
      %p196 = scmp.ne.s32.totalorder %s185, %s188
      %p197 = scmp.eq.s32.totalorder %s26, 1
      %p198 = por %p196, %p197
      %p199 = scmp.ne.s32.totalorder %s188, %s189
      %p200 = scmp.eq.s32.totalorder %s26, 0
      %p201 = por %p199, %p200
      %p202 = scmp.ne.s32.totalorder %s188, %s189
      %p203 = scmp.eq.s32.totalorder %s27, 1
      %p204 = por %p202, %p203
      %p206 = scmp.ne.s32.totalorder %s189, %s205
      %p207 = scmp.eq.s32.totalorder %s27, 0
      %p208 = por %p206, %p207
      %s209 = sadd.s32 %s28, %s29
      %s210 = sadd.s32 %s40, %s36
      %s211 = ssub.s32 %s209, %s210
      %p212 = scmp.eq.s32.totalorder %s211, 0
      %s214 = sadd.s32 %s213, 1
      %s215 = scalar_select %p212, %s213, %s214
      %p218 = pneg %p212
      %p219 = scmp.eq.s32.totalorder %s21, 1
      %p220 = por %p218, %p219
      %p221 = scmp.ne.s32.totalorder %s213, %s216
      %p222 = scmp.eq.s32.totalorder %s21, 0
      %p223 = por %p221, %p222
      %p224 = scmp.ne.s32.totalorder %s213, %s216
      %p225 = scmp.eq.s32.totalorder %s26, 1
      %p226 = por %p224, %p225
      %p227 = scmp.ne.s32.totalorder %s216, %s217
      %p228 = scmp.eq.s32.totalorder %s26, 0
      %p229 = por %p227, %p228
      %p230 = scmp.ne.s32.totalorder %s216, %s217
      %p231 = scmp.eq.s32.totalorder %s27, 1
      %p232 = por %p230, %p231
      %p234 = scmp.ne.s32.totalorder %s217, %s233
      %p235 = scmp.eq.s32.totalorder %s27, 0
      %p236 = por %p234, %p235
      %s237 = ssub.s32 %s28, %s40
      %p238 = scmp.eq.s32.totalorder %s237, 0
      %s240 = sadd.s32 %s239, 1
      %s241 = scalar_select %p238, %s239, %s240
      %p244 = pneg %p238
      %p245 = scmp.eq.s32.totalorder %s21, 1
      %p246 = por %p244, %p245
      %p247 = scmp.ne.s32.totalorder %s239, %s242
      %p248 = scmp.eq.s32.totalorder %s21, 0
      %p249 = por %p247, %p248
      %p250 = scmp.ne.s32.totalorder %s239, %s242
      %p251 = scmp.eq.s32.totalorder %s26, 1
      %p252 = por %p250, %p251
      %p253 = scmp.ne.s32.totalorder %s242, %s243
      %p254 = scmp.eq.s32.totalorder %s26, 0
      %p255 = por %p253, %p254
      %p256 = scmp.ne.s32.totalorder %s242, %s243
      %p257 = scmp.eq.s32.totalorder %s27, 1
      %p258 = por %p256, %p257
      %p260 = scmp.ne.s32.totalorder %s243, %s259
      %p261 = scmp.eq.s32.totalorder %s27, 0
      %p262 = por %p260, %p261
      %s263 = ssub.s32 %s28, %s40
      %p264 = scmp.eq.s32.totalorder %s263, 0
      %s266 = sadd.s32 %s265, 1
      %s267 = scalar_select %p264, %s265, %s266
      %p270 = pneg %p264
      %p271 = scmp.eq.s32.totalorder %s21, 1
      %p272 = por %p270, %p271
      %p273 = scmp.ne.s32.totalorder %s265, %s268
      %p274 = scmp.eq.s32.totalorder %s21, 0
      %p275 = por %p273, %p274
      %p276 = scmp.ne.s32.totalorder %s265, %s268
      %p277 = scmp.eq.s32.totalorder %s26, 1
      %p278 = por %p276, %p277
      %p279 = scmp.ne.s32.totalorder %s268, %s269
      %p280 = scmp.eq.s32.totalorder %s26, 0
      %p281 = por %p279, %p280
      %p282 = scmp.ne.s32.totalorder %s268, %s269
      %p283 = scmp.eq.s32.totalorder %s27, 1
      %p284 = por %p282, %p283
      %p286 = scmp.ne.s32.totalorder %s269, %s285
      %p287 = scmp.eq.s32.totalorder %s27, 0
      %p288 = por %p286, %p287
      %p289 = scmp.le.s32.totalorder 1, %s21
      %p290 = scmp.lt.s32.totalorder %s21, 3
      %p291 = pnand %p289, %p290
      %p292 = pneg %p291
      // Predicated region
      $region9: #{tpu_custom_call.1} parent=5 // pred_check
        _
      $region10: #{tpu_custom_call.1} parent=5 // pred_check_branch
        %294 = sbr.rel (%p291) target = $region12
      $region11: #{tpu_custom_call.1} parent=5 // pred_region
        %s295 = ssub.s32 %s21, 1
      $region12: #{tpu_custom_call.1} parent=5 // pred_fallthru
        _
      %p296 = scmp.lt.s32.totalorder %s21, 2
      // Predicated region
      $region13: #{tpu_custom_call.1} parent=5 // pred_check
        %p297 = pneg %p296
      $region14: #{tpu_custom_call.1} parent=5 // pred_check_branch
        %299 = sbr.rel (%p297) target = $region16
      $region15: #{tpu_custom_call.1} parent=5 // pred_region
        // Predicated region
        $region17: #{tpu_custom_call.1} parent=15 // pred_check
          %p300 = pneg %p55
        $region18: #{tpu_custom_call.1} parent=15 // pred_check_branch
          %302 = sbr.rel (%p300) target = $region20
        $region19: #{tpu_custom_call.1} parent=15 // pred_region
          %s303 = sadd.s32 %s28, %s29
          %s304 = smul.u32 32, %s303
          %p305 = scmp.lt.s32.totalorder %s304, 63
          %s306 = scalar_select %p305, %s304, 63
          %s307 = smul.addr %s306, 8
          %s308 = scalar_lea.vmem %s0, %s307
          %s309 = sadd.s32 %s28, %s29
          %s310 = smul.u32 32, %s309
        $region20: #{tpu_custom_call.1} parent=15 // pred_fallthru
          _
        // Predicated region
        $region21: #{tpu_custom_call.1} parent=15 // pred_check
          %p311 = pneg %p83
        $region22: #{tpu_custom_call.1} parent=15 // pred_check_branch
          %313 = sbr.rel (%p311) target = $region24
        $region23: #{tpu_custom_call.1} parent=15 // pred_region
          %s314 = sadd.s32 %s28, %s29
          %s315 = smul.u32 2, %s314
          %p316 = scmp.lt.s32.totalorder %s315, 3
          %s317 = scalar_select %p316, %s315, 3
          %s318 = smul.addr %s317, 4
          %s319 = scalar_lea.vmem %s1, %s318
          %s320 = sadd.s32 %s28, %s29
          %s321 = smul.u32 2, %s320
        $region24: #{tpu_custom_call.1} parent=15 // pred_fallthru
          _
        // Predicated region
        $region25: #{tpu_custom_call.1} parent=15 // pred_check
          %p322 = pneg %p111
        $region26: #{tpu_custom_call.1} parent=15 // pred_check_branch
          %324 = sbr.rel (%p322) target = $region28
        $region27: #{tpu_custom_call.1} parent=15 // pred_region
          %s325 = sadd.s32 %s28, %s29
          %s326 = smul.u32 2, %s325
          %p327 = scmp.lt.s32.totalorder %s326, 3
          %s328 = scalar_select %p327, %s326, 3
          %s329 = smul.addr %s328, 4
          %s330 = scalar_lea.vmem %s2, %s329
          %s331 = sadd.s32 %s28, %s29
          %s332 = smul.u32 2, %s331
        $region28: #{tpu_custom_call.1} parent=15 // pred_fallthru
          _
        // Predicated region
        $region29: #{tpu_custom_call.1} parent=15 // pred_check
          %p333 = pneg %p139
        $region30: #{tpu_custom_call.1} parent=15 // pred_check_branch
          %335 = sbr.rel (%p333) target = $region32
        $region31: #{tpu_custom_call.1} parent=15 // pred_region
          %s336 = sadd.s32 %s28, %s29
          %s337 = smul.u32 32, %s336
          %p338 = scmp.lt.s32.totalorder %s337, 63
          %s339 = scalar_select %p338, %s337, 63
          %s340 = smul.addr %s339, 8
          %s341 = scalar_lea.vmem %s3, %s340
          %s342 = sadd.s32 %s28, %s29
          %s343 = smul.u32 32, %s342
        $region32: #{tpu_custom_call.1} parent=15 // pred_fallthru
          _
        // Predicated region
        $region33: #{tpu_custom_call.1} parent=15 // pred_check
          %p344 = pneg %p167
        $region34: #{tpu_custom_call.1} parent=15 // pred_check_branch
          %346 = sbr.rel (%p344) target = $region36
        $region35: #{tpu_custom_call.1} parent=15 // pred_region
          %s347 = sadd.s32 %s28, %s29
          %s348 = smul.u32 32, %s347
          %p349 = scmp.lt.s32.totalorder %s348, 63
          %s350 = scalar_select %p349, %s348, 63
          %s351 = smul.addr %s350, 8
          %s352 = scalar_lea.vmem %s4, %s351
          %s353 = sadd.s32 %s28, %s29
          %s354 = smul.u32 32, %s353
        $region36: #{tpu_custom_call.1} parent=15 // pred_fallthru
          _
        // Predicated region
        $region37: #{tpu_custom_call.1} parent=15 // pred_check
          %p355 = pneg %p195
        $region38: #{tpu_custom_call.1} parent=15 // pred_check_branch
          %357 = sbr.rel (%p355) target = $region40
        $region39: #{tpu_custom_call.1} parent=15 // pred_region
          %s358 = sadd.s32 %s28, %s29
          %s359 = smul.u32 2, %s358
          %p360 = scmp.lt.s32.totalorder %s359, 3
          %s361 = scalar_select %p360, %s359, 3
          %s362 = scalar_lea.vmem %s5, %s361
          %s363 = sadd.s32 %s28, %s29
          %s364 = smul.u32 2, %s363
        $region40: #{tpu_custom_call.1} parent=15 // pred_fallthru
          _
        // Predicated region
        $region41: #{tpu_custom_call.1} parent=15 // pred_check
          %p365 = pneg %p223
        $region42: #{tpu_custom_call.1} parent=15 // pred_check_branch
          %367 = sbr.rel (%p365) target = $region44
        $region43: #{tpu_custom_call.1} parent=15 // pred_region
          %s368 = sadd.s32 %s28, %s29
          %s369 = smul.u32 32, %s368
          %p370 = scmp.lt.s32.totalorder %s369, 63
          %s371 = scalar_select %p370, %s369, 63
          %s372 = smul.addr %s371, 8
          %s373 = scalar_lea.vmem %s6, %s372
          %s374 = sadd.s32 %s28, %s29
          %s375 = smul.u32 32, %s374
        $region44: #{tpu_custom_call.1} parent=15 // pred_fallthru
          _
      $region16: #{tpu_custom_call.1} parent=5 // pred_fallthru
        _
      %p376 = scmp.le.s32.totalorder 1, %s21
      %p377 = scmp.lt.s32.totalorder %s21, 3
      %p378 = pnand %p376, %p377
      %p379 = pneg %p378
      // Predicated region
      $region45: #{tpu_custom_call.1} parent=5 // pred_check
        _
      $region46: #{tpu_custom_call.1} parent=5 // pred_check_branch
        %381 = sbr.rel (%p378) target = $region48
      $region47: #{tpu_custom_call.1} parent=5 // pred_region
        %s382 = ssub.s32 %s21, 1
        %s383 = sadd.s32 %s30, %s31
        %s384 = smul.u32 32, %s383
        %p385 = scmp.lt.s32.totalorder %s384, 63
        %s386 = scalar_select %p385, %s384, 63
        %s387 = smul.addr %s386, 8
        %s388 = scalar_lea.vmem %s0, %s387
        %p389 = pneg %p61
        %p390 = pneg %p58
        %s391 = sadd.s32 %s30, %s31
        %s392 = smul.u32 2, %s391
        %p393 = scmp.lt.s32.totalorder %s392, 3
        %s394 = scalar_select %p393, %s392, 3
        %s395 = smul.addr %s394, 4
        %s396 = scalar_lea.vmem %s1, %s395
        %p397 = pneg %p89
        %p398 = pneg %p86
        %s399 = sadd.s32 %s30, %s31
        %s400 = smul.u32 2, %s399
        %p401 = scmp.lt.s32.totalorder %s400, 3
        %s402 = scalar_select %p401, %s400, 3
        %s403 = smul.addr %s402, 4
        %s404 = scalar_lea.vmem %s2, %s403
        %p405 = pneg %p117
        %p406 = pneg %p114
        %s407 = sadd.s32 %s30, %s31
        %s408 = smul.u32 32, %s407
        %p409 = scmp.lt.s32.totalorder %s408, 63
        %s410 = scalar_select %p409, %s408, 63
        %s411 = smul.addr %s410, 8
        %s412 = scalar_lea.vmem %s3, %s411
        %p413 = pneg %p145
        %p414 = pneg %p142
        %s415 = sadd.s32 %s30, %s31
        %s416 = smul.u32 32, %s415
        %p417 = scmp.lt.s32.totalorder %s416, 63
        %s418 = scalar_select %p417, %s416, 63
        %s419 = smul.addr %s418, 8
        %s420 = scalar_lea.vmem %s4, %s419
        %p421 = pneg %p173
        %p422 = pneg %p170
        %s423 = sadd.s32 %s30, %s31
        %s424 = smul.u32 2, %s423
        %p425 = scmp.lt.s32.totalorder %s424, 3
        %s426 = scalar_select %p425, %s424, 3
        %s427 = scalar_lea.vmem %s5, %s426
        %p428 = pneg %p201
        %p429 = pneg %p198
        %s430 = sadd.s32 %s30, %s31
        %s431 = smul.u32 32, %s430
        %p432 = scmp.lt.s32.totalorder %s431, 63
        %s433 = scalar_select %p432, %s431, 63
        %s434 = smul.addr %s433, 8
        %s435 = scalar_lea.vmem %s6, %s434
        %p436 = pneg %p229
        %p437 = pneg %p226
        %p438 = pneg %p255
        %p439 = pneg %p252
        %s440 = sand.u32 %s242, 1
        %s441 = scalar_lea.sflag [#allocation4], %s440
        %s442 = sand.u32 %s242, 1
        %s443 = smul.addr %s442, 8
        %s444 = scalar_lea.vmem [#allocation3], %s443
        %p445 = pneg %p281
        %p446 = pneg %p278
        %s447 = sand.u32 %s268, 1
        %s448 = scalar_lea.sflag [#allocation6], %s447
        %s449 = sand.u32 %s268, 1
        %s450 = smul.addr %s449, 8
        %s451 = scalar_lea.vmem [#allocation5], %s450
        %s452 = sadd.s32 %s30, %s31
        %s453 = smul.u32 32, %s452
        %p454 = scmp.lt.s32.totalorder %s453, 63
        %s455 = scalar_select %p454, %s453, 63
        %s456 = smul.addr %s455, 8
        %s457 = scalar_lea.vmem %s0, %s456
        %s458 = sadd.s32 %s30, %s31
        %s459 = smul.u32 32, %s458
        %s460 = sadd.s32 %s30, %s31
        %s461 = smul.u32 2, %s460
        %p462 = scmp.lt.s32.totalorder %s461, 3
        %s463 = scalar_select %p462, %s461, 3
        %s464 = smul.addr %s463, 4
        %s465 = scalar_lea.vmem %s1, %s464
        %s466 = sadd.s32 %s30, %s31
        %s467 = smul.u32 2, %s466
        %s468 = sadd.s32 %s30, %s31
        %s469 = smul.u32 2, %s468
        %p470 = scmp.lt.s32.totalorder %s469, 3
        %s471 = scalar_select %p470, %s469, 3
        %s472 = smul.addr %s471, 4
        %s473 = scalar_lea.vmem %s2, %s472
        %s474 = sadd.s32 %s30, %s31
        %s475 = smul.u32 2, %s474
        %s476 = sadd.s32 %s30, %s31
        %s477 = smul.u32 32, %s476
        %p478 = scmp.lt.s32.totalorder %s477, 63
        %s479 = scalar_select %p478, %s477, 63
        %s480 = smul.addr %s479, 8
        %s481 = scalar_lea.vmem %s3, %s480
        %s482 = sadd.s32 %s30, %s31
        %s483 = smul.u32 32, %s482
        %s484 = sadd.s32 %s30, %s31
        %s485 = smul.u32 32, %s484
        %p486 = scmp.lt.s32.totalorder %s485, 63
        %s487 = scalar_select %p486, %s485, 63
        %s488 = smul.addr %s487, 8
        %s489 = scalar_lea.vmem %s4, %s488
        %s490 = sadd.s32 %s30, %s31
        %s491 = smul.u32 32, %s490
        %s492 = sadd.s32 %s30, %s31
        %s493 = smul.u32 2, %s492
        %p494 = scmp.lt.s32.totalorder %s493, 3
        %s495 = scalar_select %p494, %s493, 3
        %s496 = scalar_lea.vmem %s5, %s495
        %s497 = sadd.s32 %s30, %s31
        %s498 = smul.u32 2, %s497
        %s499 = sadd.s32 %s30, %s31
        %s500 = smul.u32 32, %s499
        %p501 = scmp.lt.s32.totalorder %s500, 63
        %s502 = scalar_select %p501, %s500, 63
        %s503 = smul.addr %s502, 8
        %s504 = scalar_lea.vmem %s6, %s503
        %s505 = sadd.s32 %s30, %s31
        %s506 = smul.u32 32, %s505
        %p507 = scmp.eq.s32.totalorder %s31, 0
        // Predicated region
        $region49: #{tpu_custom_call.1} parent=47 // pred_check
          %p508 = pneg %p507
        $region50: #{tpu_custom_call.1} parent=47 // pred_check_branch
          %510 = sbr.rel (%p508) target = $region52
        $region51: #{tpu_custom_call.1} parent=47 // pred_region
          %s511 = scalar_lea.smem [#allocation2], 0
          %512 = sst [smem:[%s511]] 0.0
          %s513 = scalar_lea.smem [#allocation2], 1
          %514 = sst [smem:[%s513]] 0.0
        $region52: #{tpu_custom_call.1} parent=47 // pred_fallthru
          _
        %v515 = vld [vmem:[%s465] sm:$0xff]
        %v516 = vld [vmem:[%s473] sm:$0xff]
        %v517 = vld [vmem:[%s496] sm:$0x3]
        %v519 = vrot.slane %v515, 6
        %v521 = vsub.f32 %v515, %v519
        %v522 = vadd.f32 %v521, 1e-07
        %v524 = vrot.slane %v516, 6
        %v526 = vsub.f32 %v516, %v524
        %v527 = vadd.f32 %v526, 1e-07
        %v528 = vmin.f32 %v515, %v516
        %v529 = vmax.f32 %v515, %v516
        %v531 = vrot.slane %v529, 6
        %v533 = vsub.f32 %v528, %v531
        %v534 = vmax.f32 %v533, 0.0
        %v536 = vrot.slane %v534, 5
        %v537 = vrot.slane %v536, 4
        %v539 = vmul.f32 %v534, %v537
        %v541 = vrot.slane %v522, 5
        %v542 = vrot.slane %v541, 4
        %v544 = vmul.f32 %v521, %v542
        %v546 = vrot.slane %v527, 5
        %v547 = vrot.slane %v546, 4
        %v549 = vmul.f32 %v526, %v547
        %v550 = vadd.f32 %v544, %v549
        %v551 = vsub.f32 %v550, %v539
        %v552 = vadd.f32 %v551, 1e-07
        %v553 = vrcp.pop %v552
        %v554 = vmul.f32 %v539, %v553
        %v556 = vrot.slane %v528, 6
        %v558 = vsub.f32 %v529, %v556
        %v559 = vmul.f32 %v558, %v558
        %v561 = vrot.slane %v559, 5
        %v562 = vrot.slane %v561, 4
        %v564 = vadd.f32 %v559, %v562
        %v565 = vadd.f32 %v564, 1e-07
        %v566 = vrot.slane %v524, 4
        %v568 = vadd.f32 %v516, %v566
        %v569 = vsub.f32 %v568, %v515
        %v570 = vrot.slane %v519, 4
        %v572 = vsub.f32 %v569, %v570
        %v573 = vmul.f32 %v572, %v572
        %v575 = vrot.slane %v573, 5
        %v576 = vrot.slane %v575, 4
        %v578 = vadd.f32 %v573, %v576
        %v579 = vmul.f32 %v578, 0.25
        %v580 = vrcp.pop %v527
        %v582 = vrot.slane %v580, 5
        %v583 = vrot.slane %v582, 4
        %v585 = vmul.f32 %v526, %v583
        %v586 = vand.u32 2147483647, %v585
        %vm587 = vcmp.gt.f32.partialorder %v586, 2.4142137
        %vm588 = vmxor %vm587, 1
        %vm589 = vcmp.gt.f32.partialorder %v586, 0.41421357
        %vm590 = vmand %vm588, %vm589
        %v591 = vsel %vm590, 0.7853982, 0.0
        %v592 = vsel %vm587, 1.5707964, %v591
        %v593 = vadd.f32 %v586, 1e-30
        %v594 = vrcp.pop %v593
        %v595 = vsub.f32 0.0, %v594
        %v596 = vsub.f32 %v586, 1.0
        %v597 = vadd.f32 %v586, 1.0
        %v598 = vrcp.pop %v597
        %v599 = vmul.f32 %v596, %v598
        %v600 = vsel %vm590, %v599, %v586
        %v601 = vsel %vm587, %v595, %v600
        %v602 = vmul.f32 %v601, %v601
        %v603 = vmul.f32 %v602, 0.080537446
        %v604 = vsub.f32 %v603, 0.13877685
        %v605 = vmul.f32 %v604, %v602
        %v606 = vadd.f32 %v605, 0.19977711
        %v607 = vmul.f32 %v606, %v602
        %v608 = vsub.f32 %v607, 0.3333295
        %v609 = vmul.f32 %v608, %v602
        %v610 = vmul.f32 %v609, %v601
        %v611 = vadd.f32 %v610, %v601
        %v612 = vadd.f32 %v592, %v611
        %vm613 = vcmp.lt.f32.partialorder %v585, 0.0
        %v614 = vsub.f32 0.0, %v612
        %v615 = vsel %vm613, %v614, %v612
        %v616 = vrcp.pop %v522
        %v618 = vrot.slane %v616, 5
        %v619 = vrot.slane %v618, 4
        %v621 = vmul.f32 %v521, %v619
        %v622 = vand.u32 2147483647, %v621
        %vm623 = vcmp.gt.f32.partialorder %v622, 2.4142137
        %vm624 = vmxor %vm623, 1
        %vm625 = vcmp.gt.f32.partialorder %v622, 0.41421357
        %vm626 = vmand %vm624, %vm625
        %v627 = vsel %vm626, 0.7853982, 0.0
        %v628 = vsel %vm623, 1.5707964, %v627
        %v629 = vadd.f32 %v622, 1e-30
        %v630 = vrcp.pop %v629
        %v631 = vsub.f32 0.0, %v630
        %v632 = vsub.f32 %v622, 1.0
        %v633 = vadd.f32 %v622, 1.0
        %v634 = vrcp.pop %v633
        %v635 = vmul.f32 %v632, %v634
        %v636 = vsel %vm626, %v635, %v622
        %v637 = vsel %vm623, %v631, %v636
        %v638 = vmul.f32 %v637, %v637
        %v639 = vmul.f32 %v638, 0.080537446
        %v640 = vsub.f32 %v639, 0.13877685
        %v641 = vmul.f32 %v640, %v638
        %v642 = vadd.f32 %v641, 0.19977711
        %v643 = vmul.f32 %v642, %v638
        %v644 = vsub.f32 %v643, 0.3333295
        %v645 = vmul.f32 %v644, %v638
        %v646 = vmul.f32 %v645, %v637
        %v647 = vadd.f32 %v646, %v637
        %v648 = vadd.f32 %v628, %v647
        %vm649 = vcmp.lt.f32.partialorder %v621, 0.0
        %v650 = vsub.f32 0.0, %v648
        %v651 = vsel %vm649, %v650, %v648
        %v652 = vsub.f32 %v615, %v651
        %v653 = vmul.f32 %v652, %v652
        %v654 = vmul.f32 %v653, 0.40528473
        %v655 = vsub.f32 %v654, %v554
        %v656 = vadd.f32 %v655, 1.0000001
        %v657 = vmax.f32 %v656, 1e-07
        %v658 = vrcp.pop %v657
        %v659 = vmul.f32 %v654, %v658
        %v660 = vrcp.pop %v565
        %v662 = vrot.slane %v660, 6
        %v663 = vrot.slane %v662, 4
        %v665 = vmul.f32 %v579, %v663
        %v666 = vmul.f32 %v654, %v659
        %v668 = vrot.slane %v666, 6
        %v669 = vrot.slane %v668, 4
        %v671 = vadd.f32 %v665, %v669
        %v673 = vrot.slane %v671, 6
        %v675 = vsub.f32 %v554, %v673
        %vm676 = vcmp.gt.f32.partialorder %v517, 0.0
        %v677 = vsub.f32 1.0, %v675
        %v680 = vunpack.c.l.s4 286326784
        %v681 = vunpack.c.0.s8 %v680
        %v682 = vperm.slane %v517, %v681
        %v684 = vmul.f32 %v677, %v682
        %686 = vst [vmem:[#allocation1] sm:$0xff] %v684
        %s687 = scalar_lea.vmem [#allocation1], 2
        %v688 = vld [vmem:[%s687] ss:$4 sm:$0xff]
        %v690 = vsel %vm676, %v688, 0.0
        %v692 = vperm.slane %v690, 0
        %v693 = vperm.slane %v690, 1
        %vm696 = vcmask 1040384
        %v697 = vsel %vm696, %v692, 0.0
        %v698 = vsel %vm696, %v693, 0.0
        %v699 = vadd.f32 %v697, %v698
        %700 = vadd.xlane.f32.xlu0 %v699
        %v701 = vpop.xlane.xlu0 %700
        %v702 = vrot.slane %v701, 4
        %v703 = vadd.f32 %v701, %v702
        %v704 = vrot.slane %v703, 2
        %v705 = vadd.f32 %v703, %v704
        %v706 = vrot.slane %v705, 1
        %v707 = vadd.f32 %v705, %v706
        %s708 = vtos %v707
        %v709 = vld [vmem:[%s457] sm:$0xff]
        %v710 = vld [vmem:[%s457 + $0x8] sm:$0xff]
        %v711 = vld [vmem:[%s457 + $0x10] sm:$0xff]
        %v712 = vld [vmem:[%s457 + $0x18] sm:$0xff]
        %v713 = vld [vmem:[%s457 + $0x20] sm:$0xff]
        %v714 = vld [vmem:[%s457 + $0x28] sm:$0xff]
        %v715 = vld [vmem:[%s457 + $0x30] sm:$0xff]
        %v716 = vld [vmem:[%s457 + $0x38] sm:$0xff]
        %v717 = vld [vmem:[%s457 + $0x40] sm:$0xff]
        %v718 = vld [vmem:[%s457 + $0x48] sm:$0xff]
        %v719 = vld [vmem:[%s457 + $0x50] sm:$0xff]
        %v720 = vld [vmem:[%s457 + $0x58] sm:$0xff]
        %v721 = vld [vmem:[%s457 + $0x60] sm:$0xff]
        %v722 = vld [vmem:[%s457 + $0x68] sm:$0xff]
        %v723 = vld [vmem:[%s457 + $0x70] sm:$0xff]
        %v724 = vld [vmem:[%s457 + $0x78] sm:$0xff]
        %v725 = vld [vmem:[%s457 + $0x80] sm:$0xff]
        %v726 = vld [vmem:[%s457 + $0x88] sm:$0xff]
        %v727 = vld [vmem:[%s457 + $0x90] sm:$0xff]
        %v728 = vld [vmem:[%s457 + $0x98] sm:$0xff]
        %v729 = vld [vmem:[%s457 + $0xa0] sm:$0xff]
        %v730 = vld [vmem:[%s457 + $0xa8] sm:$0xff]
        %v731 = vld [vmem:[%s457 + $0xb0] sm:$0xff]
        %v732 = vld [vmem:[%s457 + $0xb8] sm:$0xff]
        %v733 = vld [vmem:[%s457 + $0xc0] sm:$0xff]
        %v734 = vld [vmem:[%s457 + $0xc8] sm:$0xff]
        %v735 = vld [vmem:[%s457 + $0xd0] sm:$0xff]
        %v736 = vld [vmem:[%s457 + $0xd8] sm:$0xff]
        %v737 = vld [vmem:[%s457 + $0xe0] sm:$0xff]
        %v738 = vld [vmem:[%s457 + $0xe8] sm:$0xff]
        %v739 = vld [vmem:[%s457 + $0xf0] sm:$0xff]
        %v740 = vld [vmem:[%s457 + $0xf8] sm:$0xff]
        %v741 = vld [vmem:[%s489] sm:$0xff]
        %v742 = vld [vmem:[%s489 + $0x8] sm:$0xff]
        %v743 = vld [vmem:[%s489 + $0x10] sm:$0xff]
        %v744 = vld [vmem:[%s489 + $0x18] sm:$0xff]
        %v745 = vld [vmem:[%s489 + $0x20] sm:$0xff]
        %v746 = vld [vmem:[%s489 + $0x28] sm:$0xff]
        %v747 = vld [vmem:[%s489 + $0x30] sm:$0xff]
        %v748 = vld [vmem:[%s489 + $0x38] sm:$0xff]
        %v749 = vld [vmem:[%s489 + $0x40] sm:$0xff]
        %v750 = vld [vmem:[%s489 + $0x48] sm:$0xff]
        %v751 = vld [vmem:[%s489 + $0x50] sm:$0xff]
        %v752 = vld [vmem:[%s489 + $0x58] sm:$0xff]
        %v753 = vld [vmem:[%s489 + $0x60] sm:$0xff]
        %v754 = vld [vmem:[%s489 + $0x68] sm:$0xff]
        %v755 = vld [vmem:[%s489 + $0x70] sm:$0xff]
        %v756 = vld [vmem:[%s489 + $0x78] sm:$0xff]
        %v757 = vld [vmem:[%s489 + $0x80] sm:$0xff]
        %v758 = vld [vmem:[%s489 + $0x88] sm:$0xff]
        %v759 = vld [vmem:[%s489 + $0x90] sm:$0xff]
        %v760 = vld [vmem:[%s489 + $0x98] sm:$0xff]
        %v761 = vld [vmem:[%s489 + $0xa0] sm:$0xff]
        %v762 = vld [vmem:[%s489 + $0xa8] sm:$0xff]
        %v763 = vld [vmem:[%s489 + $0xb0] sm:$0xff]
        %v764 = vld [vmem:[%s489 + $0xb8] sm:$0xff]
        %v765 = vld [vmem:[%s489 + $0xc0] sm:$0xff]
        %v766 = vld [vmem:[%s489 + $0xc8] sm:$0xff]
        %v767 = vld [vmem:[%s489 + $0xd0] sm:$0xff]
        %v768 = vld [vmem:[%s489 + $0xd8] sm:$0xff]
        %v769 = vld [vmem:[%s489 + $0xe0] sm:$0xff]
        %v770 = vld [vmem:[%s489 + $0xe8] sm:$0xff]
        %v771 = vld [vmem:[%s489 + $0xf0] sm:$0xff]
        %v772 = vld [vmem:[%s489 + $0xf8] sm:$0xff]
        %v773 = vld [vmem:[%s481] sm:$0xff]
        %v774 = vld [vmem:[%s481 + $0x8] sm:$0xff]
        %v775 = vld [vmem:[%s481 + $0x10] sm:$0xff]
        %v776 = vld [vmem:[%s481 + $0x18] sm:$0xff]
        %v777 = vld [vmem:[%s481 + $0x20] sm:$0xff]
        %v778 = vld [vmem:[%s481 + $0x28] sm:$0xff]
        %v779 = vld [vmem:[%s481 + $0x30] sm:$0xff]
        %v780 = vld [vmem:[%s481 + $0x38] sm:$0xff]
        %v781 = vld [vmem:[%s481 + $0x40] sm:$0xff]
        %v782 = vld [vmem:[%s481 + $0x48] sm:$0xff]
        %v783 = vld [vmem:[%s481 + $0x50] sm:$0xff]
        %v784 = vld [vmem:[%s481 + $0x58] sm:$0xff]
        %v785 = vld [vmem:[%s481 + $0x60] sm:$0xff]
        %v786 = vld [vmem:[%s481 + $0x68] sm:$0xff]
        %v787 = vld [vmem:[%s481 + $0x70] sm:$0xff]
        %v788 = vld [vmem:[%s481 + $0x78] sm:$0xff]
        %v789 = vld [vmem:[%s481 + $0x80] sm:$0xff]
        %v790 = vld [vmem:[%s481 + $0x88] sm:$0xff]
        %v791 = vld [vmem:[%s481 + $0x90] sm:$0xff]
        %v792 = vld [vmem:[%s481 + $0x98] sm:$0xff]
        %v793 = vld [vmem:[%s481 + $0xa0] sm:$0xff]
        %v794 = vld [vmem:[%s481 + $0xa8] sm:$0xff]
        %v795 = vld [vmem:[%s481 + $0xb0] sm:$0xff]
        %v796 = vld [vmem:[%s481 + $0xb8] sm:$0xff]
        %v797 = vld [vmem:[%s481 + $0xc0] sm:$0xff]
        %v798 = vld [vmem:[%s481 + $0xc8] sm:$0xff]
        %v799 = vld [vmem:[%s481 + $0xd0] sm:$0xff]
        %v800 = vld [vmem:[%s481 + $0xd8] sm:$0xff]
        %v801 = vld [vmem:[%s481 + $0xe0] sm:$0xff]
        %v802 = vld [vmem:[%s481 + $0xe8] sm:$0xff]
        %v803 = vld [vmem:[%s481 + $0xf0] sm:$0xff]
        %v804 = vld [vmem:[%s481 + $0xf8] sm:$0xff]
        %v805 = vld [vmem:[%s504] sm:$0xff]
        %v806 = vld [vmem:[%s504 + $0x8] sm:$0xff]
        %v807 = vld [vmem:[%s504 + $0x10] sm:$0xff]
        %v808 = vld [vmem:[%s504 + $0x18] sm:$0xff]
        %v809 = vld [vmem:[%s504 + $0x20] sm:$0xff]
        %v810 = vld [vmem:[%s504 + $0x28] sm:$0xff]
        %v811 = vld [vmem:[%s504 + $0x30] sm:$0xff]
        %v812 = vld [vmem:[%s504 + $0x38] sm:$0xff]
        %v813 = vld [vmem:[%s504 + $0x40] sm:$0xff]
        %v814 = vld [vmem:[%s504 + $0x48] sm:$0xff]
        %v815 = vld [vmem:[%s504 + $0x50] sm:$0xff]
        %v816 = vld [vmem:[%s504 + $0x58] sm:$0xff]
        %v817 = vld [vmem:[%s504 + $0x60] sm:$0xff]
        %v818 = vld [vmem:[%s504 + $0x68] sm:$0xff]
        %v819 = vld [vmem:[%s504 + $0x70] sm:$0xff]
        %v820 = vld [vmem:[%s504 + $0x78] sm:$0xff]
        %v821 = vld [vmem:[%s504 + $0x80] sm:$0xff]
        %v822 = vld [vmem:[%s504 + $0x88] sm:$0xff]
        %v823 = vld [vmem:[%s504 + $0x90] sm:$0xff]
        %v824 = vld [vmem:[%s504 + $0x98] sm:$0xff]
        %v825 = vld [vmem:[%s504 + $0xa0] sm:$0xff]
        %v826 = vld [vmem:[%s504 + $0xa8] sm:$0xff]
        %v827 = vld [vmem:[%s504 + $0xb0] sm:$0xff]
        %v828 = vld [vmem:[%s504 + $0xb8] sm:$0xff]
        %v829 = vld [vmem:[%s504 + $0xc0] sm:$0xff]
        %v830 = vld [vmem:[%s504 + $0xc8] sm:$0xff]
        %v831 = vld [vmem:[%s504 + $0xd0] sm:$0xff]
        %v832 = vld [vmem:[%s504 + $0xd8] sm:$0xff]
        %v833 = vld [vmem:[%s504 + $0xe0] sm:$0xff]
        %v834 = vld [vmem:[%s504 + $0xe8] sm:$0xff]
        %v835 = vld [vmem:[%s504 + $0xf0] sm:$0xff]
        %v836 = vld [vmem:[%s504 + $0xf8] sm:$0xff]
        %v837 = vlaneseq
        %v838 = vand.u32 %v837, 127
        %vm839 = vcmp.ge.s32.totalorder %v838, 16
        %v840 = vsel %vm839, 1, 0
        %vm841 = vcmp.ge.s32.totalorder %v838, 32
        %v842 = vsel %vm841, 1, 0
        %v843 = vadd.s32 %v840, %v842
        %vm844 = vcmp.ge.s32.totalorder %v838, 48
        %v845 = vsel %vm844, 1, 0
        %v846 = vadd.s32 %v843, %v845
        %v847 = vmul.u32 %v846, 16
        %v848 = vsub.s32 %v838, %v847
        %v849 = vcvt.s32.f32 %v848
        %vm850 = vcmp.eq.s32.totalorder %v846, 0
        %v851 = vsub.f32 %v741, %v773
        %v852 = vsub.f32 %v742, %v774
        %v853 = vsub.f32 %v743, %v775
        %v854 = vsub.f32 %v744, %v776
        %v855 = vsub.f32 %v745, %v777
        %v856 = vsub.f32 %v746, %v778
        %v857 = vsub.f32 %v747, %v779
        %v858 = vsub.f32 %v748, %v780
        %v859 = vsub.f32 %v749, %v781
        %v860 = vsub.f32 %v750, %v782
        %v861 = vsub.f32 %v751, %v783
        %v862 = vsub.f32 %v752, %v784
        %v863 = vsub.f32 %v753, %v785
        %v864 = vsub.f32 %v754, %v786
        %v865 = vsub.f32 %v755, %v787
        %v866 = vsub.f32 %v756, %v788
        %v867 = vsub.f32 %v757, %v789
        %v868 = vsub.f32 %v758, %v790
        %v869 = vsub.f32 %v759, %v791
        %v870 = vsub.f32 %v760, %v792
        %v871 = vsub.f32 %v761, %v793
        %v872 = vsub.f32 %v762, %v794
        %v873 = vsub.f32 %v763, %v795
        %v874 = vsub.f32 %v764, %v796
        %v875 = vsub.f32 %v765, %v797
        %v876 = vsub.f32 %v766, %v798
        %v877 = vsub.f32 %v767, %v799
        %v878 = vsub.f32 %v768, %v800
        %v879 = vsub.f32 %v769, %v801
        %v880 = vsub.f32 %v770, %v802
        %v881 = vsub.f32 %v771, %v803
        %v882 = vsub.f32 %v772, %v804
        %vm883 = vcmp.eq.s32.totalorder %v846, 1
        %vm884 = vcmp.eq.s32.totalorder %v846, 2
        %917 = vrot.lane.b32.xlu0 %v741, 2
        %v918 = vpop.permute.xlu0 %917
        %919 = vrot.lane.b32.xlu0 %v742, 2
        %v920 = vpop.permute.xlu0 %919
        %921 = vrot.lane.b32.xlu0 %v743, 2
        %v922 = vpop.permute.xlu0 %921
        %923 = vrot.lane.b32.xlu0 %v744, 2
        %v924 = vpop.permute.xlu0 %923
        %925 = vrot.lane.b32.xlu0 %v745, 2
        %v926 = vpop.permute.xlu0 %925
        %927 = vrot.lane.b32.xlu0 %v746, 2
        %v928 = vpop.permute.xlu0 %927
        %929 = vrot.lane.b32.xlu0 %v747, 2
        %v930 = vpop.permute.xlu0 %929
        %931 = vrot.lane.b32.xlu0 %v748, 2
        %v932 = vpop.permute.xlu0 %931
        %933 = vrot.lane.b32.xlu0 %v749, 2
        %v934 = vpop.permute.xlu0 %933
        %935 = vrot.lane.b32.xlu0 %v750, 2
        %v936 = vpop.permute.xlu0 %935
        %937 = vrot.lane.b32.xlu0 %v751, 2
        %v938 = vpop.permute.xlu0 %937
        %939 = vrot.lane.b32.xlu0 %v752, 2
        %v940 = vpop.permute.xlu0 %939
        %941 = vrot.lane.b32.xlu0 %v753, 2
        %v942 = vpop.permute.xlu0 %941
        %943 = vrot.lane.b32.xlu0 %v754, 2
        %v944 = vpop.permute.xlu0 %943
        %945 = vrot.lane.b32.xlu0 %v755, 2
        %v946 = vpop.permute.xlu0 %945
        %947 = vrot.lane.b32.xlu0 %v756, 2
        %v948 = vpop.permute.xlu0 %947
        %949 = vrot.lane.b32.xlu0 %v757, 2
        %v950 = vpop.permute.xlu0 %949
        %951 = vrot.lane.b32.xlu0 %v758, 2
        %v952 = vpop.permute.xlu0 %951
        %953 = vrot.lane.b32.xlu0 %v759, 2
        %v954 = vpop.permute.xlu0 %953
        %955 = vrot.lane.b32.xlu0 %v760, 2
        %v956 = vpop.permute.xlu0 %955
        %957 = vrot.lane.b32.xlu0 %v761, 2
        %v958 = vpop.permute.xlu0 %957
        %959 = vrot.lane.b32.xlu0 %v762, 2
        %v960 = vpop.permute.xlu0 %959
        %961 = vrot.lane.b32.xlu0 %v763, 2
        %v962 = vpop.permute.xlu0 %961
        %963 = vrot.lane.b32.xlu0 %v764, 2
        %v964 = vpop.permute.xlu0 %963
        %965 = vrot.lane.b32.xlu0 %v765, 2
        %v966 = vpop.permute.xlu0 %965
        %967 = vrot.lane.b32.xlu0 %v766, 2
        %v968 = vpop.permute.xlu0 %967
        %969 = vrot.lane.b32.xlu0 %v767, 2
        %v970 = vpop.permute.xlu0 %969
        %971 = vrot.lane.b32.xlu0 %v768, 2
        %v972 = vpop.permute.xlu0 %971
        %973 = vrot.lane.b32.xlu0 %v769, 2
        %v974 = vpop.permute.xlu0 %973
        %975 = vrot.lane.b32.xlu0 %v770, 2
        %v976 = vpop.permute.xlu0 %975
        %977 = vrot.lane.b32.xlu0 %v771, 2
        %v978 = vpop.permute.xlu0 %977
        %979 = vrot.lane.b32.xlu0 %v772, 2
        %v980 = vpop.permute.xlu0 %979
        %v1013 = vsub.f32 %v773, %v918
        %v1014 = vsub.f32 %v774, %v920
        %v1015 = vsub.f32 %v775, %v922
        %v1016 = vsub.f32 %v776, %v924
        %v1017 = vsub.f32 %v777, %v926
        %v1018 = vsub.f32 %v778, %v928
        %v1019 = vsub.f32 %v779, %v930
        %v1020 = vsub.f32 %v780, %v932
        %v1021 = vsub.f32 %v781, %v934
        %v1022 = vsub.f32 %v782, %v936
        %v1023 = vsub.f32 %v783, %v938
        %v1024 = vsub.f32 %v784, %v940
        %v1025 = vsub.f32 %v785, %v942
        %v1026 = vsub.f32 %v786, %v944
        %v1027 = vsub.f32 %v787, %v946
        %v1028 = vsub.f32 %v788, %v948
        %v1029 = vsub.f32 %v789, %v950
        %v1030 = vsub.f32 %v790, %v952
        %v1031 = vsub.f32 %v791, %v954
        %v1032 = vsub.f32 %v792, %v956
        %v1033 = vsub.f32 %v793, %v958
        %v1034 = vsub.f32 %v794, %v960
        %v1035 = vsub.f32 %v795, %v962
        %v1036 = vsub.f32 %v796, %v964
        %v1037 = vsub.f32 %v797, %v966
        %v1038 = vsub.f32 %v798, %v968
        %v1039 = vsub.f32 %v799, %v970
        %v1040 = vsub.f32 %v800, %v972
        %v1041 = vsub.f32 %v801, %v974
        %v1042 = vsub.f32 %v802, %v976
        %v1043 = vsub.f32 %v803, %v978
        %v1044 = vsub.f32 %v804, %v980
        %v1045 = vsel %vm884, 1, 0
        %vm1046 = vcmp.eq.s32.totalorder %v1045, 1
        %1048 = vset.pattern.permute.xlu0 2
        %1049 = vperm.xlu0 %1048, %v1013
        %v1050 = vpop.permute.xlu0 %1049
        %1053 = vset.pattern.permute.xlu0 2
        %1054 = vperm.xlu0 %1053, %v1014
        %v1055 = vpop.permute.xlu0 %1054
        %1058 = vset.pattern.permute.xlu0 2
        %1059 = vperm.xlu0 %1058, %v1015
        %v1060 = vpop.permute.xlu0 %1059
        %1063 = vset.pattern.permute.xlu0 2
        %1064 = vperm.xlu0 %1063, %v1016
        %v1065 = vpop.permute.xlu0 %1064
        %1068 = vset.pattern.permute.xlu0 2
        %1069 = vperm.xlu0 %1068, %v1017
        %v1070 = vpop.permute.xlu0 %1069
        %1073 = vset.pattern.permute.xlu0 2
        %1074 = vperm.xlu0 %1073, %v1018
        %v1075 = vpop.permute.xlu0 %1074
        %1078 = vset.pattern.permute.xlu0 2
        %1079 = vperm.xlu0 %1078, %v1019
        %v1080 = vpop.permute.xlu0 %1079
        %1083 = vset.pattern.permute.xlu0 2
        %1084 = vperm.xlu0 %1083, %v1020
        %v1085 = vpop.permute.xlu0 %1084
        %1088 = vset.pattern.permute.xlu0 2
        %1089 = vperm.xlu0 %1088, %v1021
        %v1090 = vpop.permute.xlu0 %1089
        %1093 = vset.pattern.permute.xlu0 2
        %1094 = vperm.xlu0 %1093, %v1022
        %v1095 = vpop.permute.xlu0 %1094
        %1098 = vset.pattern.permute.xlu0 2
        %1099 = vperm.xlu0 %1098, %v1023
        %v1100 = vpop.permute.xlu0 %1099
        %1103 = vset.pattern.permute.xlu0 2
        %1104 = vperm.xlu0 %1103, %v1024
        %v1105 = vpop.permute.xlu0 %1104
        %1108 = vset.pattern.permute.xlu0 2
        %1109 = vperm.xlu0 %1108, %v1025
        %v1110 = vpop.permute.xlu0 %1109
        %1113 = vset.pattern.permute.xlu0 2
        %1114 = vperm.xlu0 %1113, %v1026
        %v1115 = vpop.permute.xlu0 %1114
        %1118 = vset.pattern.permute.xlu0 2
        %1119 = vperm.xlu0 %1118, %v1027
        %v1120 = vpop.permute.xlu0 %1119
        %1123 = vset.pattern.permute.xlu0 2
        %1124 = vperm.xlu0 %1123, %v1028
        %v1125 = vpop.permute.xlu0 %1124
        %1128 = vset.pattern.permute.xlu0 2
        %1129 = vperm.xlu0 %1128, %v1029
        %v1130 = vpop.permute.xlu0 %1129
        %1133 = vset.pattern.permute.xlu0 2
        %1134 = vperm.xlu0 %1133, %v1030
        %v1135 = vpop.permute.xlu0 %1134
        %1138 = vset.pattern.permute.xlu0 2
        %1139 = vperm.xlu0 %1138, %v1031
        %v1140 = vpop.permute.xlu0 %1139
        %1143 = vset.pattern.permute.xlu0 2
        %1144 = vperm.xlu0 %1143, %v1032
        %v1145 = vpop.permute.xlu0 %1144
        %1148 = vset.pattern.permute.xlu0 2
        %1149 = vperm.xlu0 %1148, %v1033
        %v1150 = vpop.permute.xlu0 %1149
        %1153 = vset.pattern.permute.xlu0 2
        %1154 = vperm.xlu0 %1153, %v1034
        %v1155 = vpop.permute.xlu0 %1154
        %1158 = vset.pattern.permute.xlu0 2
        %1159 = vperm.xlu0 %1158, %v1035
        %v1160 = vpop.permute.xlu0 %1159
        %1163 = vset.pattern.permute.xlu0 2
        %1164 = vperm.xlu0 %1163, %v1036
        %v1165 = vpop.permute.xlu0 %1164
        %1168 = vset.pattern.permute.xlu0 2
        %1169 = vperm.xlu0 %1168, %v1037
        %v1170 = vpop.permute.xlu0 %1169
        %1173 = vset.pattern.permute.xlu0 2
        %1174 = vperm.xlu0 %1173, %v1038
        %v1175 = vpop.permute.xlu0 %1174
        %1178 = vset.pattern.permute.xlu0 2
        %1179 = vperm.xlu0 %1178, %v1039
        %v1180 = vpop.permute.xlu0 %1179
        %1183 = vset.pattern.permute.xlu0 2
        %1184 = vperm.xlu0 %1183, %v1040
        %v1185 = vpop.permute.xlu0 %1184
        %1188 = vset.pattern.permute.xlu0 2
        %1189 = vperm.xlu0 %1188, %v1041
        %v1190 = vpop.permute.xlu0 %1189
        %1193 = vset.pattern.permute.xlu0 2
        %1194 = vperm.xlu0 %1193, %v1042
        %v1195 = vpop.permute.xlu0 %1194
        %1198 = vset.pattern.permute.xlu0 2
        %1199 = vperm.xlu0 %1198, %v1043
        %v1200 = vpop.permute.xlu0 %1199
        %1203 = vset.pattern.permute.xlu0 2
        %1204 = vperm.xlu0 %1203, %v1044
        %v1205 = vpop.permute.xlu0 %1204
        %1207 = vset.pattern.permute.xlu0 3
        %1208 = vperm.xlu0 %1207, %v1013
        %v1209 = vpop.permute.xlu0 %1208
        %1211 = vset.pattern.permute.xlu0 3
        %1212 = vperm.xlu0 %1211, %v1014
        %v1213 = vpop.permute.xlu0 %1212
        %1215 = vset.pattern.permute.xlu0 3
        %1216 = vperm.xlu0 %1215, %v1015
        %v1217 = vpop.permute.xlu0 %1216
        %1219 = vset.pattern.permute.xlu0 3
        %1220 = vperm.xlu0 %1219, %v1016
        %v1221 = vpop.permute.xlu0 %1220
        %1223 = vset.pattern.permute.xlu0 3
        %1224 = vperm.xlu0 %1223, %v1017
        %v1225 = vpop.permute.xlu0 %1224
        %1227 = vset.pattern.permute.xlu0 3
        %1228 = vperm.xlu0 %1227, %v1018
        %v1229 = vpop.permute.xlu0 %1228
        %1231 = vset.pattern.permute.xlu0 3
        %1232 = vperm.xlu0 %1231, %v1019
        %v1233 = vpop.permute.xlu0 %1232
        %1235 = vset.pattern.permute.xlu0 3
        %1236 = vperm.xlu0 %1235, %v1020
        %v1237 = vpop.permute.xlu0 %1236
        %1239 = vset.pattern.permute.xlu0 3
        %1240 = vperm.xlu0 %1239, %v1021
        %v1241 = vpop.permute.xlu0 %1240
        %1243 = vset.pattern.permute.xlu0 3
        %1244 = vperm.xlu0 %1243, %v1022
        %v1245 = vpop.permute.xlu0 %1244
        %1247 = vset.pattern.permute.xlu0 3
        %1248 = vperm.xlu0 %1247, %v1023
        %v1249 = vpop.permute.xlu0 %1248
        %1251 = vset.pattern.permute.xlu0 3
        %1252 = vperm.xlu0 %1251, %v1024
        %v1253 = vpop.permute.xlu0 %1252
        %1255 = vset.pattern.permute.xlu0 3
        %1256 = vperm.xlu0 %1255, %v1025
        %v1257 = vpop.permute.xlu0 %1256
        %1259 = vset.pattern.permute.xlu0 3
        %1260 = vperm.xlu0 %1259, %v1026
        %v1261 = vpop.permute.xlu0 %1260
        %1263 = vset.pattern.permute.xlu0 3
        %1264 = vperm.xlu0 %1263, %v1027
        %v1265 = vpop.permute.xlu0 %1264
        %1267 = vset.pattern.permute.xlu0 3
        %1268 = vperm.xlu0 %1267, %v1028
        %v1269 = vpop.permute.xlu0 %1268
        %1271 = vset.pattern.permute.xlu0 3
        %1272 = vperm.xlu0 %1271, %v1029
        %v1273 = vpop.permute.xlu0 %1272
        %1275 = vset.pattern.permute.xlu0 3
        %1276 = vperm.xlu0 %1275, %v1030
        %v1277 = vpop.permute.xlu0 %1276
        %1279 = vset.pattern.permute.xlu0 3
        %1280 = vperm.xlu0 %1279, %v1031
        %v1281 = vpop.permute.xlu0 %1280
        %1283 = vset.pattern.permute.xlu0 3
        %1284 = vperm.xlu0 %1283, %v1032
        %v1285 = vpop.permute.xlu0 %1284
        %1287 = vset.pattern.permute.xlu0 3
        %1288 = vperm.xlu0 %1287, %v1033
        %v1289 = vpop.permute.xlu0 %1288
        %1291 = vset.pattern.permute.xlu0 3
        %1292 = vperm.xlu0 %1291, %v1034
        %v1293 = vpop.permute.xlu0 %1292
        %1295 = vset.pattern.permute.xlu0 3
        %1296 = vperm.xlu0 %1295, %v1035
        %v1297 = vpop.permute.xlu0 %1296
        %1299 = vset.pattern.permute.xlu0 3
        %1300 = vperm.xlu0 %1299, %v1036
        %v1301 = vpop.permute.xlu0 %1300
        %1303 = vset.pattern.permute.xlu0 3
        %1304 = vperm.xlu0 %1303, %v1037
        %v1305 = vpop.permute.xlu0 %1304
        %1307 = vset.pattern.permute.xlu0 3
        %1308 = vperm.xlu0 %1307, %v1038
        %v1309 = vpop.permute.xlu0 %1308
        %1311 = vset.pattern.permute.xlu0 3
        %1312 = vperm.xlu0 %1311, %v1039
        %v1313 = vpop.permute.xlu0 %1312
        %1315 = vset.pattern.permute.xlu0 3
        %1316 = vperm.xlu0 %1315, %v1040
        %v1317 = vpop.permute.xlu0 %1316
        %1319 = vset.pattern.permute.xlu0 3
        %1320 = vperm.xlu0 %1319, %v1041
        %v1321 = vpop.permute.xlu0 %1320
        %1323 = vset.pattern.permute.xlu0 3
        %1324 = vperm.xlu0 %1323, %v1042
        %v1325 = vpop.permute.xlu0 %1324
        %1327 = vset.pattern.permute.xlu0 3
        %1328 = vperm.xlu0 %1327, %v1043
        %v1329 = vpop.permute.xlu0 %1328
        %1331 = vset.pattern.permute.xlu0 3
        %1332 = vperm.xlu0 %1331, %v1044
        %v1333 = vpop.permute.xlu0 %1332
        %v1335 = vsel %vm1046, %v1050, %v1209
        %v1336 = vsel %vm1046, %v1055, %v1213
        %v1337 = vsel %vm1046, %v1060, %v1217
        %v1338 = vsel %vm1046, %v1065, %v1221
        %v1339 = vsel %vm1046, %v1070, %v1225
        %v1340 = vsel %vm1046, %v1075, %v1229
        %v1341 = vsel %vm1046, %v1080, %v1233
        %v1342 = vsel %vm1046, %v1085, %v1237
        %v1343 = vsel %vm1046, %v1090, %v1241
        %v1344 = vsel %vm1046, %v1095, %v1245
        %v1345 = vsel %vm1046, %v1100, %v1249
        %v1346 = vsel %vm1046, %v1105, %v1253
        %v1347 = vsel %vm1046, %v1110, %v1257
        %v1348 = vsel %vm1046, %v1115, %v1261
        %v1349 = vsel %vm1046, %v1120, %v1265
        %v1350 = vsel %vm1046, %v1125, %v1269
        %v1351 = vsel %vm1046, %v1130, %v1273
        %v1352 = vsel %vm1046, %v1135, %v1277
        %v1353 = vsel %vm1046, %v1140, %v1281
        %v1354 = vsel %vm1046, %v1145, %v1285
        %v1355 = vsel %vm1046, %v1150, %v1289
        %v1356 = vsel %vm1046, %v1155, %v1293
        %v1357 = vsel %vm1046, %v1160, %v1297
        %v1358 = vsel %vm1046, %v1165, %v1301
        %v1359 = vsel %vm1046, %v1170, %v1305
        %v1360 = vsel %vm1046, %v1175, %v1309
        %v1361 = vsel %vm1046, %v1180, %v1313
        %v1362 = vsel %vm1046, %v1185, %v1317
        %v1363 = vsel %vm1046, %v1190, %v1321
        %v1364 = vsel %vm1046, %v1195, %v1325
        %v1365 = vsel %vm1046, %v1200, %v1329
        %v1366 = vsel %vm1046, %v1205, %v1333
        %v1367 = vsel %vm883, 1, 0
        %vm1368 = vcmp.eq.s32.totalorder %v1367, 1
        %1370 = vset.pattern.permute.xlu0 1
        %1371 = vperm.xlu0 %1370, %v851
        %v1372 = vpop.permute.xlu0 %1371
        %1375 = vset.pattern.permute.xlu0 1
        %1376 = vperm.xlu0 %1375, %v852
        %v1377 = vpop.permute.xlu0 %1376
        %1380 = vset.pattern.permute.xlu0 1
        %1381 = vperm.xlu0 %1380, %v853
        %v1382 = vpop.permute.xlu0 %1381
        %1385 = vset.pattern.permute.xlu0 1
        %1386 = vperm.xlu0 %1385, %v854
        %v1387 = vpop.permute.xlu0 %1386
        %1390 = vset.pattern.permute.xlu0 1
        %1391 = vperm.xlu0 %1390, %v855
        %v1392 = vpop.permute.xlu0 %1391
        %1395 = vset.pattern.permute.xlu0 1
        %1396 = vperm.xlu0 %1395, %v856
        %v1397 = vpop.permute.xlu0 %1396
        %1400 = vset.pattern.permute.xlu0 1
        %1401 = vperm.xlu0 %1400, %v857
        %v1402 = vpop.permute.xlu0 %1401
        %1405 = vset.pattern.permute.xlu0 1
        %1406 = vperm.xlu0 %1405, %v858
        %v1407 = vpop.permute.xlu0 %1406
        %1410 = vset.pattern.permute.xlu0 1
        %1411 = vperm.xlu0 %1410, %v859
        %v1412 = vpop.permute.xlu0 %1411
        %1415 = vset.pattern.permute.xlu0 1
        %1416 = vperm.xlu0 %1415, %v860
        %v1417 = vpop.permute.xlu0 %1416
        %1420 = vset.pattern.permute.xlu0 1
        %1421 = vperm.xlu0 %1420, %v861
        %v1422 = vpop.permute.xlu0 %1421
        %1425 = vset.pattern.permute.xlu0 1
        %1426 = vperm.xlu0 %1425, %v862
        %v1427 = vpop.permute.xlu0 %1426
        %1430 = vset.pattern.permute.xlu0 1
        %1431 = vperm.xlu0 %1430, %v863
        %v1432 = vpop.permute.xlu0 %1431
        %1435 = vset.pattern.permute.xlu0 1
        %1436 = vperm.xlu0 %1435, %v864
        %v1437 = vpop.permute.xlu0 %1436
        %1440 = vset.pattern.permute.xlu0 1
        %1441 = vperm.xlu0 %1440, %v865
        %v1442 = vpop.permute.xlu0 %1441
        %1445 = vset.pattern.permute.xlu0 1
        %1446 = vperm.xlu0 %1445, %v866
        %v1447 = vpop.permute.xlu0 %1446
        %1450 = vset.pattern.permute.xlu0 1
        %1451 = vperm.xlu0 %1450, %v867
        %v1452 = vpop.permute.xlu0 %1451
        %1455 = vset.pattern.permute.xlu0 1
        %1456 = vperm.xlu0 %1455, %v868
        %v1457 = vpop.permute.xlu0 %1456
        %1460 = vset.pattern.permute.xlu0 1
        %1461 = vperm.xlu0 %1460, %v869
        %v1462 = vpop.permute.xlu0 %1461
        %1465 = vset.pattern.permute.xlu0 1
        %1466 = vperm.xlu0 %1465, %v870
        %v1467 = vpop.permute.xlu0 %1466
        %1470 = vset.pattern.permute.xlu0 1
        %1471 = vperm.xlu0 %1470, %v871
        %v1472 = vpop.permute.xlu0 %1471
        %1475 = vset.pattern.permute.xlu0 1
        %1476 = vperm.xlu0 %1475, %v872
        %v1477 = vpop.permute.xlu0 %1476
        %1480 = vset.pattern.permute.xlu0 1
        %1481 = vperm.xlu0 %1480, %v873
        %v1482 = vpop.permute.xlu0 %1481
        %1485 = vset.pattern.permute.xlu0 1
        %1486 = vperm.xlu0 %1485, %v874
        %v1487 = vpop.permute.xlu0 %1486
        %1490 = vset.pattern.permute.xlu0 1
        %1491 = vperm.xlu0 %1490, %v875
        %v1492 = vpop.permute.xlu0 %1491
        %1495 = vset.pattern.permute.xlu0 1
        %1496 = vperm.xlu0 %1495, %v876
        %v1497 = vpop.permute.xlu0 %1496
        %1500 = vset.pattern.permute.xlu0 1
        %1501 = vperm.xlu0 %1500, %v877
        %v1502 = vpop.permute.xlu0 %1501
        %1505 = vset.pattern.permute.xlu0 1
        %1506 = vperm.xlu0 %1505, %v878
        %v1507 = vpop.permute.xlu0 %1506
        %1510 = vset.pattern.permute.xlu0 1
        %1511 = vperm.xlu0 %1510, %v879
        %v1512 = vpop.permute.xlu0 %1511
        %1515 = vset.pattern.permute.xlu0 1
        %1516 = vperm.xlu0 %1515, %v880
        %v1517 = vpop.permute.xlu0 %1516
        %1520 = vset.pattern.permute.xlu0 1
        %1521 = vperm.xlu0 %1520, %v881
        %v1522 = vpop.permute.xlu0 %1521
        %1525 = vset.pattern.permute.xlu0 1
        %1526 = vperm.xlu0 %1525, %v882
        %v1527 = vpop.permute.xlu0 %1526
        %v1529 = vsel %vm1368, %v1372, %v1335
        %v1530 = vsel %vm1368, %v1377, %v1336
        %v1531 = vsel %vm1368, %v1382, %v1337
        %v1532 = vsel %vm1368, %v1387, %v1338
        %v1533 = vsel %vm1368, %v1392, %v1339
        %v1534 = vsel %vm1368, %v1397, %v1340
        %v1535 = vsel %vm1368, %v1402, %v1341
        %v1536 = vsel %vm1368, %v1407, %v1342
        %v1537 = vsel %vm1368, %v1412, %v1343
        %v1538 = vsel %vm1368, %v1417, %v1344
        %v1539 = vsel %vm1368, %v1422, %v1345
        %v1540 = vsel %vm1368, %v1427, %v1346
        %v1541 = vsel %vm1368, %v1432, %v1347
        %v1542 = vsel %vm1368, %v1437, %v1348
        %v1543 = vsel %vm1368, %v1442, %v1349
        %v1544 = vsel %vm1368, %v1447, %v1350
        %v1545 = vsel %vm1368, %v1452, %v1351
        %v1546 = vsel %vm1368, %v1457, %v1352
        %v1547 = vsel %vm1368, %v1462, %v1353
        %v1548 = vsel %vm1368, %v1467, %v1354
        %v1549 = vsel %vm1368, %v1472, %v1355
        %v1550 = vsel %vm1368, %v1477, %v1356
        %v1551 = vsel %vm1368, %v1482, %v1357
        %v1552 = vsel %vm1368, %v1487, %v1358
        %v1553 = vsel %vm1368, %v1492, %v1359
        %v1554 = vsel %vm1368, %v1497, %v1360
        %v1555 = vsel %vm1368, %v1502, %v1361
        %v1556 = vsel %vm1368, %v1507, %v1362
        %v1557 = vsel %vm1368, %v1512, %v1363
        %v1558 = vsel %vm1368, %v1517, %v1364
        %v1559 = vsel %vm1368, %v1522, %v1365
        %v1560 = vsel %vm1368, %v1527, %v1366
        %v1561 = vsel %vm850, 1, 0
        %vm1562 = vcmp.eq.s32.totalorder %v1561, 1
        %1563 = vset.pattern.permute.xlu0 0
        %1564 = vperm.xlu0 %1563, %v851
        %v1565 = vpop.permute.xlu0 %1564
        %1567 = vset.pattern.permute.xlu0 0
        %1568 = vperm.xlu0 %1567, %v852
        %v1569 = vpop.permute.xlu0 %1568
        %1571 = vset.pattern.permute.xlu0 0
        %1572 = vperm.xlu0 %1571, %v853
        %v1573 = vpop.permute.xlu0 %1572
        %1575 = vset.pattern.permute.xlu0 0
        %1576 = vperm.xlu0 %1575, %v854
        %v1577 = vpop.permute.xlu0 %1576
        %1579 = vset.pattern.permute.xlu0 0
        %1580 = vperm.xlu0 %1579, %v855
        %v1581 = vpop.permute.xlu0 %1580
        %1583 = vset.pattern.permute.xlu0 0
        %1584 = vperm.xlu0 %1583, %v856
        %v1585 = vpop.permute.xlu0 %1584
        %1587 = vset.pattern.permute.xlu0 0
        %1588 = vperm.xlu0 %1587, %v857
        %v1589 = vpop.permute.xlu0 %1588
        %1591 = vset.pattern.permute.xlu0 0
        %1592 = vperm.xlu0 %1591, %v858
        %v1593 = vpop.permute.xlu0 %1592
        %1595 = vset.pattern.permute.xlu0 0
        %1596 = vperm.xlu0 %1595, %v859
        %v1597 = vpop.permute.xlu0 %1596
        %1599 = vset.pattern.permute.xlu0 0
        %1600 = vperm.xlu0 %1599, %v860
        %v1601 = vpop.permute.xlu0 %1600
        %1603 = vset.pattern.permute.xlu0 0
        %1604 = vperm.xlu0 %1603, %v861
        %v1605 = vpop.permute.xlu0 %1604
        %1607 = vset.pattern.permute.xlu0 0
        %1608 = vperm.xlu0 %1607, %v862
        %v1609 = vpop.permute.xlu0 %1608
        %1611 = vset.pattern.permute.xlu0 0
        %1612 = vperm.xlu0 %1611, %v863
        %v1613 = vpop.permute.xlu0 %1612
        %1615 = vset.pattern.permute.xlu0 0
        %1616 = vperm.xlu0 %1615, %v864
        %v1617 = vpop.permute.xlu0 %1616
        %1619 = vset.pattern.permute.xlu0 0
        %1620 = vperm.xlu0 %1619, %v865
        %v1621 = vpop.permute.xlu0 %1620
        %1623 = vset.pattern.permute.xlu0 0
        %1624 = vperm.xlu0 %1623, %v866
        %v1625 = vpop.permute.xlu0 %1624
        %1627 = vset.pattern.permute.xlu0 0
        %1628 = vperm.xlu0 %1627, %v867
        %v1629 = vpop.permute.xlu0 %1628
        %1631 = vset.pattern.permute.xlu0 0
        %1632 = vperm.xlu0 %1631, %v868
        %v1633 = vpop.permute.xlu0 %1632
        %1635 = vset.pattern.permute.xlu0 0
        %1636 = vperm.xlu0 %1635, %v869
        %v1637 = vpop.permute.xlu0 %1636
        %1639 = vset.pattern.permute.xlu0 0
        %1640 = vperm.xlu0 %1639, %v870
        %v1641 = vpop.permute.xlu0 %1640
        %1643 = vset.pattern.permute.xlu0 0
        %1644 = vperm.xlu0 %1643, %v871
        %v1645 = vpop.permute.xlu0 %1644
        %1647 = vset.pattern.permute.xlu0 0
        %1648 = vperm.xlu0 %1647, %v872
        %v1649 = vpop.permute.xlu0 %1648
        %1651 = vset.pattern.permute.xlu0 0
        %1652 = vperm.xlu0 %1651, %v873
        %v1653 = vpop.permute.xlu0 %1652
        %1655 = vset.pattern.permute.xlu0 0
        %1656 = vperm.xlu0 %1655, %v874
        %v1657 = vpop.permute.xlu0 %1656
        %1659 = vset.pattern.permute.xlu0 0
        %1660 = vperm.xlu0 %1659, %v875
        %v1661 = vpop.permute.xlu0 %1660
        %1663 = vset.pattern.permute.xlu0 0
        %1664 = vperm.xlu0 %1663, %v876
        %v1665 = vpop.permute.xlu0 %1664
        %1667 = vset.pattern.permute.xlu0 0
        %1668 = vperm.xlu0 %1667, %v877
        %v1669 = vpop.permute.xlu0 %1668
        %1671 = vset.pattern.permute.xlu0 0
        %1672 = vperm.xlu0 %1671, %v878
        %v1673 = vpop.permute.xlu0 %1672
        %1675 = vset.pattern.permute.xlu0 0
        %1676 = vperm.xlu0 %1675, %v879
        %v1677 = vpop.permute.xlu0 %1676
        %1679 = vset.pattern.permute.xlu0 0
        %1680 = vperm.xlu0 %1679, %v880
        %v1681 = vpop.permute.xlu0 %1680
        %1683 = vset.pattern.permute.xlu0 0
        %1684 = vperm.xlu0 %1683, %v881
        %v1685 = vpop.permute.xlu0 %1684
        %1687 = vset.pattern.permute.xlu0 0
        %1688 = vperm.xlu0 %1687, %v882
        %v1689 = vpop.permute.xlu0 %1688
        %v1691 = vsel %vm1562, %v1565, %v1529
        %v1692 = vsel %vm1562, %v1569, %v1530
        %v1693 = vsel %vm1562, %v1573, %v1531
        %v1694 = vsel %vm1562, %v1577, %v1532
        %v1695 = vsel %vm1562, %v1581, %v1533
        %v1696 = vsel %vm1562, %v1585, %v1534
        %v1697 = vsel %vm1562, %v1589, %v1535
        %v1698 = vsel %vm1562, %v1593, %v1536
        %v1699 = vsel %vm1562, %v1597, %v1537
        %v1700 = vsel %vm1562, %v1601, %v1538
        %v1701 = vsel %vm1562, %v1605, %v1539
        %v1702 = vsel %vm1562, %v1609, %v1540
        %v1703 = vsel %vm1562, %v1613, %v1541
        %v1704 = vsel %vm1562, %v1617, %v1542
        %v1705 = vsel %vm1562, %v1621, %v1543
        %v1706 = vsel %vm1562, %v1625, %v1544
        %v1707 = vsel %vm1562, %v1629, %v1545
        %v1708 = vsel %vm1562, %v1633, %v1546
        %v1709 = vsel %vm1562, %v1637, %v1547
        %v1710 = vsel %vm1562, %v1641, %v1548
        %v1711 = vsel %vm1562, %v1645, %v1549
        %v1712 = vsel %vm1562, %v1649, %v1550
        %v1713 = vsel %vm1562, %v1653, %v1551
        %v1714 = vsel %vm1562, %v1657, %v1552
        %v1715 = vsel %vm1562, %v1661, %v1553
        %v1716 = vsel %vm1562, %v1665, %v1554
        %v1717 = vsel %vm1562, %v1669, %v1555
        %v1718 = vsel %vm1562, %v1673, %v1556
        %v1719 = vsel %vm1562, %v1677, %v1557
        %v1720 = vsel %vm1562, %v1681, %v1558
        %v1721 = vsel %vm1562, %v1685, %v1559
        %v1722 = vsel %vm1562, %v1689, %v1560
        %v1723 = vmax.f32 %v1691, 0.0
        %v1724 = vmax.f32 %v1692, 0.0
        %v1725 = vmax.f32 %v1693, 0.0
        %v1726 = vmax.f32 %v1694, 0.0
        %v1727 = vmax.f32 %v1695, 0.0
        %v1728 = vmax.f32 %v1696, 0.0
        %v1729 = vmax.f32 %v1697, 0.0
        %v1730 = vmax.f32 %v1698, 0.0
        %v1731 = vmax.f32 %v1699, 0.0
        %v1732 = vmax.f32 %v1700, 0.0
        %v1733 = vmax.f32 %v1701, 0.0
        %v1734 = vmax.f32 %v1702, 0.0
        %v1735 = vmax.f32 %v1703, 0.0
        %v1736 = vmax.f32 %v1704, 0.0
        %v1737 = vmax.f32 %v1705, 0.0
        %v1738 = vmax.f32 %v1706, 0.0
        %v1739 = vmax.f32 %v1707, 0.0
        %v1740 = vmax.f32 %v1708, 0.0
        %v1741 = vmax.f32 %v1709, 0.0
        %v1742 = vmax.f32 %v1710, 0.0
        %v1743 = vmax.f32 %v1711, 0.0
        %v1744 = vmax.f32 %v1712, 0.0
        %v1745 = vmax.f32 %v1713, 0.0
        %v1746 = vmax.f32 %v1714, 0.0
        %v1747 = vmax.f32 %v1715, 0.0
        %v1748 = vmax.f32 %v1716, 0.0
        %v1749 = vmax.f32 %v1717, 0.0
        %v1750 = vmax.f32 %v1718, 0.0
        %v1751 = vmax.f32 %v1719, 0.0
        %v1752 = vmax.f32 %v1720, 0.0
        %v1753 = vmax.f32 %v1721, 0.0
        %v1754 = vmax.f32 %v1722, 0.0
        %v1755 = vmin.f32 %v1723, 14.99
        %v1756 = vmin.f32 %v1724, 14.99
        %v1757 = vmin.f32 %v1725, 14.99
        %v1758 = vmin.f32 %v1726, 14.99
        %v1759 = vmin.f32 %v1727, 14.99
        %v1760 = vmin.f32 %v1728, 14.99
        %v1761 = vmin.f32 %v1729, 14.99
        %v1762 = vmin.f32 %v1730, 14.99
        %v1763 = vmin.f32 %v1731, 14.99
        %v1764 = vmin.f32 %v1732, 14.99
        %v1765 = vmin.f32 %v1733, 14.99
        %v1766 = vmin.f32 %v1734, 14.99
        %v1767 = vmin.f32 %v1735, 14.99
        %v1768 = vmin.f32 %v1736, 14.99
        %v1769 = vmin.f32 %v1737, 14.99
        %v1770 = vmin.f32 %v1738, 14.99
        %v1771 = vmin.f32 %v1739, 14.99
        %v1772 = vmin.f32 %v1740, 14.99
        %v1773 = vmin.f32 %v1741, 14.99
        %v1774 = vmin.f32 %v1742, 14.99
        %v1775 = vmin.f32 %v1743, 14.99
        %v1776 = vmin.f32 %v1744, 14.99
        %v1777 = vmin.f32 %v1745, 14.99
        %v1778 = vmin.f32 %v1746, 14.99
        %v1779 = vmin.f32 %v1747, 14.99
        %v1780 = vmin.f32 %v1748, 14.99
        %v1781 = vmin.f32 %v1749, 14.99
        %v1782 = vmin.f32 %v1750, 14.99
        %v1783 = vmin.f32 %v1751, 14.99
        %v1784 = vmin.f32 %v1752, 14.99
        %v1785 = vmin.f32 %v1753, 14.99
        %v1786 = vmin.f32 %v1754, 14.99
        %v1787 = vcvt.f32.s32.to.zero.pseudo %v1755
        %v1788 = vcvt.f32.s32.to.zero.pseudo %v1756
        %v1789 = vcvt.f32.s32.to.zero.pseudo %v1757
        %v1790 = vcvt.f32.s32.to.zero.pseudo %v1758
        %v1791 = vcvt.f32.s32.to.zero.pseudo %v1759
        %v1792 = vcvt.f32.s32.to.zero.pseudo %v1760
        %v1793 = vcvt.f32.s32.to.zero.pseudo %v1761
        %v1794 = vcvt.f32.s32.to.zero.pseudo %v1762
        %v1795 = vcvt.f32.s32.to.zero.pseudo %v1763
        %v1796 = vcvt.f32.s32.to.zero.pseudo %v1764
        %v1797 = vcvt.f32.s32.to.zero.pseudo %v1765
        %v1798 = vcvt.f32.s32.to.zero.pseudo %v1766
        %v1799 = vcvt.f32.s32.to.zero.pseudo %v1767
        %v1800 = vcvt.f32.s32.to.zero.pseudo %v1768
        %v1801 = vcvt.f32.s32.to.zero.pseudo %v1769
        %v1802 = vcvt.f32.s32.to.zero.pseudo %v1770
        %v1803 = vcvt.f32.s32.to.zero.pseudo %v1771
        %v1804 = vcvt.f32.s32.to.zero.pseudo %v1772
        %v1805 = vcvt.f32.s32.to.zero.pseudo %v1773
        %v1806 = vcvt.f32.s32.to.zero.pseudo %v1774
        %v1807 = vcvt.f32.s32.to.zero.pseudo %v1775
        %v1808 = vcvt.f32.s32.to.zero.pseudo %v1776
        %v1809 = vcvt.f32.s32.to.zero.pseudo %v1777
        %v1810 = vcvt.f32.s32.to.zero.pseudo %v1778
        %v1811 = vcvt.f32.s32.to.zero.pseudo %v1779
        %v1812 = vcvt.f32.s32.to.zero.pseudo %v1780
        %v1813 = vcvt.f32.s32.to.zero.pseudo %v1781
        %v1814 = vcvt.f32.s32.to.zero.pseudo %v1782
        %v1815 = vcvt.f32.s32.to.zero.pseudo %v1783
        %v1816 = vcvt.f32.s32.to.zero.pseudo %v1784
        %v1817 = vcvt.f32.s32.to.zero.pseudo %v1785
        %v1818 = vcvt.f32.s32.to.zero.pseudo %v1786
        %v1819 = vcvt.s32.f32 %v1787
        %v1820 = vcvt.s32.f32 %v1788
        %v1821 = vcvt.s32.f32 %v1789
        %v1822 = vcvt.s32.f32 %v1790
        %v1823 = vcvt.s32.f32 %v1791
        %v1824 = vcvt.s32.f32 %v1792
        %v1825 = vcvt.s32.f32 %v1793
        %v1826 = vcvt.s32.f32 %v1794
        %v1827 = vcvt.s32.f32 %v1795
        %v1828 = vcvt.s32.f32 %v1796
        %v1829 = vcvt.s32.f32 %v1797
        %v1830 = vcvt.s32.f32 %v1798
        %v1831 = vcvt.s32.f32 %v1799
        %v1832 = vcvt.s32.f32 %v1800
        %v1833 = vcvt.s32.f32 %v1801
        %v1834 = vcvt.s32.f32 %v1802
        %v1835 = vcvt.s32.f32 %v1803
        %v1836 = vcvt.s32.f32 %v1804
        %v1837 = vcvt.s32.f32 %v1805
        %v1838 = vcvt.s32.f32 %v1806
        %v1839 = vcvt.s32.f32 %v1807
        %v1840 = vcvt.s32.f32 %v1808
        %v1841 = vcvt.s32.f32 %v1809
        %v1842 = vcvt.s32.f32 %v1810
        %v1843 = vcvt.s32.f32 %v1811
        %v1844 = vcvt.s32.f32 %v1812
        %v1845 = vcvt.s32.f32 %v1813
        %v1846 = vcvt.s32.f32 %v1814
        %v1847 = vcvt.s32.f32 %v1815
        %v1848 = vcvt.s32.f32 %v1816
        %v1849 = vcvt.s32.f32 %v1817
        %v1850 = vcvt.s32.f32 %v1818
        %v1851 = vadd.f32 %v1819, 1.0
        %v1852 = vadd.f32 %v1820, 1.0
        %v1853 = vadd.f32 %v1821, 1.0
        %v1854 = vadd.f32 %v1822, 1.0
        %v1855 = vadd.f32 %v1823, 1.0
        %v1856 = vadd.f32 %v1824, 1.0
        %v1857 = vadd.f32 %v1825, 1.0
        %v1858 = vadd.f32 %v1826, 1.0
        %v1859 = vadd.f32 %v1827, 1.0
        %v1860 = vadd.f32 %v1828, 1.0
        %v1861 = vadd.f32 %v1829, 1.0
        %v1862 = vadd.f32 %v1830, 1.0
        %v1863 = vadd.f32 %v1831, 1.0
        %v1864 = vadd.f32 %v1832, 1.0
        %v1865 = vadd.f32 %v1833, 1.0
        %v1866 = vadd.f32 %v1834, 1.0
        %v1867 = vadd.f32 %v1835, 1.0
        %v1868 = vadd.f32 %v1836, 1.0
        %v1869 = vadd.f32 %v1837, 1.0
        %v1870 = vadd.f32 %v1838, 1.0
        %v1871 = vadd.f32 %v1839, 1.0
        %v1872 = vadd.f32 %v1840, 1.0
        %v1873 = vadd.f32 %v1841, 1.0
        %v1874 = vadd.f32 %v1842, 1.0
        %v1875 = vadd.f32 %v1843, 1.0
        %v1876 = vadd.f32 %v1844, 1.0
        %v1877 = vadd.f32 %v1845, 1.0
        %v1878 = vadd.f32 %v1846, 1.0
        %v1879 = vadd.f32 %v1847, 1.0
        %v1880 = vadd.f32 %v1848, 1.0
        %v1881 = vadd.f32 %v1849, 1.0
        %v1882 = vadd.f32 %v1850, 1.0
        %v1883 = vsub.f32 %v1851, %v1755
        %v1884 = vsub.f32 %v1852, %v1756
        %v1885 = vsub.f32 %v1853, %v1757
        %v1886 = vsub.f32 %v1854, %v1758
        %v1887 = vsub.f32 %v1855, %v1759
        %v1888 = vsub.f32 %v1856, %v1760
        %v1889 = vsub.f32 %v1857, %v1761
        %v1890 = vsub.f32 %v1858, %v1762
        %v1891 = vsub.f32 %v1859, %v1763
        %v1892 = vsub.f32 %v1860, %v1764
        %v1893 = vsub.f32 %v1861, %v1765
        %v1894 = vsub.f32 %v1862, %v1766
        %v1895 = vsub.f32 %v1863, %v1767
        %v1896 = vsub.f32 %v1864, %v1768
        %v1897 = vsub.f32 %v1865, %v1769
        %v1898 = vsub.f32 %v1866, %v1770
        %v1899 = vsub.f32 %v1867, %v1771
        %v1900 = vsub.f32 %v1868, %v1772
        %v1901 = vsub.f32 %v1869, %v1773
        %v1902 = vsub.f32 %v1870, %v1774
        %v1903 = vsub.f32 %v1871, %v1775
        %v1904 = vsub.f32 %v1872, %v1776
        %v1905 = vsub.f32 %v1873, %v1777
        %v1906 = vsub.f32 %v1874, %v1778
        %v1907 = vsub.f32 %v1875, %v1779
        %v1908 = vsub.f32 %v1876, %v1780
        %v1909 = vsub.f32 %v1877, %v1781
        %v1910 = vsub.f32 %v1878, %v1782
        %v1911 = vsub.f32 %v1879, %v1783
        %v1912 = vsub.f32 %v1880, %v1784
        %v1913 = vsub.f32 %v1881, %v1785
        %v1914 = vsub.f32 %v1882, %v1786
        %v1915 = vsub.f32 1.0, %v1883
        %v1916 = vsub.f32 1.0, %v1884
        %v1917 = vsub.f32 1.0, %v1885
        %v1918 = vsub.f32 1.0, %v1886
        %v1919 = vsub.f32 1.0, %v1887
        %v1920 = vsub.f32 1.0, %v1888
        %v1921 = vsub.f32 1.0, %v1889
        %v1922 = vsub.f32 1.0, %v1890
        %v1923 = vsub.f32 1.0, %v1891
        %v1924 = vsub.f32 1.0, %v1892
        %v1925 = vsub.f32 1.0, %v1893
        %v1926 = vsub.f32 1.0, %v1894
        %v1927 = vsub.f32 1.0, %v1895
        %v1928 = vsub.f32 1.0, %v1896
        %v1929 = vsub.f32 1.0, %v1897
        %v1930 = vsub.f32 1.0, %v1898
        %v1931 = vsub.f32 1.0, %v1899
        %v1932 = vsub.f32 1.0, %v1900
        %v1933 = vsub.f32 1.0, %v1901
        %v1934 = vsub.f32 1.0, %v1902
        %v1935 = vsub.f32 1.0, %v1903
        %v1936 = vsub.f32 1.0, %v1904
        %v1937 = vsub.f32 1.0, %v1905
        %v1938 = vsub.f32 1.0, %v1906
        %v1939 = vsub.f32 1.0, %v1907
        %v1940 = vsub.f32 1.0, %v1908
        %v1941 = vsub.f32 1.0, %v1909
        %v1942 = vsub.f32 1.0, %v1910
        %v1943 = vsub.f32 1.0, %v1911
        %v1944 = vsub.f32 1.0, %v1912
        %v1945 = vsub.f32 1.0, %v1913
        %v1946 = vsub.f32 1.0, %v1914
        %vm1947 = vcmp.eq.f32.partialorder %v849, %v1819
        %vm1948 = vcmp.eq.f32.partialorder %v849, %v1820
        %vm1949 = vcmp.eq.f32.partialorder %v849, %v1821
        %vm1950 = vcmp.eq.f32.partialorder %v849, %v1822
        %vm1951 = vcmp.eq.f32.partialorder %v849, %v1823
        %vm1952 = vcmp.eq.f32.partialorder %v849, %v1824
        %vm1953 = vcmp.eq.f32.partialorder %v849, %v1825
        %vm1954 = vcmp.eq.f32.partialorder %v849, %v1826
        %vm1955 = vcmp.eq.f32.partialorder %v849, %v1827
        %vm1956 = vcmp.eq.f32.partialorder %v849, %v1828
        %vm1957 = vcmp.eq.f32.partialorder %v849, %v1829
        %vm1958 = vcmp.eq.f32.partialorder %v849, %v1830
        %vm1959 = vcmp.eq.f32.partialorder %v849, %v1831
        %vm1960 = vcmp.eq.f32.partialorder %v849, %v1832
        %vm1961 = vcmp.eq.f32.partialorder %v849, %v1833
        %vm1962 = vcmp.eq.f32.partialorder %v849, %v1834
        %vm1963 = vcmp.eq.f32.partialorder %v849, %v1835
        %vm1964 = vcmp.eq.f32.partialorder %v849, %v1836
        %vm1965 = vcmp.eq.f32.partialorder %v849, %v1837
        %vm1966 = vcmp.eq.f32.partialorder %v849, %v1838
        %vm1967 = vcmp.eq.f32.partialorder %v849, %v1839
        %vm1968 = vcmp.eq.f32.partialorder %v849, %v1840
        %vm1969 = vcmp.eq.f32.partialorder %v849, %v1841
        %vm1970 = vcmp.eq.f32.partialorder %v849, %v1842
        %vm1971 = vcmp.eq.f32.partialorder %v849, %v1843
        %vm1972 = vcmp.eq.f32.partialorder %v849, %v1844
        %vm1973 = vcmp.eq.f32.partialorder %v849, %v1845
        %vm1974 = vcmp.eq.f32.partialorder %v849, %v1846
        %vm1975 = vcmp.eq.f32.partialorder %v849, %v1847
        %vm1976 = vcmp.eq.f32.partialorder %v849, %v1848
        %vm1977 = vcmp.eq.f32.partialorder %v849, %v1849
        %vm1978 = vcmp.eq.f32.partialorder %v849, %v1850
        %v1979 = vsel %vm1947, 1, 0
        %v1980 = vsel %vm1948, 1, 0
        %v1981 = vsel %vm1949, 1, 0
        %v1982 = vsel %vm1950, 1, 0
        %v1983 = vsel %vm1951, 1, 0
        %v1984 = vsel %vm1952, 1, 0
        %v1985 = vsel %vm1953, 1, 0
        %v1986 = vsel %vm1954, 1, 0
        %v1987 = vsel %vm1955, 1, 0
        %v1988 = vsel %vm1956, 1, 0
        %v1989 = vsel %vm1957, 1, 0
        %v1990 = vsel %vm1958, 1, 0
        %v1991 = vsel %vm1959, 1, 0
        %v1992 = vsel %vm1960, 1, 0
        %v1993 = vsel %vm1961, 1, 0
        %v1994 = vsel %vm1962, 1, 0
        %v1995 = vsel %vm1963, 1, 0
        %v1996 = vsel %vm1964, 1, 0
        %v1997 = vsel %vm1965, 1, 0
        %v1998 = vsel %vm1966, 1, 0
        %v1999 = vsel %vm1967, 1, 0
        %v2000 = vsel %vm1968, 1, 0
        %v2001 = vsel %vm1969, 1, 0
        %v2002 = vsel %vm1970, 1, 0
        %v2003 = vsel %vm1971, 1, 0
        %v2004 = vsel %vm1972, 1, 0
        %v2005 = vsel %vm1973, 1, 0
        %v2006 = vsel %vm1974, 1, 0
        %v2007 = vsel %vm1975, 1, 0
        %v2008 = vsel %vm1976, 1, 0
        %v2009 = vsel %vm1977, 1, 0
        %v2010 = vsel %vm1978, 1, 0
        %v2011 = vcvt.s32.f32 %v1979
        %v2012 = vcvt.s32.f32 %v1980
        %v2013 = vcvt.s32.f32 %v1981
        %v2014 = vcvt.s32.f32 %v1982
        %v2015 = vcvt.s32.f32 %v1983
        %v2016 = vcvt.s32.f32 %v1984
        %v2017 = vcvt.s32.f32 %v1985
        %v2018 = vcvt.s32.f32 %v1986
        %v2019 = vcvt.s32.f32 %v1987
        %v2020 = vcvt.s32.f32 %v1988
        %v2021 = vcvt.s32.f32 %v1989
        %v2022 = vcvt.s32.f32 %v1990
        %v2023 = vcvt.s32.f32 %v1991
        %v2024 = vcvt.s32.f32 %v1992
        %v2025 = vcvt.s32.f32 %v1993
        %v2026 = vcvt.s32.f32 %v1994
        %v2027 = vcvt.s32.f32 %v1995
        %v2028 = vcvt.s32.f32 %v1996
        %v2029 = vcvt.s32.f32 %v1997
        %v2030 = vcvt.s32.f32 %v1998
        %v2031 = vcvt.s32.f32 %v1999
        %v2032 = vcvt.s32.f32 %v2000
        %v2033 = vcvt.s32.f32 %v2001
        %v2034 = vcvt.s32.f32 %v2002
        %v2035 = vcvt.s32.f32 %v2003
        %v2036 = vcvt.s32.f32 %v2004
        %v2037 = vcvt.s32.f32 %v2005
        %v2038 = vcvt.s32.f32 %v2006
        %v2039 = vcvt.s32.f32 %v2007
        %v2040 = vcvt.s32.f32 %v2008
        %v2041 = vcvt.s32.f32 %v2009
        %v2042 = vcvt.s32.f32 %v2010
        %v2043 = vmul.f32 %v1883, %v2011
        %v2044 = vmul.f32 %v1884, %v2012
        %v2045 = vmul.f32 %v1885, %v2013
        %v2046 = vmul.f32 %v1886, %v2014
        %v2047 = vmul.f32 %v1887, %v2015
        %v2048 = vmul.f32 %v1888, %v2016
        %v2049 = vmul.f32 %v1889, %v2017
        %v2050 = vmul.f32 %v1890, %v2018
        %v2051 = vmul.f32 %v1891, %v2019
        %v2052 = vmul.f32 %v1892, %v2020
        %v2053 = vmul.f32 %v1893, %v2021
        %v2054 = vmul.f32 %v1894, %v2022
        %v2055 = vmul.f32 %v1895, %v2023
        %v2056 = vmul.f32 %v1896, %v2024
        %v2057 = vmul.f32 %v1897, %v2025
        %v2058 = vmul.f32 %v1898, %v2026
        %v2059 = vmul.f32 %v1899, %v2027
        %v2060 = vmul.f32 %v1900, %v2028
        %v2061 = vmul.f32 %v1901, %v2029
        %v2062 = vmul.f32 %v1902, %v2030
        %v2063 = vmul.f32 %v1903, %v2031
        %v2064 = vmul.f32 %v1904, %v2032
        %v2065 = vmul.f32 %v1905, %v2033
        %v2066 = vmul.f32 %v1906, %v2034
        %v2067 = vmul.f32 %v1907, %v2035
        %v2068 = vmul.f32 %v1908, %v2036
        %v2069 = vmul.f32 %v1909, %v2037
        %v2070 = vmul.f32 %v1910, %v2038
        %v2071 = vmul.f32 %v1911, %v2039
        %v2072 = vmul.f32 %v1912, %v2040
        %v2073 = vmul.f32 %v1913, %v2041
        %v2074 = vmul.f32 %v1914, %v2042
        %vm2075 = vcmp.eq.f32.partialorder %v849, %v1851
        %vm2076 = vcmp.eq.f32.partialorder %v849, %v1852
        %vm2077 = vcmp.eq.f32.partialorder %v849, %v1853
        %vm2078 = vcmp.eq.f32.partialorder %v849, %v1854
        %vm2079 = vcmp.eq.f32.partialorder %v849, %v1855
        %vm2080 = vcmp.eq.f32.partialorder %v849, %v1856
        %vm2081 = vcmp.eq.f32.partialorder %v849, %v1857
        %vm2082 = vcmp.eq.f32.partialorder %v849, %v1858
        %vm2083 = vcmp.eq.f32.partialorder %v849, %v1859
        %vm2084 = vcmp.eq.f32.partialorder %v849, %v1860
        %vm2085 = vcmp.eq.f32.partialorder %v849, %v1861
        %vm2086 = vcmp.eq.f32.partialorder %v849, %v1862
        %vm2087 = vcmp.eq.f32.partialorder %v849, %v1863
        %vm2088 = vcmp.eq.f32.partialorder %v849, %v1864
        %vm2089 = vcmp.eq.f32.partialorder %v849, %v1865
        %vm2090 = vcmp.eq.f32.partialorder %v849, %v1866
        %vm2091 = vcmp.eq.f32.partialorder %v849, %v1867
        %vm2092 = vcmp.eq.f32.partialorder %v849, %v1868
        %vm2093 = vcmp.eq.f32.partialorder %v849, %v1869
        %vm2094 = vcmp.eq.f32.partialorder %v849, %v1870
        %vm2095 = vcmp.eq.f32.partialorder %v849, %v1871
        %vm2096 = vcmp.eq.f32.partialorder %v849, %v1872
        %vm2097 = vcmp.eq.f32.partialorder %v849, %v1873
        %vm2098 = vcmp.eq.f32.partialorder %v849, %v1874
        %vm2099 = vcmp.eq.f32.partialorder %v849, %v1875
        %vm2100 = vcmp.eq.f32.partialorder %v849, %v1876
        %vm2101 = vcmp.eq.f32.partialorder %v849, %v1877
        %vm2102 = vcmp.eq.f32.partialorder %v849, %v1878
        %vm2103 = vcmp.eq.f32.partialorder %v849, %v1879
        %vm2104 = vcmp.eq.f32.partialorder %v849, %v1880
        %vm2105 = vcmp.eq.f32.partialorder %v849, %v1881
        %vm2106 = vcmp.eq.f32.partialorder %v849, %v1882
        %v2107 = vsel %vm2075, 1, 0
        %v2108 = vsel %vm2076, 1, 0
        %v2109 = vsel %vm2077, 1, 0
        %v2110 = vsel %vm2078, 1, 0
        %v2111 = vsel %vm2079, 1, 0
        %v2112 = vsel %vm2080, 1, 0
        %v2113 = vsel %vm2081, 1, 0
        %v2114 = vsel %vm2082, 1, 0
        %v2115 = vsel %vm2083, 1, 0
        %v2116 = vsel %vm2084, 1, 0
        %v2117 = vsel %vm2085, 1, 0
        %v2118 = vsel %vm2086, 1, 0
        %v2119 = vsel %vm2087, 1, 0
        %v2120 = vsel %vm2088, 1, 0
        %v2121 = vsel %vm2089, 1, 0
        %v2122 = vsel %vm2090, 1, 0
        %v2123 = vsel %vm2091, 1, 0
        %v2124 = vsel %vm2092, 1, 0
        %v2125 = vsel %vm2093, 1, 0
        %v2126 = vsel %vm2094, 1, 0
        %v2127 = vsel %vm2095, 1, 0
        %v2128 = vsel %vm2096, 1, 0
        %v2129 = vsel %vm2097, 1, 0
        %v2130 = vsel %vm2098, 1, 0
        %v2131 = vsel %vm2099, 1, 0
        %v2132 = vsel %vm2100, 1, 0
        %v2133 = vsel %vm2101, 1, 0
        %v2134 = vsel %vm2102, 1, 0
        %v2135 = vsel %vm2103, 1, 0
        %v2136 = vsel %vm2104, 1, 0
        %v2137 = vsel %vm2105, 1, 0
        %v2138 = vsel %vm2106, 1, 0
        %v2139 = vcvt.s32.f32 %v2107
        %v2140 = vcvt.s32.f32 %v2108
        %v2141 = vcvt.s32.f32 %v2109
        %v2142 = vcvt.s32.f32 %v2110
        %v2143 = vcvt.s32.f32 %v2111
        %v2144 = vcvt.s32.f32 %v2112
        %v2145 = vcvt.s32.f32 %v2113
        %v2146 = vcvt.s32.f32 %v2114
        %v2147 = vcvt.s32.f32 %v2115
        %v2148 = vcvt.s32.f32 %v2116
        %v2149 = vcvt.s32.f32 %v2117
        %v2150 = vcvt.s32.f32 %v2118
        %v2151 = vcvt.s32.f32 %v2119
        %v2152 = vcvt.s32.f32 %v2120
        %v2153 = vcvt.s32.f32 %v2121
        %v2154 = vcvt.s32.f32 %v2122
        %v2155 = vcvt.s32.f32 %v2123
        %v2156 = vcvt.s32.f32 %v2124
        %v2157 = vcvt.s32.f32 %v2125
        %v2158 = vcvt.s32.f32 %v2126
        %v2159 = vcvt.s32.f32 %v2127
        %v2160 = vcvt.s32.f32 %v2128
        %v2161 = vcvt.s32.f32 %v2129
        %v2162 = vcvt.s32.f32 %v2130
        %v2163 = vcvt.s32.f32 %v2131
        %v2164 = vcvt.s32.f32 %v2132
        %v2165 = vcvt.s32.f32 %v2133
        %v2166 = vcvt.s32.f32 %v2134
        %v2167 = vcvt.s32.f32 %v2135
        %v2168 = vcvt.s32.f32 %v2136
        %v2169 = vcvt.s32.f32 %v2137
        %v2170 = vcvt.s32.f32 %v2138
        %v2171 = vmul.f32 %v1915, %v2139
        %v2172 = vmul.f32 %v1916, %v2140
        %v2173 = vmul.f32 %v1917, %v2141
        %v2174 = vmul.f32 %v1918, %v2142
        %v2175 = vmul.f32 %v1919, %v2143
        %v2176 = vmul.f32 %v1920, %v2144
        %v2177 = vmul.f32 %v1921, %v2145
        %v2178 = vmul.f32 %v1922, %v2146
        %v2179 = vmul.f32 %v1923, %v2147
        %v2180 = vmul.f32 %v1924, %v2148
        %v2181 = vmul.f32 %v1925, %v2149
        %v2182 = vmul.f32 %v1926, %v2150
        %v2183 = vmul.f32 %v1927, %v2151
        %v2184 = vmul.f32 %v1928, %v2152
        %v2185 = vmul.f32 %v1929, %v2153
        %v2186 = vmul.f32 %v1930, %v2154
        %v2187 = vmul.f32 %v1931, %v2155
        %v2188 = vmul.f32 %v1932, %v2156
        %v2189 = vmul.f32 %v1933, %v2157
        %v2190 = vmul.f32 %v1934, %v2158
        %v2191 = vmul.f32 %v1935, %v2159
        %v2192 = vmul.f32 %v1936, %v2160
        %v2193 = vmul.f32 %v1937, %v2161
        %v2194 = vmul.f32 %v1938, %v2162
        %v2195 = vmul.f32 %v1939, %v2163
        %v2196 = vmul.f32 %v1940, %v2164
        %v2197 = vmul.f32 %v1941, %v2165
        %v2198 = vmul.f32 %v1942, %v2166
        %v2199 = vmul.f32 %v1943, %v2167
        %v2200 = vmul.f32 %v1944, %v2168
        %v2201 = vmul.f32 %v1945, %v2169
        %v2202 = vmul.f32 %v1946, %v2170
        %v2203 = vadd.f32 %v2043, %v2171
        %v2204 = vadd.f32 %v2044, %v2172
        %v2205 = vadd.f32 %v2045, %v2173
        %v2206 = vadd.f32 %v2046, %v2174
        %v2207 = vadd.f32 %v2047, %v2175
        %v2208 = vadd.f32 %v2048, %v2176
        %v2209 = vadd.f32 %v2049, %v2177
        %v2210 = vadd.f32 %v2050, %v2178
        %v2211 = vadd.f32 %v2051, %v2179
        %v2212 = vadd.f32 %v2052, %v2180
        %v2213 = vadd.f32 %v2053, %v2181
        %v2214 = vadd.f32 %v2054, %v2182
        %v2215 = vadd.f32 %v2055, %v2183
        %v2216 = vadd.f32 %v2056, %v2184
        %v2217 = vadd.f32 %v2057, %v2185
        %v2218 = vadd.f32 %v2058, %v2186
        %v2219 = vadd.f32 %v2059, %v2187
        %v2220 = vadd.f32 %v2060, %v2188
        %v2221 = vadd.f32 %v2061, %v2189
        %v2222 = vadd.f32 %v2062, %v2190
        %v2223 = vadd.f32 %v2063, %v2191
        %v2224 = vadd.f32 %v2064, %v2192
        %v2225 = vadd.f32 %v2065, %v2193
        %v2226 = vadd.f32 %v2066, %v2194
        %v2227 = vadd.f32 %v2067, %v2195
        %v2228 = vadd.f32 %v2068, %v2196
        %v2229 = vadd.f32 %v2069, %v2197
        %v2230 = vadd.f32 %v2070, %v2198
        %v2231 = vadd.f32 %v2071, %v2199
        %v2232 = vadd.f32 %v2072, %v2200
        %v2233 = vadd.f32 %v2073, %v2201
        %v2234 = vadd.f32 %v2074, %v2202
        %vm2235 = vcmask 523264
        %v2236 = vsel %vm2235, %v709, -inf
        %2237 = vmax.xlane.f32.xlu0 %v2236
        %v2238 = vpop.xlane.xlu0 %2237
        %v2239 = vsel %vm2235, %v710, -inf
        %2240 = vmax.xlane.f32.xlu0 %v2239
        %v2241 = vpop.xlane.xlu0 %2240
        %v2242 = vsel %vm2235, %v711, -inf
        %2243 = vmax.xlane.f32.xlu0 %v2242
        %v2244 = vpop.xlane.xlu0 %2243
        %v2245 = vsel %vm2235, %v712, -inf
        %2246 = vmax.xlane.f32.xlu0 %v2245
        %v2247 = vpop.xlane.xlu0 %2246
        %v2248 = vsel %vm2235, %v713, -inf
        %2249 = vmax.xlane.f32.xlu0 %v2248
        %v2250 = vpop.xlane.xlu0 %2249
        %v2251 = vsel %vm2235, %v714, -inf
        %2252 = vmax.xlane.f32.xlu0 %v2251
        %v2253 = vpop.xlane.xlu0 %2252
        %v2254 = vsel %vm2235, %v715, -inf
        %2255 = vmax.xlane.f32.xlu0 %v2254
        %v2256 = vpop.xlane.xlu0 %2255
        %v2257 = vsel %vm2235, %v716, -inf
        %2258 = vmax.xlane.f32.xlu0 %v2257
        %v2259 = vpop.xlane.xlu0 %2258
        %v2260 = vsel %vm2235, %v717, -inf
        %2261 = vmax.xlane.f32.xlu0 %v2260
        %v2262 = vpop.xlane.xlu0 %2261
        %v2263 = vsel %vm2235, %v718, -inf
        %2264 = vmax.xlane.f32.xlu0 %v2263
        %v2265 = vpop.xlane.xlu0 %2264
        %v2266 = vsel %vm2235, %v719, -inf
        %2267 = vmax.xlane.f32.xlu0 %v2266
        %v2268 = vpop.xlane.xlu0 %2267
        %v2269 = vsel %vm2235, %v720, -inf
        %2270 = vmax.xlane.f32.xlu0 %v2269
        %v2271 = vpop.xlane.xlu0 %2270
        %v2272 = vsel %vm2235, %v721, -inf
        %2273 = vmax.xlane.f32.xlu0 %v2272
        %v2274 = vpop.xlane.xlu0 %2273
        %v2275 = vsel %vm2235, %v722, -inf
        %2276 = vmax.xlane.f32.xlu0 %v2275
        %v2277 = vpop.xlane.xlu0 %2276
        %v2278 = vsel %vm2235, %v723, -inf
        %2279 = vmax.xlane.f32.xlu0 %v2278
        %v2280 = vpop.xlane.xlu0 %2279
        %v2281 = vsel %vm2235, %v724, -inf
        %2282 = vmax.xlane.f32.xlu0 %v2281
        %v2283 = vpop.xlane.xlu0 %2282
        %v2284 = vsel %vm2235, %v725, -inf
        %2285 = vmax.xlane.f32.xlu0 %v2284
        %v2286 = vpop.xlane.xlu0 %2285
        %v2287 = vsel %vm2235, %v726, -inf
        %2288 = vmax.xlane.f32.xlu0 %v2287
        %v2289 = vpop.xlane.xlu0 %2288
        %v2290 = vsel %vm2235, %v727, -inf
        %2291 = vmax.xlane.f32.xlu0 %v2290
        %v2292 = vpop.xlane.xlu0 %2291
        %v2293 = vsel %vm2235, %v728, -inf
        %2294 = vmax.xlane.f32.xlu0 %v2293
        %v2295 = vpop.xlane.xlu0 %2294
        %v2296 = vsel %vm2235, %v729, -inf
        %2297 = vmax.xlane.f32.xlu0 %v2296
        %v2298 = vpop.xlane.xlu0 %2297
        %v2299 = vsel %vm2235, %v730, -inf
        %2300 = vmax.xlane.f32.xlu0 %v2299
        %v2301 = vpop.xlane.xlu0 %2300
        %v2302 = vsel %vm2235, %v731, -inf
        %2303 = vmax.xlane.f32.xlu0 %v2302
        %v2304 = vpop.xlane.xlu0 %2303
        %v2305 = vsel %vm2235, %v732, -inf
        %2306 = vmax.xlane.f32.xlu0 %v2305
        %v2307 = vpop.xlane.xlu0 %2306
        %v2308 = vsel %vm2235, %v733, -inf
        %2309 = vmax.xlane.f32.xlu0 %v2308
        %v2310 = vpop.xlane.xlu0 %2309
        %v2311 = vsel %vm2235, %v734, -inf
        %2312 = vmax.xlane.f32.xlu0 %v2311
        %v2313 = vpop.xlane.xlu0 %2312
        %v2314 = vsel %vm2235, %v735, -inf
        %2315 = vmax.xlane.f32.xlu0 %v2314
        %v2316 = vpop.xlane.xlu0 %2315
        %v2317 = vsel %vm2235, %v736, -inf
        %2318 = vmax.xlane.f32.xlu0 %v2317
        %v2319 = vpop.xlane.xlu0 %2318
        %v2320 = vsel %vm2235, %v737, -inf
        %2321 = vmax.xlane.f32.xlu0 %v2320
        %v2322 = vpop.xlane.xlu0 %2321
        %v2323 = vsel %vm2235, %v738, -inf
        %2324 = vmax.xlane.f32.xlu0 %v2323
        %v2325 = vpop.xlane.xlu0 %2324
        %v2326 = vsel %vm2235, %v739, -inf
        %2327 = vmax.xlane.f32.xlu0 %v2326
        %v2328 = vpop.xlane.xlu0 %2327
        %v2329 = vsel %vm2235, %v740, -inf
        %2330 = vmax.xlane.f32.xlu0 %v2329
        %v2331 = vpop.xlane.xlu0 %2330
        %v2332 = vsub.f32 %v709, %v2238
        %v2333 = vsub.f32 %v710, %v2241
        %v2334 = vsub.f32 %v711, %v2244
        %v2335 = vsub.f32 %v712, %v2247
        %v2336 = vsub.f32 %v713, %v2250
        %v2337 = vsub.f32 %v714, %v2253
        %v2338 = vsub.f32 %v715, %v2256
        %v2339 = vsub.f32 %v716, %v2259
        %v2340 = vsub.f32 %v717, %v2262
        %v2341 = vsub.f32 %v718, %v2265
        %v2342 = vsub.f32 %v719, %v2268
        %v2343 = vsub.f32 %v720, %v2271
        %v2344 = vsub.f32 %v721, %v2274
        %v2345 = vsub.f32 %v722, %v2277
        %v2346 = vsub.f32 %v723, %v2280
        %v2347 = vsub.f32 %v724, %v2283
        %v2348 = vsub.f32 %v725, %v2286
        %v2349 = vsub.f32 %v726, %v2289
        %v2350 = vsub.f32 %v727, %v2292
        %v2351 = vsub.f32 %v728, %v2295
        %v2352 = vsub.f32 %v729, %v2298
        %v2353 = vsub.f32 %v730, %v2301
        %v2354 = vsub.f32 %v731, %v2304
        %v2355 = vsub.f32 %v732, %v2307
        %v2356 = vsub.f32 %v733, %v2310
        %v2357 = vsub.f32 %v734, %v2313
        %v2358 = vsub.f32 %v735, %v2316
        %v2359 = vsub.f32 %v736, %v2319
        %v2360 = vsub.f32 %v737, %v2322
        %v2361 = vsub.f32 %v738, %v2325
        %v2362 = vsub.f32 %v739, %v2328
        %v2363 = vsub.f32 %v740, %v2331
        %v2364 = vmul.f32 %v2332, 1.442695
        %v2365 = vpow.pop %v2364
        %v2366 = vmul.f32 %v2333, 1.442695
        %v2367 = vpow.pop %v2366
        %v2368 = vmul.f32 %v2334, 1.442695
        %v2369 = vpow.pop %v2368
        %v2370 = vmul.f32 %v2335, 1.442695
        %v2371 = vpow.pop %v2370
        %v2372 = vmul.f32 %v2336, 1.442695
        %v2373 = vpow.pop %v2372
        %v2374 = vmul.f32 %v2337, 1.442695
        %v2375 = vpow.pop %v2374
        %v2376 = vmul.f32 %v2338, 1.442695
        %v2377 = vpow.pop %v2376
        %v2378 = vmul.f32 %v2339, 1.442695
        %v2379 = vpow.pop %v2378
        %v2380 = vmul.f32 %v2340, 1.442695
        %v2381 = vpow.pop %v2380
        %v2382 = vmul.f32 %v2341, 1.442695
        %v2383 = vpow.pop %v2382
        %v2384 = vmul.f32 %v2342, 1.442695
        %v2385 = vpow.pop %v2384
        %v2386 = vmul.f32 %v2343, 1.442695
        %v2387 = vpow.pop %v2386
        %v2388 = vmul.f32 %v2344, 1.442695
        %v2389 = vpow.pop %v2388
        %v2390 = vmul.f32 %v2345, 1.442695
        %v2391 = vpow.pop %v2390
        %v2392 = vmul.f32 %v2346, 1.442695
        %v2393 = vpow.pop %v2392
        %v2394 = vmul.f32 %v2347, 1.442695
        %v2395 = vpow.pop %v2394
        %v2396 = vmul.f32 %v2348, 1.442695
        %v2397 = vpow.pop %v2396
        %v2398 = vmul.f32 %v2349, 1.442695
        %v2399 = vpow.pop %v2398
        %v2400 = vmul.f32 %v2350, 1.442695
        %v2401 = vpow.pop %v2400
        %v2402 = vmul.f32 %v2351, 1.442695
        %v2403 = vpow.pop %v2402
        %v2404 = vmul.f32 %v2352, 1.442695
        %v2405 = vpow.pop %v2404
        %v2406 = vmul.f32 %v2353, 1.442695
        %v2407 = vpow.pop %v2406
        %v2408 = vmul.f32 %v2354, 1.442695
        %v2409 = vpow.pop %v2408
        %v2410 = vmul.f32 %v2355, 1.442695
        %v2411 = vpow.pop %v2410
        %v2412 = vmul.f32 %v2356, 1.442695
        %v2413 = vpow.pop %v2412
        %v2414 = vmul.f32 %v2357, 1.442695
        %v2415 = vpow.pop %v2414
        %v2416 = vmul.f32 %v2358, 1.442695
        %v2417 = vpow.pop %v2416
        %v2418 = vmul.f32 %v2359, 1.442695
        %v2419 = vpow.pop %v2418
        %v2420 = vmul.f32 %v2360, 1.442695
        %v2421 = vpow.pop %v2420
        %v2422 = vmul.f32 %v2361, 1.442695
        %v2423 = vpow.pop %v2422
        %v2424 = vmul.f32 %v2362, 1.442695
        %v2425 = vpow.pop %v2424
        %v2426 = vmul.f32 %v2363, 1.442695
        %v2427 = vpow.pop %v2426
        %v2428 = vlaneseq
        %v2429 = vshrl.u32 %v2428, 7
        %v2430 = vadd.s32 %v2429, 8
        %v2431 = vadd.s32 %v2429, 16
        %v2432 = vadd.s32 %v2429, 24
        %v2433 = vadd.s32 %v2429, 32
        %v2434 = vadd.s32 %v2429, 40
        %v2435 = vadd.s32 %v2429, 48
        %v2436 = vadd.s32 %v2429, 56
        %vm2437 = vcmp.ge.s32.totalorder %v2429, 16
        %vm2438 = vcmp.ge.s32.totalorder %v2430, 16
        %vm2439 = vcmp.ge.s32.totalorder %v2431, 16
        %vm2440 = vcmp.ge.s32.totalorder %v2432, 16
        %vm2441 = vcmp.ge.s32.totalorder %v2433, 16
        %vm2442 = vcmp.ge.s32.totalorder %v2434, 16
        %vm2443 = vcmp.ge.s32.totalorder %v2435, 16
        %vm2444 = vcmp.ge.s32.totalorder %v2436, 16
        %v2445 = vsel %vm2437, 1, 0
        %v2446 = vsel %vm2438, 1, 0
        %v2447 = vsel %vm2439, 1, 0
        %v2448 = vsel %vm2440, 1, 0
        %v2449 = vsel %vm2441, 1, 0
        %v2450 = vsel %vm2442, 1, 0
        %v2451 = vsel %vm2443, 1, 0
        %v2452 = vsel %vm2444, 1, 0
        %vm2453 = vcmp.ge.s32.totalorder %v2429, 32
        %vm2454 = vcmp.ge.s32.totalorder %v2430, 32
        %vm2455 = vcmp.ge.s32.totalorder %v2431, 32
        %vm2456 = vcmp.ge.s32.totalorder %v2432, 32
        %vm2457 = vcmp.ge.s32.totalorder %v2433, 32
        %vm2458 = vcmp.ge.s32.totalorder %v2434, 32
        %vm2459 = vcmp.ge.s32.totalorder %v2435, 32
        %vm2460 = vcmp.ge.s32.totalorder %v2436, 32
        %v2461 = vsel %vm2453, 1, 0
        %v2462 = vsel %vm2454, 1, 0
        %v2463 = vsel %vm2455, 1, 0
        %v2464 = vsel %vm2456, 1, 0
        %v2465 = vsel %vm2457, 1, 0
        %v2466 = vsel %vm2458, 1, 0
        %v2467 = vsel %vm2459, 1, 0
        %v2468 = vsel %vm2460, 1, 0
        %v2469 = vadd.s32 %v2445, %v2461
        %v2470 = vadd.s32 %v2446, %v2462
        %v2471 = vadd.s32 %v2447, %v2463
        %v2472 = vadd.s32 %v2448, %v2464
        %v2473 = vadd.s32 %v2449, %v2465
        %v2474 = vadd.s32 %v2450, %v2466
        %v2475 = vadd.s32 %v2451, %v2467
        %v2476 = vadd.s32 %v2452, %v2468
        %vm2477 = vcmp.ge.s32.totalorder %v2429, 48
        %vm2478 = vcmp.ge.s32.totalorder %v2430, 48
        %vm2479 = vcmp.ge.s32.totalorder %v2431, 48
        %vm2480 = vcmp.ge.s32.totalorder %v2432, 48
        %vm2481 = vcmp.ge.s32.totalorder %v2433, 48
        %vm2482 = vcmp.ge.s32.totalorder %v2434, 48
        %vm2483 = vcmp.ge.s32.totalorder %v2435, 48
        %vm2484 = vcmp.ge.s32.totalorder %v2436, 48
        %v2485 = vsel %vm2477, 1, 0
        %v2486 = vsel %vm2478, 1, 0
        %v2487 = vsel %vm2479, 1, 0
        %v2488 = vsel %vm2480, 1, 0
        %v2489 = vsel %vm2481, 1, 0
        %v2490 = vsel %vm2482, 1, 0
        %v2491 = vsel %vm2483, 1, 0
        %v2492 = vsel %vm2484, 1, 0
        %v2493 = vadd.s32 %v2469, %v2485
        %v2494 = vadd.s32 %v2470, %v2486
        %v2495 = vadd.s32 %v2471, %v2487
        %v2496 = vadd.s32 %v2472, %v2488
        %v2497 = vadd.s32 %v2473, %v2489
        %v2498 = vadd.s32 %v2474, %v2490
        %v2499 = vadd.s32 %v2475, %v2491
        %v2500 = vadd.s32 %v2476, %v2492
        %vm2501 = vcmp.eq.s32.totalorder %v2493, %v846
        %vm2502 = vcmp.eq.s32.totalorder %v2494, %v846
        %vm2503 = vcmp.eq.s32.totalorder %v2495, %v846
        %vm2504 = vcmp.eq.s32.totalorder %v2496, %v846
        %vm2505 = vcmp.eq.s32.totalorder %v2497, %v846
        %vm2506 = vcmp.eq.s32.totalorder %v2498, %v846
        %vm2507 = vcmp.eq.s32.totalorder %v2499, %v846
        %vm2508 = vcmp.eq.s32.totalorder %v2500, %v846
        %v2509 = vsel %vm2501, 1, 0
        %v2510 = vsel %vm2502, 1, 0
        %v2511 = vsel %vm2503, 1, 0
        %v2512 = vsel %vm2504, 1, 0
        %v2513 = vsel %vm2505, 1, 0
        %v2514 = vsel %vm2506, 1, 0
        %v2515 = vsel %vm2507, 1, 0
        %v2516 = vsel %vm2508, 1, 0
        %v2517 = vcvt.s32.f32 %v2509
        %v2518 = vcvt.s32.f32 %v2510
        %v2519 = vcvt.s32.f32 %v2511
        %v2520 = vcvt.s32.f32 %v2512
        %v2521 = vcvt.s32.f32 %v2513
        %v2522 = vcvt.s32.f32 %v2514
        %v2523 = vcvt.s32.f32 %v2515
        %v2524 = vcvt.s32.f32 %v2516
        %v2526 = vsel %vm2235, %v2365, 0
        %v2529 = vsel %vm2235, %v2367, 0
        %v2532 = vsel %vm2235, %v2369, 0
        %v2535 = vsel %vm2235, %v2371, 0
        %v2538 = vsel %vm2235, %v2373, 0
        %v2541 = vsel %vm2235, %v2375, 0
        %v2544 = vsel %vm2235, %v2377, 0
        %v2547 = vsel %vm2235, %v2379, 0
        %v2550 = vsel %vm2235, %v2381, 0
        %v2553 = vsel %vm2235, %v2383, 0
        %v2556 = vsel %vm2235, %v2385, 0
        %v2559 = vsel %vm2235, %v2387, 0
        %v2562 = vsel %vm2235, %v2389, 0
        %v2565 = vsel %vm2235, %v2391, 0
        %v2568 = vsel %vm2235, %v2393, 0
        %v2571 = vsel %vm2235, %v2395, 0
        %v2574 = vsel %vm2235, %v2397, 0
        %v2577 = vsel %vm2235, %v2399, 0
        %v2580 = vsel %vm2235, %v2401, 0
        %v2583 = vsel %vm2235, %v2403, 0
        %v2586 = vsel %vm2235, %v2405, 0
        %v2589 = vsel %vm2235, %v2407, 0
        %v2592 = vsel %vm2235, %v2409, 0
        %v2595 = vsel %vm2235, %v2411, 0
        %v2598 = vsel %vm2235, %v2413, 0
        %v2601 = vsel %vm2235, %v2415, 0
        %v2604 = vsel %vm2235, %v2417, 0
        %v2607 = vsel %vm2235, %v2419, 0
        %v2610 = vsel %vm2235, %v2421, 0
        %v2613 = vsel %vm2235, %v2423, 0
        %v2616 = vsel %vm2235, %v2425, 0
        %v2619 = vsel %vm2235, %v2427, 0
        %2621 = vmatpush.msra.mxu0 0.0
        %2622 = vmatpush.msra.mxu0 0.0
        %2623 = vmatpush.msra.mxu0 0.0
        %2624 = vmatpush.msra.mxu0 0.0
        %2625 = vmatpush.msra.mxu0 0.0
        %2626 = vmatpush.msra.mxu0 0.0
        %2627 = vmatpush.msra.mxu0 0.0
        %2628 = vmatpush.msra.mxu0 0.0
        %v2629 = vand.u32 %v2524, 4294901760
        %2630 = vmatpush.msra.mxu0 %v2629
        %v2631 = vand.u32 %v2523, 4294901760
        %2632 = vmatpush.msra.mxu0 %v2631
        %v2633 = vand.u32 %v2522, 4294901760
        %2634 = vmatpush.msra.mxu0 %v2633
        %v2635 = vand.u32 %v2521, 4294901760
        %2636 = vmatpush.msra.mxu0 %v2635
        %v2637 = vand.u32 %v2520, 4294901760
        %2638 = vmatpush.msra.mxu0 %v2637
        %v2639 = vand.u32 %v2519, 4294901760
        %2640 = vmatpush.msra.mxu0 %v2639
        %v2641 = vand.u32 %v2518, 4294901760
        %2642 = vmatpush.msra.mxu0 %v2641
        %v2643 = vand.u32 %v2517, 4294901760
        %2644 = vmatpush.msra.mxu0 %v2643
        %v2645 = vand.u32 %v2526, 4294901760
        %v2646 = vsub.f32 %v2526, %v2645
        %v2647 = vand.u32 %v2646, 4294901760
        %v2648 = vsub.f32 %v2646, %v2647
        %v2649 = vand.u32 %v2648, 4294901760
        %2650 = vmatmul.f32.gmra.mxu0 %v2649
        %v2651 = vpop.f32.mrf.mxu0
        %v2652 = vadd.f32 0.0, %v2651
        %v2653 = vand.u32 %v2529, 4294901760
        %v2654 = vsub.f32 %v2529, %v2653
        %v2655 = vand.u32 %v2654, 4294901760
        %v2656 = vsub.f32 %v2654, %v2655
        %v2657 = vand.u32 %v2656, 4294901760
        %2658 = vmatmul.f32.gmra.mxu0 %v2657
        %v2659 = vpop.f32.mrf.mxu0
        %v2660 = vadd.f32 0.0, %v2659
        %v2661 = vand.u32 %v2532, 4294901760
        %v2662 = vsub.f32 %v2532, %v2661
        %v2663 = vand.u32 %v2662, 4294901760
        %v2664 = vsub.f32 %v2662, %v2663
        %v2665 = vand.u32 %v2664, 4294901760
        %2666 = vmatmul.f32.gmra.mxu0 %v2665
        %v2667 = vpop.f32.mrf.mxu0
        %v2668 = vadd.f32 0.0, %v2667
        %v2669 = vand.u32 %v2535, 4294901760
        %v2670 = vsub.f32 %v2535, %v2669
        %v2671 = vand.u32 %v2670, 4294901760
        %v2672 = vsub.f32 %v2670, %v2671
        %v2673 = vand.u32 %v2672, 4294901760
        %2674 = vmatmul.f32.gmra.mxu0 %v2673
        %v2675 = vpop.f32.mrf.mxu0
        %v2676 = vadd.f32 0.0, %v2675
        %v2677 = vand.u32 %v2538, 4294901760
        %v2678 = vsub.f32 %v2538, %v2677
        %v2679 = vand.u32 %v2678, 4294901760
        %v2680 = vsub.f32 %v2678, %v2679
        %v2681 = vand.u32 %v2680, 4294901760
        %2682 = vmatmul.f32.gmra.mxu0 %v2681
        %v2683 = vpop.f32.mrf.mxu0
        %v2684 = vadd.f32 0.0, %v2683
        %v2685 = vand.u32 %v2541, 4294901760
        %v2686 = vsub.f32 %v2541, %v2685
        %v2687 = vand.u32 %v2686, 4294901760
        %v2688 = vsub.f32 %v2686, %v2687
        %v2689 = vand.u32 %v2688, 4294901760
        %2690 = vmatmul.f32.gmra.mxu0 %v2689
        %v2691 = vpop.f32.mrf.mxu0
        %v2692 = vadd.f32 0.0, %v2691
        %v2693 = vand.u32 %v2544, 4294901760
        %v2694 = vsub.f32 %v2544, %v2693
        %v2695 = vand.u32 %v2694, 4294901760
        %v2696 = vsub.f32 %v2694, %v2695
        %v2697 = vand.u32 %v2696, 4294901760
        %2698 = vmatmul.f32.gmra.mxu0 %v2697
        %v2699 = vpop.f32.mrf.mxu0
        %v2700 = vadd.f32 0.0, %v2699
        %v2701 = vand.u32 %v2547, 4294901760
        %v2702 = vsub.f32 %v2547, %v2701
        %v2703 = vand.u32 %v2702, 4294901760
        %v2704 = vsub.f32 %v2702, %v2703
        %v2705 = vand.u32 %v2704, 4294901760
        %2706 = vmatmul.f32.gmra.mxu0 %v2705
        %v2707 = vpop.f32.mrf.mxu0
        %v2708 = vadd.f32 0.0, %v2707
        %v2709 = vand.u32 %v2550, 4294901760
        %v2710 = vsub.f32 %v2550, %v2709
        %v2711 = vand.u32 %v2710, 4294901760
        %v2712 = vsub.f32 %v2710, %v2711
        %v2713 = vand.u32 %v2712, 4294901760
        %2714 = vmatmul.f32.gmra.mxu0 %v2713
        %v2715 = vpop.f32.mrf.mxu0
        %v2716 = vadd.f32 0.0, %v2715
        %v2717 = vand.u32 %v2553, 4294901760
        %v2718 = vsub.f32 %v2553, %v2717
        %v2719 = vand.u32 %v2718, 4294901760
        %v2720 = vsub.f32 %v2718, %v2719
        %v2721 = vand.u32 %v2720, 4294901760
        %2722 = vmatmul.f32.gmra.mxu0 %v2721
        %v2723 = vpop.f32.mrf.mxu0
        %v2724 = vadd.f32 0.0, %v2723
        %v2725 = vand.u32 %v2556, 4294901760
        %v2726 = vsub.f32 %v2556, %v2725
        %v2727 = vand.u32 %v2726, 4294901760
        %v2728 = vsub.f32 %v2726, %v2727
        %v2729 = vand.u32 %v2728, 4294901760
        %2730 = vmatmul.f32.gmra.mxu0 %v2729
        %v2731 = vpop.f32.mrf.mxu0
        %v2732 = vadd.f32 0.0, %v2731
        %v2733 = vand.u32 %v2559, 4294901760
        %v2734 = vsub.f32 %v2559, %v2733
        %v2735 = vand.u32 %v2734, 4294901760
        %v2736 = vsub.f32 %v2734, %v2735
        %v2737 = vand.u32 %v2736, 4294901760
        %2738 = vmatmul.f32.gmra.mxu0 %v2737
        %v2739 = vpop.f32.mrf.mxu0
        %v2740 = vadd.f32 0.0, %v2739
        %v2741 = vand.u32 %v2562, 4294901760
        %v2742 = vsub.f32 %v2562, %v2741
        %v2743 = vand.u32 %v2742, 4294901760
        %v2744 = vsub.f32 %v2742, %v2743
        %v2745 = vand.u32 %v2744, 4294901760
        %2746 = vmatmul.f32.gmra.mxu0 %v2745
        %v2747 = vpop.f32.mrf.mxu0
        %v2748 = vadd.f32 0.0, %v2747
        %v2749 = vand.u32 %v2565, 4294901760
        %v2750 = vsub.f32 %v2565, %v2749
        %v2751 = vand.u32 %v2750, 4294901760
        %v2752 = vsub.f32 %v2750, %v2751
        %v2753 = vand.u32 %v2752, 4294901760
        %2754 = vmatmul.f32.gmra.mxu0 %v2753
        %v2755 = vpop.f32.mrf.mxu0
        %v2756 = vadd.f32 0.0, %v2755
        %v2757 = vand.u32 %v2568, 4294901760
        %v2758 = vsub.f32 %v2568, %v2757
        %v2759 = vand.u32 %v2758, 4294901760
        %v2760 = vsub.f32 %v2758, %v2759
        %v2761 = vand.u32 %v2760, 4294901760
        %2762 = vmatmul.f32.gmra.mxu0 %v2761
        %v2763 = vpop.f32.mrf.mxu0
        %v2764 = vadd.f32 0.0, %v2763
        %v2765 = vand.u32 %v2571, 4294901760
        %v2766 = vsub.f32 %v2571, %v2765
        %v2767 = vand.u32 %v2766, 4294901760
        %v2768 = vsub.f32 %v2766, %v2767
        %v2769 = vand.u32 %v2768, 4294901760
        %2770 = vmatmul.f32.gmra.mxu0 %v2769
        %v2771 = vpop.f32.mrf.mxu0
        %v2772 = vadd.f32 0.0, %v2771
        %v2773 = vand.u32 %v2574, 4294901760
        %v2774 = vsub.f32 %v2574, %v2773
        %v2775 = vand.u32 %v2774, 4294901760
        %v2776 = vsub.f32 %v2774, %v2775
        %v2777 = vand.u32 %v2776, 4294901760
        %2778 = vmatmul.f32.gmra.mxu0 %v2777
        %v2779 = vpop.f32.mrf.mxu0
        %v2780 = vadd.f32 0.0, %v2779
        %v2781 = vand.u32 %v2577, 4294901760
        %v2782 = vsub.f32 %v2577, %v2781
        %v2783 = vand.u32 %v2782, 4294901760
        %v2784 = vsub.f32 %v2782, %v2783
        %v2785 = vand.u32 %v2784, 4294901760
        %2786 = vmatmul.f32.gmra.mxu0 %v2785
        %v2787 = vpop.f32.mrf.mxu0
        %v2788 = vadd.f32 0.0, %v2787
        %v2789 = vand.u32 %v2580, 4294901760
        %v2790 = vsub.f32 %v2580, %v2789
        %v2791 = vand.u32 %v2790, 4294901760
        %v2792 = vsub.f32 %v2790, %v2791
        %v2793 = vand.u32 %v2792, 4294901760
        %2794 = vmatmul.f32.gmra.mxu0 %v2793
        %v2795 = vpop.f32.mrf.mxu0
        %v2796 = vadd.f32 0.0, %v2795
        %v2797 = vand.u32 %v2583, 4294901760
        %v2798 = vsub.f32 %v2583, %v2797
        %v2799 = vand.u32 %v2798, 4294901760
        %v2800 = vsub.f32 %v2798, %v2799
        %v2801 = vand.u32 %v2800, 4294901760
        %2802 = vmatmul.f32.gmra.mxu0 %v2801
        %v2803 = vpop.f32.mrf.mxu0
        %v2804 = vadd.f32 0.0, %v2803
        %v2805 = vand.u32 %v2586, 4294901760
        %v2806 = vsub.f32 %v2586, %v2805
        %v2807 = vand.u32 %v2806, 4294901760
        %v2808 = vsub.f32 %v2806, %v2807
        %v2809 = vand.u32 %v2808, 4294901760
        %2810 = vmatmul.f32.gmra.mxu0 %v2809
        %v2811 = vpop.f32.mrf.mxu0
        %v2812 = vadd.f32 0.0, %v2811
        %v2813 = vand.u32 %v2589, 4294901760
        %v2814 = vsub.f32 %v2589, %v2813
        %v2815 = vand.u32 %v2814, 4294901760
        %v2816 = vsub.f32 %v2814, %v2815
        %v2817 = vand.u32 %v2816, 4294901760
        %2818 = vmatmul.f32.gmra.mxu0 %v2817
        %v2819 = vpop.f32.mrf.mxu0
        %v2820 = vadd.f32 0.0, %v2819
        %v2821 = vand.u32 %v2592, 4294901760
        %v2822 = vsub.f32 %v2592, %v2821
        %v2823 = vand.u32 %v2822, 4294901760
        %v2824 = vsub.f32 %v2822, %v2823
        %v2825 = vand.u32 %v2824, 4294901760
        %2826 = vmatmul.f32.gmra.mxu0 %v2825
        %v2827 = vpop.f32.mrf.mxu0
        %v2828 = vadd.f32 0.0, %v2827
        %v2829 = vand.u32 %v2595, 4294901760
        %v2830 = vsub.f32 %v2595, %v2829
        %v2831 = vand.u32 %v2830, 4294901760
        %v2832 = vsub.f32 %v2830, %v2831
        %v2833 = vand.u32 %v2832, 4294901760
        %2834 = vmatmul.f32.gmra.mxu0 %v2833
        %v2835 = vpop.f32.mrf.mxu0
        %v2836 = vadd.f32 0.0, %v2835
        %v2837 = vand.u32 %v2598, 4294901760
        %v2838 = vsub.f32 %v2598, %v2837
        %v2839 = vand.u32 %v2838, 4294901760
        %v2840 = vsub.f32 %v2838, %v2839
        %v2841 = vand.u32 %v2840, 4294901760
        %2842 = vmatmul.f32.gmra.mxu0 %v2841
        %v2843 = vpop.f32.mrf.mxu0
        %v2844 = vadd.f32 0.0, %v2843
        %v2845 = vand.u32 %v2601, 4294901760
        %v2846 = vsub.f32 %v2601, %v2845
        %v2847 = vand.u32 %v2846, 4294901760
        %v2848 = vsub.f32 %v2846, %v2847
        %v2849 = vand.u32 %v2848, 4294901760
        %2850 = vmatmul.f32.gmra.mxu0 %v2849
        %v2851 = vpop.f32.mrf.mxu0
        %v2852 = vadd.f32 0.0, %v2851
        %v2853 = vand.u32 %v2604, 4294901760
        %v2854 = vsub.f32 %v2604, %v2853
        %v2855 = vand.u32 %v2854, 4294901760
        %v2856 = vsub.f32 %v2854, %v2855
        %v2857 = vand.u32 %v2856, 4294901760
        %2858 = vmatmul.f32.gmra.mxu0 %v2857
        %v2859 = vpop.f32.mrf.mxu0
        %v2860 = vadd.f32 0.0, %v2859
        %v2861 = vand.u32 %v2607, 4294901760
        %v2862 = vsub.f32 %v2607, %v2861
        %v2863 = vand.u32 %v2862, 4294901760
        %v2864 = vsub.f32 %v2862, %v2863
        %v2865 = vand.u32 %v2864, 4294901760
        %2866 = vmatmul.f32.gmra.mxu0 %v2865
        %v2867 = vpop.f32.mrf.mxu0
        %v2868 = vadd.f32 0.0, %v2867
        %v2869 = vand.u32 %v2610, 4294901760
        %v2870 = vsub.f32 %v2610, %v2869
        %v2871 = vand.u32 %v2870, 4294901760
        %v2872 = vsub.f32 %v2870, %v2871
        %v2873 = vand.u32 %v2872, 4294901760
        %2874 = vmatmul.f32.gmra.mxu0 %v2873
        %v2875 = vpop.f32.mrf.mxu0
        %v2876 = vadd.f32 0.0, %v2875
        %v2877 = vand.u32 %v2613, 4294901760
        %v2878 = vsub.f32 %v2613, %v2877
        %v2879 = vand.u32 %v2878, 4294901760
        %v2880 = vsub.f32 %v2878, %v2879
        %v2881 = vand.u32 %v2880, 4294901760
        %2882 = vmatmul.f32.gmra.mxu0 %v2881
        %v2883 = vpop.f32.mrf.mxu0
        %v2884 = vadd.f32 0.0, %v2883
        %v2885 = vand.u32 %v2616, 4294901760
        %v2886 = vsub.f32 %v2616, %v2885
        %v2887 = vand.u32 %v2886, 4294901760
        %v2888 = vsub.f32 %v2886, %v2887
        %v2889 = vand.u32 %v2888, 4294901760
        %2890 = vmatmul.f32.gmra.mxu0 %v2889
        %v2891 = vpop.f32.mrf.mxu0
        %v2892 = vadd.f32 0.0, %v2891
        %v2893 = vand.u32 %v2619, 4294901760
        %v2894 = vsub.f32 %v2619, %v2893
        %v2895 = vand.u32 %v2894, 4294901760
        %v2896 = vsub.f32 %v2894, %v2895
        %v2897 = vand.u32 %v2896, 4294901760
        %2898 = vmatmul.f32.gmra.mxu0 %v2897
        %v2899 = vpop.f32.mrf.mxu0
        %v2900 = vadd.f32 0.0, %v2899
        %2901 = vdwg.mxu0
        %2902 = vmatpush.msra.mxu0 0.0
        %2903 = vmatpush.msra.mxu0 0.0
        %2904 = vmatpush.msra.mxu0 0.0
        %2905 = vmatpush.msra.mxu0 0.0
        %2906 = vmatpush.msra.mxu0 0.0
        %2907 = vmatpush.msra.mxu0 0.0
        %2908 = vmatpush.msra.mxu0 0.0
        %2909 = vmatpush.msra.mxu0 0.0
        %v2910 = vand.u32 %v2524, 4294901760
        %v2911 = vsub.f32 %v2524, %v2910
        %v2912 = vand.u32 %v2911, 4294901760
        %v2913 = vsub.f32 %v2911, %v2912
        %v2914 = vand.u32 %v2913, 4294901760
        %2915 = vmatpush.msra.mxu0 %v2914
        %v2916 = vand.u32 %v2523, 4294901760
        %v2917 = vsub.f32 %v2523, %v2916
        %v2918 = vand.u32 %v2917, 4294901760
        %v2919 = vsub.f32 %v2917, %v2918
        %v2920 = vand.u32 %v2919, 4294901760
        %2921 = vmatpush.msra.mxu0 %v2920
        %v2922 = vand.u32 %v2522, 4294901760
        %v2923 = vsub.f32 %v2522, %v2922
        %v2924 = vand.u32 %v2923, 4294901760
        %v2925 = vsub.f32 %v2923, %v2924
        %v2926 = vand.u32 %v2925, 4294901760
        %2927 = vmatpush.msra.mxu0 %v2926
        %v2928 = vand.u32 %v2521, 4294901760
        %v2929 = vsub.f32 %v2521, %v2928
        %v2930 = vand.u32 %v2929, 4294901760
        %v2931 = vsub.f32 %v2929, %v2930
        %v2932 = vand.u32 %v2931, 4294901760
        %2933 = vmatpush.msra.mxu0 %v2932
        %v2934 = vand.u32 %v2520, 4294901760
        %v2935 = vsub.f32 %v2520, %v2934
        %v2936 = vand.u32 %v2935, 4294901760
        %v2937 = vsub.f32 %v2935, %v2936
        %v2938 = vand.u32 %v2937, 4294901760
        %2939 = vmatpush.msra.mxu0 %v2938
        %v2940 = vand.u32 %v2519, 4294901760
        %v2941 = vsub.f32 %v2519, %v2940
        %v2942 = vand.u32 %v2941, 4294901760
        %v2943 = vsub.f32 %v2941, %v2942
        %v2944 = vand.u32 %v2943, 4294901760
        %2945 = vmatpush.msra.mxu0 %v2944
        %v2946 = vand.u32 %v2518, 4294901760
        %v2947 = vsub.f32 %v2518, %v2946
        %v2948 = vand.u32 %v2947, 4294901760
        %v2949 = vsub.f32 %v2947, %v2948
        %v2950 = vand.u32 %v2949, 4294901760
        %2951 = vmatpush.msra.mxu0 %v2950
        %v2952 = vand.u32 %v2517, 4294901760
        %v2953 = vsub.f32 %v2517, %v2952
        %v2954 = vand.u32 %v2953, 4294901760
        %v2955 = vsub.f32 %v2953, %v2954
        %v2956 = vand.u32 %v2955, 4294901760
        %2957 = vmatpush.msra.mxu0 %v2956
        %v2958 = vand.u32 %v2526, 4294901760
        %2959 = vmatmul.f32.gmra.mxu0 %v2958
        %v2960 = vpop.f32.mrf.mxu0
        %v2961 = vadd.f32 %v2652, %v2960
        %v2962 = vand.u32 %v2529, 4294901760
        %2963 = vmatmul.f32.gmra.mxu0 %v2962
        %v2964 = vpop.f32.mrf.mxu0
        %v2965 = vadd.f32 %v2660, %v2964
        %v2966 = vand.u32 %v2532, 4294901760
        %2967 = vmatmul.f32.gmra.mxu0 %v2966
        %v2968 = vpop.f32.mrf.mxu0
        %v2969 = vadd.f32 %v2668, %v2968
        %v2970 = vand.u32 %v2535, 4294901760
        %2971 = vmatmul.f32.gmra.mxu0 %v2970
        %v2972 = vpop.f32.mrf.mxu0
        %v2973 = vadd.f32 %v2676, %v2972
        %v2974 = vand.u32 %v2538, 4294901760
        %2975 = vmatmul.f32.gmra.mxu0 %v2974
        %v2976 = vpop.f32.mrf.mxu0
        %v2977 = vadd.f32 %v2684, %v2976
        %v2978 = vand.u32 %v2541, 4294901760
        %2979 = vmatmul.f32.gmra.mxu0 %v2978
        %v2980 = vpop.f32.mrf.mxu0
        %v2981 = vadd.f32 %v2692, %v2980
        %v2982 = vand.u32 %v2544, 4294901760
        %2983 = vmatmul.f32.gmra.mxu0 %v2982
        %v2984 = vpop.f32.mrf.mxu0
        %v2985 = vadd.f32 %v2700, %v2984
        %v2986 = vand.u32 %v2547, 4294901760
        %2987 = vmatmul.f32.gmra.mxu0 %v2986
        %v2988 = vpop.f32.mrf.mxu0
        %v2989 = vadd.f32 %v2708, %v2988
        %v2990 = vand.u32 %v2550, 4294901760
        %2991 = vmatmul.f32.gmra.mxu0 %v2990
        %v2992 = vpop.f32.mrf.mxu0
        %v2993 = vadd.f32 %v2716, %v2992
        %v2994 = vand.u32 %v2553, 4294901760
        %2995 = vmatmul.f32.gmra.mxu0 %v2994
        %v2996 = vpop.f32.mrf.mxu0
        %v2997 = vadd.f32 %v2724, %v2996
        %v2998 = vand.u32 %v2556, 4294901760
        %2999 = vmatmul.f32.gmra.mxu0 %v2998
        %v3000 = vpop.f32.mrf.mxu0
        %v3001 = vadd.f32 %v2732, %v3000
        %v3002 = vand.u32 %v2559, 4294901760
        %3003 = vmatmul.f32.gmra.mxu0 %v3002
        %v3004 = vpop.f32.mrf.mxu0
        %v3005 = vadd.f32 %v2740, %v3004
        %v3006 = vand.u32 %v2562, 4294901760
        %3007 = vmatmul.f32.gmra.mxu0 %v3006
        %v3008 = vpop.f32.mrf.mxu0
        %v3009 = vadd.f32 %v2748, %v3008
        %v3010 = vand.u32 %v2565, 4294901760
        %3011 = vmatmul.f32.gmra.mxu0 %v3010
        %v3012 = vpop.f32.mrf.mxu0
        %v3013 = vadd.f32 %v2756, %v3012
        %v3014 = vand.u32 %v2568, 4294901760
        %3015 = vmatmul.f32.gmra.mxu0 %v3014
        %v3016 = vpop.f32.mrf.mxu0
        %v3017 = vadd.f32 %v2764, %v3016
        %v3018 = vand.u32 %v2571, 4294901760
        %3019 = vmatmul.f32.gmra.mxu0 %v3018
        %v3020 = vpop.f32.mrf.mxu0
        %v3021 = vadd.f32 %v2772, %v3020
        %v3022 = vand.u32 %v2574, 4294901760
        %3023 = vmatmul.f32.gmra.mxu0 %v3022
        %v3024 = vpop.f32.mrf.mxu0
        %v3025 = vadd.f32 %v2780, %v3024
        %v3026 = vand.u32 %v2577, 4294901760
        %3027 = vmatmul.f32.gmra.mxu0 %v3026
        %v3028 = vpop.f32.mrf.mxu0
        %v3029 = vadd.f32 %v2788, %v3028
        %v3030 = vand.u32 %v2580, 4294901760
        %3031 = vmatmul.f32.gmra.mxu0 %v3030
        %v3032 = vpop.f32.mrf.mxu0
        %v3033 = vadd.f32 %v2796, %v3032
        %v3034 = vand.u32 %v2583, 4294901760
        %3035 = vmatmul.f32.gmra.mxu0 %v3034
        %v3036 = vpop.f32.mrf.mxu0
        %v3037 = vadd.f32 %v2804, %v3036
        %v3038 = vand.u32 %v2586, 4294901760
        %3039 = vmatmul.f32.gmra.mxu0 %v3038
        %v3040 = vpop.f32.mrf.mxu0
        %v3041 = vadd.f32 %v2812, %v3040
        %v3042 = vand.u32 %v2589, 4294901760
        %3043 = vmatmul.f32.gmra.mxu0 %v3042
        %v3044 = vpop.f32.mrf.mxu0
        %v3045 = vadd.f32 %v2820, %v3044
        %v3046 = vand.u32 %v2592, 4294901760
        %3047 = vmatmul.f32.gmra.mxu0 %v3046
        %v3048 = vpop.f32.mrf.mxu0
        %v3049 = vadd.f32 %v2828, %v3048
        %v3050 = vand.u32 %v2595, 4294901760
        %3051 = vmatmul.f32.gmra.mxu0 %v3050
        %v3052 = vpop.f32.mrf.mxu0
        %v3053 = vadd.f32 %v2836, %v3052
        %v3054 = vand.u32 %v2598, 4294901760
        %3055 = vmatmul.f32.gmra.mxu0 %v3054
        %v3056 = vpop.f32.mrf.mxu0
        %v3057 = vadd.f32 %v2844, %v3056
        %v3058 = vand.u32 %v2601, 4294901760
        %3059 = vmatmul.f32.gmra.mxu0 %v3058
        %v3060 = vpop.f32.mrf.mxu0
        %v3061 = vadd.f32 %v2852, %v3060
        %v3062 = vand.u32 %v2604, 4294901760
        %3063 = vmatmul.f32.gmra.mxu0 %v3062
        %v3064 = vpop.f32.mrf.mxu0
        %v3065 = vadd.f32 %v2860, %v3064
        %v3066 = vand.u32 %v2607, 4294901760
        %3067 = vmatmul.f32.gmra.mxu0 %v3066
        %v3068 = vpop.f32.mrf.mxu0
        %v3069 = vadd.f32 %v2868, %v3068
        %v3070 = vand.u32 %v2610, 4294901760
        %3071 = vmatmul.f32.gmra.mxu0 %v3070
        %v3072 = vpop.f32.mrf.mxu0
        %v3073 = vadd.f32 %v2876, %v3072
        %v3074 = vand.u32 %v2613, 4294901760
        %3075 = vmatmul.f32.gmra.mxu0 %v3074
        %v3076 = vpop.f32.mrf.mxu0
        %v3077 = vadd.f32 %v2884, %v3076
        %v3078 = vand.u32 %v2616, 4294901760
        %3079 = vmatmul.f32.gmra.mxu0 %v3078
        %v3080 = vpop.f32.mrf.mxu0
        %v3081 = vadd.f32 %v2892, %v3080
        %v3082 = vand.u32 %v2619, 4294901760
        %3083 = vmatmul.f32.gmra.mxu0 %v3082
        %v3084 = vpop.f32.mrf.mxu0
        %v3085 = vadd.f32 %v2900, %v3084
        %3086 = vdwg.mxu0
        %3087 = vmatpush.msra.mxu0 0.0
        %3088 = vmatpush.msra.mxu0 0.0
        %3089 = vmatpush.msra.mxu0 0.0
        %3090 = vmatpush.msra.mxu0 0.0
        %3091 = vmatpush.msra.mxu0 0.0
        %3092 = vmatpush.msra.mxu0 0.0
        %3093 = vmatpush.msra.mxu0 0.0
        %3094 = vmatpush.msra.mxu0 0.0
        %v3095 = vand.u32 %v2524, 4294901760
        %v3096 = vsub.f32 %v2524, %v3095
        %3097 = vmatpush.msra.mxu0 %v3096
        %v3098 = vand.u32 %v2523, 4294901760
        %v3099 = vsub.f32 %v2523, %v3098
        %3100 = vmatpush.msra.mxu0 %v3099
        %v3101 = vand.u32 %v2522, 4294901760
        %v3102 = vsub.f32 %v2522, %v3101
        %3103 = vmatpush.msra.mxu0 %v3102
        %v3104 = vand.u32 %v2521, 4294901760
        %v3105 = vsub.f32 %v2521, %v3104
        %3106 = vmatpush.msra.mxu0 %v3105
        %v3107 = vand.u32 %v2520, 4294901760
        %v3108 = vsub.f32 %v2520, %v3107
        %3109 = vmatpush.msra.mxu0 %v3108
        %v3110 = vand.u32 %v2519, 4294901760
        %v3111 = vsub.f32 %v2519, %v3110
        %3112 = vmatpush.msra.mxu0 %v3111
        %v3113 = vand.u32 %v2518, 4294901760
        %v3114 = vsub.f32 %v2518, %v3113
        %3115 = vmatpush.msra.mxu0 %v3114
        %v3116 = vand.u32 %v2517, 4294901760
        %v3117 = vsub.f32 %v2517, %v3116
        %3118 = vmatpush.msra.mxu0 %v3117
        %v3119 = vand.u32 %v2526, 4294901760
        %v3120 = vsub.f32 %v2526, %v3119
        %3121 = vmatmul.f32.gmra.mxu0 %v3120
        %v3122 = vpop.f32.mrf.mxu0
        %v3123 = vadd.f32 %v2961, %v3122
        %v3124 = vand.u32 %v2529, 4294901760
        %v3125 = vsub.f32 %v2529, %v3124
        %3126 = vmatmul.f32.gmra.mxu0 %v3125
        %v3127 = vpop.f32.mrf.mxu0
        %v3128 = vadd.f32 %v2965, %v3127
        %v3129 = vand.u32 %v2532, 4294901760
        %v3130 = vsub.f32 %v2532, %v3129
        %3131 = vmatmul.f32.gmra.mxu0 %v3130
        %v3132 = vpop.f32.mrf.mxu0
        %v3133 = vadd.f32 %v2969, %v3132
        %v3134 = vand.u32 %v2535, 4294901760
        %v3135 = vsub.f32 %v2535, %v3134
        %3136 = vmatmul.f32.gmra.mxu0 %v3135
        %v3137 = vpop.f32.mrf.mxu0
        %v3138 = vadd.f32 %v2973, %v3137
        %v3139 = vand.u32 %v2538, 4294901760
        %v3140 = vsub.f32 %v2538, %v3139
        %3141 = vmatmul.f32.gmra.mxu0 %v3140
        %v3142 = vpop.f32.mrf.mxu0
        %v3143 = vadd.f32 %v2977, %v3142
        %v3144 = vand.u32 %v2541, 4294901760
        %v3145 = vsub.f32 %v2541, %v3144
        %3146 = vmatmul.f32.gmra.mxu0 %v3145
        %v3147 = vpop.f32.mrf.mxu0
        %v3148 = vadd.f32 %v2981, %v3147
        %v3149 = vand.u32 %v2544, 4294901760
        %v3150 = vsub.f32 %v2544, %v3149
        %3151 = vmatmul.f32.gmra.mxu0 %v3150
        %v3152 = vpop.f32.mrf.mxu0
        %v3153 = vadd.f32 %v2985, %v3152
        %v3154 = vand.u32 %v2547, 4294901760
        %v3155 = vsub.f32 %v2547, %v3154
        %3156 = vmatmul.f32.gmra.mxu0 %v3155
        %v3157 = vpop.f32.mrf.mxu0
        %v3158 = vadd.f32 %v2989, %v3157
        %v3159 = vand.u32 %v2550, 4294901760
        %v3160 = vsub.f32 %v2550, %v3159
        %3161 = vmatmul.f32.gmra.mxu0 %v3160
        %v3162 = vpop.f32.mrf.mxu0
        %v3163 = vadd.f32 %v2993, %v3162
        %v3164 = vand.u32 %v2553, 4294901760
        %v3165 = vsub.f32 %v2553, %v3164
        %3166 = vmatmul.f32.gmra.mxu0 %v3165
        %v3167 = vpop.f32.mrf.mxu0
        %v3168 = vadd.f32 %v2997, %v3167
        %v3169 = vand.u32 %v2556, 4294901760
        %v3170 = vsub.f32 %v2556, %v3169
        %3171 = vmatmul.f32.gmra.mxu0 %v3170
        %v3172 = vpop.f32.mrf.mxu0
        %v3173 = vadd.f32 %v3001, %v3172
        %v3174 = vand.u32 %v2559, 4294901760
        %v3175 = vsub.f32 %v2559, %v3174
        %3176 = vmatmul.f32.gmra.mxu0 %v3175
        %v3177 = vpop.f32.mrf.mxu0
        %v3178 = vadd.f32 %v3005, %v3177
        %v3179 = vand.u32 %v2562, 4294901760
        %v3180 = vsub.f32 %v2562, %v3179
        %3181 = vmatmul.f32.gmra.mxu0 %v3180
        %v3182 = vpop.f32.mrf.mxu0
        %v3183 = vadd.f32 %v3009, %v3182
        %v3184 = vand.u32 %v2565, 4294901760
        %v3185 = vsub.f32 %v2565, %v3184
        %3186 = vmatmul.f32.gmra.mxu0 %v3185
        %v3187 = vpop.f32.mrf.mxu0
        %v3188 = vadd.f32 %v3013, %v3187
        %v3189 = vand.u32 %v2568, 4294901760
        %v3190 = vsub.f32 %v2568, %v3189
        %3191 = vmatmul.f32.gmra.mxu0 %v3190
        %v3192 = vpop.f32.mrf.mxu0
        %v3193 = vadd.f32 %v3017, %v3192
        %v3194 = vand.u32 %v2571, 4294901760
        %v3195 = vsub.f32 %v2571, %v3194
        %3196 = vmatmul.f32.gmra.mxu0 %v3195
        %v3197 = vpop.f32.mrf.mxu0
        %v3198 = vadd.f32 %v3021, %v3197
        %v3199 = vand.u32 %v2574, 4294901760
        %v3200 = vsub.f32 %v2574, %v3199
        %3201 = vmatmul.f32.gmra.mxu0 %v3200
        %v3202 = vpop.f32.mrf.mxu0
        %v3203 = vadd.f32 %v3025, %v3202
        %v3204 = vand.u32 %v2577, 4294901760
        %v3205 = vsub.f32 %v2577, %v3204
        %3206 = vmatmul.f32.gmra.mxu0 %v3205
        %v3207 = vpop.f32.mrf.mxu0
        %v3208 = vadd.f32 %v3029, %v3207
        %v3209 = vand.u32 %v2580, 4294901760
        %v3210 = vsub.f32 %v2580, %v3209
        %3211 = vmatmul.f32.gmra.mxu0 %v3210
        %v3212 = vpop.f32.mrf.mxu0
        %v3213 = vadd.f32 %v3033, %v3212
        %v3214 = vand.u32 %v2583, 4294901760
        %v3215 = vsub.f32 %v2583, %v3214
        %3216 = vmatmul.f32.gmra.mxu0 %v3215
        %v3217 = vpop.f32.mrf.mxu0
        %v3218 = vadd.f32 %v3037, %v3217
        %v3219 = vand.u32 %v2586, 4294901760
        %v3220 = vsub.f32 %v2586, %v3219
        %3221 = vmatmul.f32.gmra.mxu0 %v3220
        %v3222 = vpop.f32.mrf.mxu0
        %v3223 = vadd.f32 %v3041, %v3222
        %v3224 = vand.u32 %v2589, 4294901760
        %v3225 = vsub.f32 %v2589, %v3224
        %3226 = vmatmul.f32.gmra.mxu0 %v3225
        %v3227 = vpop.f32.mrf.mxu0
        %v3228 = vadd.f32 %v3045, %v3227
        %v3229 = vand.u32 %v2592, 4294901760
        %v3230 = vsub.f32 %v2592, %v3229
        %3231 = vmatmul.f32.gmra.mxu0 %v3230
        %v3232 = vpop.f32.mrf.mxu0
        %v3233 = vadd.f32 %v3049, %v3232
        %v3234 = vand.u32 %v2595, 4294901760
        %v3235 = vsub.f32 %v2595, %v3234
        %3236 = vmatmul.f32.gmra.mxu0 %v3235
        %v3237 = vpop.f32.mrf.mxu0
        %v3238 = vadd.f32 %v3053, %v3237
        %v3239 = vand.u32 %v2598, 4294901760
        %v3240 = vsub.f32 %v2598, %v3239
        %3241 = vmatmul.f32.gmra.mxu0 %v3240
        %v3242 = vpop.f32.mrf.mxu0
        %v3243 = vadd.f32 %v3057, %v3242
        %v3244 = vand.u32 %v2601, 4294901760
        %v3245 = vsub.f32 %v2601, %v3244
        %3246 = vmatmul.f32.gmra.mxu0 %v3245
        %v3247 = vpop.f32.mrf.mxu0
        %v3248 = vadd.f32 %v3061, %v3247
        %v3249 = vand.u32 %v2604, 4294901760
        %v3250 = vsub.f32 %v2604, %v3249
        %3251 = vmatmul.f32.gmra.mxu0 %v3250
        %v3252 = vpop.f32.mrf.mxu0
        %v3253 = vadd.f32 %v3065, %v3252
        %v3254 = vand.u32 %v2607, 4294901760
        %v3255 = vsub.f32 %v2607, %v3254
        %3256 = vmatmul.f32.gmra.mxu0 %v3255
        %v3257 = vpop.f32.mrf.mxu0
        %v3258 = vadd.f32 %v3069, %v3257
        %v3259 = vand.u32 %v2610, 4294901760
        %v3260 = vsub.f32 %v2610, %v3259
        %3261 = vmatmul.f32.gmra.mxu0 %v3260
        %v3262 = vpop.f32.mrf.mxu0
        %v3263 = vadd.f32 %v3073, %v3262
        %v3264 = vand.u32 %v2613, 4294901760
        %v3265 = vsub.f32 %v2613, %v3264
        %3266 = vmatmul.f32.gmra.mxu0 %v3265
        %v3267 = vpop.f32.mrf.mxu0
        %v3268 = vadd.f32 %v3077, %v3267
        %v3269 = vand.u32 %v2616, 4294901760
        %v3270 = vsub.f32 %v2616, %v3269
        %3271 = vmatmul.f32.gmra.mxu0 %v3270
        %v3272 = vpop.f32.mrf.mxu0
        %v3273 = vadd.f32 %v3081, %v3272
        %v3274 = vand.u32 %v2619, 4294901760
        %v3275 = vsub.f32 %v2619, %v3274
        %3276 = vmatmul.f32.gmra.mxu0 %v3275
        %v3277 = vpop.f32.mrf.mxu0
        %v3278 = vadd.f32 %v3085, %v3277
        %3279 = vdwg.mxu0
        %3280 = vmatpush.msra.mxu0 0.0
        %3281 = vmatpush.msra.mxu0 0.0
        %3282 = vmatpush.msra.mxu0 0.0
        %3283 = vmatpush.msra.mxu0 0.0
        %3284 = vmatpush.msra.mxu0 0.0
        %3285 = vmatpush.msra.mxu0 0.0
        %3286 = vmatpush.msra.mxu0 0.0
        %3287 = vmatpush.msra.mxu0 0.0
        %v3288 = vand.u32 %v2524, 4294901760
        %3289 = vmatpush.msra.mxu0 %v3288
        %v3290 = vand.u32 %v2523, 4294901760
        %3291 = vmatpush.msra.mxu0 %v3290
        %v3292 = vand.u32 %v2522, 4294901760
        %3293 = vmatpush.msra.mxu0 %v3292
        %v3294 = vand.u32 %v2521, 4294901760
        %3295 = vmatpush.msra.mxu0 %v3294
        %v3296 = vand.u32 %v2520, 4294901760
        %3297 = vmatpush.msra.mxu0 %v3296
        %v3298 = vand.u32 %v2519, 4294901760
        %3299 = vmatpush.msra.mxu0 %v3298
        %v3300 = vand.u32 %v2518, 4294901760
        %3301 = vmatpush.msra.mxu0 %v3300
        %v3302 = vand.u32 %v2517, 4294901760
        %3303 = vmatpush.msra.mxu0 %v3302
        %v3304 = vand.u32 %v2526, 4294901760
        %v3305 = vsub.f32 %v2526, %v3304
        %v3306 = vand.u32 %v3305, 4294901760
        %3307 = vmatmul.f32.gmra.mxu0 %v3306
        %v3308 = vpop.f32.mrf.mxu0
        %v3309 = vadd.f32 %v3123, %v3308
        %v3310 = vand.u32 %v2529, 4294901760
        %v3311 = vsub.f32 %v2529, %v3310
        %v3312 = vand.u32 %v3311, 4294901760
        %3313 = vmatmul.f32.gmra.mxu0 %v3312
        %v3314 = vpop.f32.mrf.mxu0
        %v3315 = vadd.f32 %v3128, %v3314
        %v3316 = vand.u32 %v2532, 4294901760
        %v3317 = vsub.f32 %v2532, %v3316
        %v3318 = vand.u32 %v3317, 4294901760
        %3319 = vmatmul.f32.gmra.mxu0 %v3318
        %v3320 = vpop.f32.mrf.mxu0
        %v3321 = vadd.f32 %v3133, %v3320
        %v3322 = vand.u32 %v2535, 4294901760
        %v3323 = vsub.f32 %v2535, %v3322
        %v3324 = vand.u32 %v3323, 4294901760
        %3325 = vmatmul.f32.gmra.mxu0 %v3324
        %v3326 = vpop.f32.mrf.mxu0
        %v3327 = vadd.f32 %v3138, %v3326
        %v3328 = vand.u32 %v2538, 4294901760
        %v3329 = vsub.f32 %v2538, %v3328
        %v3330 = vand.u32 %v3329, 4294901760
        %3331 = vmatmul.f32.gmra.mxu0 %v3330
        %v3332 = vpop.f32.mrf.mxu0
        %v3333 = vadd.f32 %v3143, %v3332
        %v3334 = vand.u32 %v2541, 4294901760
        %v3335 = vsub.f32 %v2541, %v3334
        %v3336 = vand.u32 %v3335, 4294901760
        %3337 = vmatmul.f32.gmra.mxu0 %v3336
        %v3338 = vpop.f32.mrf.mxu0
        %v3339 = vadd.f32 %v3148, %v3338
        %v3340 = vand.u32 %v2544, 4294901760
        %v3341 = vsub.f32 %v2544, %v3340
        %v3342 = vand.u32 %v3341, 4294901760
        %3343 = vmatmul.f32.gmra.mxu0 %v3342
        %v3344 = vpop.f32.mrf.mxu0
        %v3345 = vadd.f32 %v3153, %v3344
        %v3346 = vand.u32 %v2547, 4294901760
        %v3347 = vsub.f32 %v2547, %v3346
        %v3348 = vand.u32 %v3347, 4294901760
        %3349 = vmatmul.f32.gmra.mxu0 %v3348
        %v3350 = vpop.f32.mrf.mxu0
        %v3351 = vadd.f32 %v3158, %v3350
        %v3352 = vand.u32 %v2550, 4294901760
        %v3353 = vsub.f32 %v2550, %v3352
        %v3354 = vand.u32 %v3353, 4294901760
        %3355 = vmatmul.f32.gmra.mxu0 %v3354
        %v3356 = vpop.f32.mrf.mxu0
        %v3357 = vadd.f32 %v3163, %v3356
        %v3358 = vand.u32 %v2553, 4294901760
        %v3359 = vsub.f32 %v2553, %v3358
        %v3360 = vand.u32 %v3359, 4294901760
        %3361 = vmatmul.f32.gmra.mxu0 %v3360
        %v3362 = vpop.f32.mrf.mxu0
        %v3363 = vadd.f32 %v3168, %v3362
        %v3364 = vand.u32 %v2556, 4294901760
        %v3365 = vsub.f32 %v2556, %v3364
        %v3366 = vand.u32 %v3365, 4294901760
        %3367 = vmatmul.f32.gmra.mxu0 %v3366
        %v3368 = vpop.f32.mrf.mxu0
        %v3369 = vadd.f32 %v3173, %v3368
        %v3370 = vand.u32 %v2559, 4294901760
        %v3371 = vsub.f32 %v2559, %v3370
        %v3372 = vand.u32 %v3371, 4294901760
        %3373 = vmatmul.f32.gmra.mxu0 %v3372
        %v3374 = vpop.f32.mrf.mxu0
        %v3375 = vadd.f32 %v3178, %v3374
        %v3376 = vand.u32 %v2562, 4294901760
        %v3377 = vsub.f32 %v2562, %v3376
        %v3378 = vand.u32 %v3377, 4294901760
        %3379 = vmatmul.f32.gmra.mxu0 %v3378
        %v3380 = vpop.f32.mrf.mxu0
        %v3381 = vadd.f32 %v3183, %v3380
        %v3382 = vand.u32 %v2565, 4294901760
        %v3383 = vsub.f32 %v2565, %v3382
        %v3384 = vand.u32 %v3383, 4294901760
        %3385 = vmatmul.f32.gmra.mxu0 %v3384
        %v3386 = vpop.f32.mrf.mxu0
        %v3387 = vadd.f32 %v3188, %v3386
        %v3388 = vand.u32 %v2568, 4294901760
        %v3389 = vsub.f32 %v2568, %v3388
        %v3390 = vand.u32 %v3389, 4294901760
        %3391 = vmatmul.f32.gmra.mxu0 %v3390
        %v3392 = vpop.f32.mrf.mxu0
        %v3393 = vadd.f32 %v3193, %v3392
        %v3394 = vand.u32 %v2571, 4294901760
        %v3395 = vsub.f32 %v2571, %v3394
        %v3396 = vand.u32 %v3395, 4294901760
        %3397 = vmatmul.f32.gmra.mxu0 %v3396
        %v3398 = vpop.f32.mrf.mxu0
        %v3399 = vadd.f32 %v3198, %v3398
        %v3400 = vand.u32 %v2574, 4294901760
        %v3401 = vsub.f32 %v2574, %v3400
        %v3402 = vand.u32 %v3401, 4294901760
        %3403 = vmatmul.f32.gmra.mxu0 %v3402
        %v3404 = vpop.f32.mrf.mxu0
        %v3405 = vadd.f32 %v3203, %v3404
        %v3406 = vand.u32 %v2577, 4294901760
        %v3407 = vsub.f32 %v2577, %v3406
        %v3408 = vand.u32 %v3407, 4294901760
        %3409 = vmatmul.f32.gmra.mxu0 %v3408
        %v3410 = vpop.f32.mrf.mxu0
        %v3411 = vadd.f32 %v3208, %v3410
        %v3412 = vand.u32 %v2580, 4294901760
        %v3413 = vsub.f32 %v2580, %v3412
        %v3414 = vand.u32 %v3413, 4294901760
        %3415 = vmatmul.f32.gmra.mxu0 %v3414
        %v3416 = vpop.f32.mrf.mxu0
        %v3417 = vadd.f32 %v3213, %v3416
        %v3418 = vand.u32 %v2583, 4294901760
        %v3419 = vsub.f32 %v2583, %v3418
        %v3420 = vand.u32 %v3419, 4294901760
        %3421 = vmatmul.f32.gmra.mxu0 %v3420
        %v3422 = vpop.f32.mrf.mxu0
        %v3423 = vadd.f32 %v3218, %v3422
        %v3424 = vand.u32 %v2586, 4294901760
        %v3425 = vsub.f32 %v2586, %v3424
        %v3426 = vand.u32 %v3425, 4294901760
        %3427 = vmatmul.f32.gmra.mxu0 %v3426
        %v3428 = vpop.f32.mrf.mxu0
        %v3429 = vadd.f32 %v3223, %v3428
        %v3430 = vand.u32 %v2589, 4294901760
        %v3431 = vsub.f32 %v2589, %v3430
        %v3432 = vand.u32 %v3431, 4294901760
        %3433 = vmatmul.f32.gmra.mxu0 %v3432
        %v3434 = vpop.f32.mrf.mxu0
        %v3435 = vadd.f32 %v3228, %v3434
        %v3436 = vand.u32 %v2592, 4294901760
        %v3437 = vsub.f32 %v2592, %v3436
        %v3438 = vand.u32 %v3437, 4294901760
        %3439 = vmatmul.f32.gmra.mxu0 %v3438
        %v3440 = vpop.f32.mrf.mxu0
        %v3441 = vadd.f32 %v3233, %v3440
        %v3442 = vand.u32 %v2595, 4294901760
        %v3443 = vsub.f32 %v2595, %v3442
        %v3444 = vand.u32 %v3443, 4294901760
        %3445 = vmatmul.f32.gmra.mxu0 %v3444
        %v3446 = vpop.f32.mrf.mxu0
        %v3447 = vadd.f32 %v3238, %v3446
        %v3448 = vand.u32 %v2598, 4294901760
        %v3449 = vsub.f32 %v2598, %v3448
        %v3450 = vand.u32 %v3449, 4294901760
        %3451 = vmatmul.f32.gmra.mxu0 %v3450
        %v3452 = vpop.f32.mrf.mxu0
        %v3453 = vadd.f32 %v3243, %v3452
        %v3454 = vand.u32 %v2601, 4294901760
        %v3455 = vsub.f32 %v2601, %v3454
        %v3456 = vand.u32 %v3455, 4294901760
        %3457 = vmatmul.f32.gmra.mxu0 %v3456
        %v3458 = vpop.f32.mrf.mxu0
        %v3459 = vadd.f32 %v3248, %v3458
        %v3460 = vand.u32 %v2604, 4294901760
        %v3461 = vsub.f32 %v2604, %v3460
        %v3462 = vand.u32 %v3461, 4294901760
        %3463 = vmatmul.f32.gmra.mxu0 %v3462
        %v3464 = vpop.f32.mrf.mxu0
        %v3465 = vadd.f32 %v3253, %v3464
        %v3466 = vand.u32 %v2607, 4294901760
        %v3467 = vsub.f32 %v2607, %v3466
        %v3468 = vand.u32 %v3467, 4294901760
        %3469 = vmatmul.f32.gmra.mxu0 %v3468
        %v3470 = vpop.f32.mrf.mxu0
        %v3471 = vadd.f32 %v3258, %v3470
        %v3472 = vand.u32 %v2610, 4294901760
        %v3473 = vsub.f32 %v2610, %v3472
        %v3474 = vand.u32 %v3473, 4294901760
        %3475 = vmatmul.f32.gmra.mxu0 %v3474
        %v3476 = vpop.f32.mrf.mxu0
        %v3477 = vadd.f32 %v3263, %v3476
        %v3478 = vand.u32 %v2613, 4294901760
        %v3479 = vsub.f32 %v2613, %v3478
        %v3480 = vand.u32 %v3479, 4294901760
        %3481 = vmatmul.f32.gmra.mxu0 %v3480
        %v3482 = vpop.f32.mrf.mxu0
        %v3483 = vadd.f32 %v3268, %v3482
        %v3484 = vand.u32 %v2616, 4294901760
        %v3485 = vsub.f32 %v2616, %v3484
        %v3486 = vand.u32 %v3485, 4294901760
        %3487 = vmatmul.f32.gmra.mxu0 %v3486
        %v3488 = vpop.f32.mrf.mxu0
        %v3489 = vadd.f32 %v3273, %v3488
        %v3490 = vand.u32 %v2619, 4294901760
        %v3491 = vsub.f32 %v2619, %v3490
        %v3492 = vand.u32 %v3491, 4294901760
        %3493 = vmatmul.f32.gmra.mxu0 %v3492
        %v3494 = vpop.f32.mrf.mxu0
        %v3495 = vadd.f32 %v3278, %v3494
        %3496 = vdwg.mxu0
        %3497 = vmatpush.msra.mxu0 0.0
        %3498 = vmatpush.msra.mxu0 0.0
        %3499 = vmatpush.msra.mxu0 0.0
        %3500 = vmatpush.msra.mxu0 0.0
        %3501 = vmatpush.msra.mxu0 0.0
        %3502 = vmatpush.msra.mxu0 0.0
        %3503 = vmatpush.msra.mxu0 0.0
        %3504 = vmatpush.msra.mxu0 0.0
        %v3505 = vand.u32 %v2524, 4294901760
        %v3506 = vsub.f32 %v2524, %v3505
        %v3507 = vand.u32 %v3506, 4294901760
        %3508 = vmatpush.msra.mxu0 %v3507
        %v3509 = vand.u32 %v2523, 4294901760
        %v3510 = vsub.f32 %v2523, %v3509
        %v3511 = vand.u32 %v3510, 4294901760
        %3512 = vmatpush.msra.mxu0 %v3511
        %v3513 = vand.u32 %v2522, 4294901760
        %v3514 = vsub.f32 %v2522, %v3513
        %v3515 = vand.u32 %v3514, 4294901760
        %3516 = vmatpush.msra.mxu0 %v3515
        %v3517 = vand.u32 %v2521, 4294901760
        %v3518 = vsub.f32 %v2521, %v3517
        %v3519 = vand.u32 %v3518, 4294901760
        %3520 = vmatpush.msra.mxu0 %v3519
        %v3521 = vand.u32 %v2520, 4294901760
        %v3522 = vsub.f32 %v2520, %v3521
        %v3523 = vand.u32 %v3522, 4294901760
        %3524 = vmatpush.msra.mxu0 %v3523
        %v3525 = vand.u32 %v2519, 4294901760
        %v3526 = vsub.f32 %v2519, %v3525
        %v3527 = vand.u32 %v3526, 4294901760
        %3528 = vmatpush.msra.mxu0 %v3527
        %v3529 = vand.u32 %v2518, 4294901760
        %v3530 = vsub.f32 %v2518, %v3529
        %v3531 = vand.u32 %v3530, 4294901760
        %3532 = vmatpush.msra.mxu0 %v3531
        %v3533 = vand.u32 %v2517, 4294901760
        %v3534 = vsub.f32 %v2517, %v3533
        %v3535 = vand.u32 %v3534, 4294901760
        %3536 = vmatpush.msra.mxu0 %v3535
        %v3537 = vand.u32 %v2526, 4294901760
        %3538 = vmatmul.f32.gmra.mxu0 %v3537
        %v3539 = vpop.f32.mrf.mxu0
        %v3540 = vadd.f32 %v3309, %v3539
        %v3541 = vand.u32 %v2529, 4294901760
        %3542 = vmatmul.f32.gmra.mxu0 %v3541
        %v3543 = vpop.f32.mrf.mxu0
        %v3544 = vadd.f32 %v3315, %v3543
        %v3545 = vand.u32 %v2532, 4294901760
        %3546 = vmatmul.f32.gmra.mxu0 %v3545
        %v3547 = vpop.f32.mrf.mxu0
        %v3548 = vadd.f32 %v3321, %v3547
        %v3549 = vand.u32 %v2535, 4294901760
        %3550 = vmatmul.f32.gmra.mxu0 %v3549
        %v3551 = vpop.f32.mrf.mxu0
        %v3552 = vadd.f32 %v3327, %v3551
        %v3553 = vand.u32 %v2538, 4294901760
        %3554 = vmatmul.f32.gmra.mxu0 %v3553
        %v3555 = vpop.f32.mrf.mxu0
        %v3556 = vadd.f32 %v3333, %v3555
        %v3557 = vand.u32 %v2541, 4294901760
        %3558 = vmatmul.f32.gmra.mxu0 %v3557
        %v3559 = vpop.f32.mrf.mxu0
        %v3560 = vadd.f32 %v3339, %v3559
        %v3561 = vand.u32 %v2544, 4294901760
        %3562 = vmatmul.f32.gmra.mxu0 %v3561
        %v3563 = vpop.f32.mrf.mxu0
        %v3564 = vadd.f32 %v3345, %v3563
        %v3565 = vand.u32 %v2547, 4294901760
        %3566 = vmatmul.f32.gmra.mxu0 %v3565
        %v3567 = vpop.f32.mrf.mxu0
        %v3568 = vadd.f32 %v3351, %v3567
        %v3569 = vand.u32 %v2550, 4294901760
        %3570 = vmatmul.f32.gmra.mxu0 %v3569
        %v3571 = vpop.f32.mrf.mxu0
        %v3572 = vadd.f32 %v3357, %v3571
        %v3573 = vand.u32 %v2553, 4294901760
        %3574 = vmatmul.f32.gmra.mxu0 %v3573
        %v3575 = vpop.f32.mrf.mxu0
        %v3576 = vadd.f32 %v3363, %v3575
        %v3577 = vand.u32 %v2556, 4294901760
        %3578 = vmatmul.f32.gmra.mxu0 %v3577
        %v3579 = vpop.f32.mrf.mxu0
        %v3580 = vadd.f32 %v3369, %v3579
        %v3581 = vand.u32 %v2559, 4294901760
        %3582 = vmatmul.f32.gmra.mxu0 %v3581
        %v3583 = vpop.f32.mrf.mxu0
        %v3584 = vadd.f32 %v3375, %v3583
        %v3585 = vand.u32 %v2562, 4294901760
        %3586 = vmatmul.f32.gmra.mxu0 %v3585
        %v3587 = vpop.f32.mrf.mxu0
        %v3588 = vadd.f32 %v3381, %v3587
        %v3589 = vand.u32 %v2565, 4294901760
        %3590 = vmatmul.f32.gmra.mxu0 %v3589
        %v3591 = vpop.f32.mrf.mxu0
        %v3592 = vadd.f32 %v3387, %v3591
        %v3593 = vand.u32 %v2568, 4294901760
        %3594 = vmatmul.f32.gmra.mxu0 %v3593
        %v3595 = vpop.f32.mrf.mxu0
        %v3596 = vadd.f32 %v3393, %v3595
        %v3597 = vand.u32 %v2571, 4294901760
        %3598 = vmatmul.f32.gmra.mxu0 %v3597
        %v3599 = vpop.f32.mrf.mxu0
        %v3600 = vadd.f32 %v3399, %v3599
        %v3601 = vand.u32 %v2574, 4294901760
        %3602 = vmatmul.f32.gmra.mxu0 %v3601
        %v3603 = vpop.f32.mrf.mxu0
        %v3604 = vadd.f32 %v3405, %v3603
        %v3605 = vand.u32 %v2577, 4294901760
        %3606 = vmatmul.f32.gmra.mxu0 %v3605
        %v3607 = vpop.f32.mrf.mxu0
        %v3608 = vadd.f32 %v3411, %v3607
        %v3609 = vand.u32 %v2580, 4294901760
        %3610 = vmatmul.f32.gmra.mxu0 %v3609
        %v3611 = vpop.f32.mrf.mxu0
        %v3612 = vadd.f32 %v3417, %v3611
        %v3613 = vand.u32 %v2583, 4294901760
        %3614 = vmatmul.f32.gmra.mxu0 %v3613
        %v3615 = vpop.f32.mrf.mxu0
        %v3616 = vadd.f32 %v3423, %v3615
        %v3617 = vand.u32 %v2586, 4294901760
        %3618 = vmatmul.f32.gmra.mxu0 %v3617
        %v3619 = vpop.f32.mrf.mxu0
        %v3620 = vadd.f32 %v3429, %v3619
        %v3621 = vand.u32 %v2589, 4294901760
        %3622 = vmatmul.f32.gmra.mxu0 %v3621
        %v3623 = vpop.f32.mrf.mxu0
        %v3624 = vadd.f32 %v3435, %v3623
        %v3625 = vand.u32 %v2592, 4294901760
        %3626 = vmatmul.f32.gmra.mxu0 %v3625
        %v3627 = vpop.f32.mrf.mxu0
        %v3628 = vadd.f32 %v3441, %v3627
        %v3629 = vand.u32 %v2595, 4294901760
        %3630 = vmatmul.f32.gmra.mxu0 %v3629
        %v3631 = vpop.f32.mrf.mxu0
        %v3632 = vadd.f32 %v3447, %v3631
        %v3633 = vand.u32 %v2598, 4294901760
        %3634 = vmatmul.f32.gmra.mxu0 %v3633
        %v3635 = vpop.f32.mrf.mxu0
        %v3636 = vadd.f32 %v3453, %v3635
        %v3637 = vand.u32 %v2601, 4294901760
        %3638 = vmatmul.f32.gmra.mxu0 %v3637
        %v3639 = vpop.f32.mrf.mxu0
        %v3640 = vadd.f32 %v3459, %v3639
        %v3641 = vand.u32 %v2604, 4294901760
        %3642 = vmatmul.f32.gmra.mxu0 %v3641
        %v3643 = vpop.f32.mrf.mxu0
        %v3644 = vadd.f32 %v3465, %v3643
        %v3645 = vand.u32 %v2607, 4294901760
        %3646 = vmatmul.f32.gmra.mxu0 %v3645
        %v3647 = vpop.f32.mrf.mxu0
        %v3648 = vadd.f32 %v3471, %v3647
        %v3649 = vand.u32 %v2610, 4294901760
        %3650 = vmatmul.f32.gmra.mxu0 %v3649
        %v3651 = vpop.f32.mrf.mxu0
        %v3652 = vadd.f32 %v3477, %v3651
        %v3653 = vand.u32 %v2613, 4294901760
        %3654 = vmatmul.f32.gmra.mxu0 %v3653
        %v3655 = vpop.f32.mrf.mxu0
        %v3656 = vadd.f32 %v3483, %v3655
        %v3657 = vand.u32 %v2616, 4294901760
        %3658 = vmatmul.f32.gmra.mxu0 %v3657
        %v3659 = vpop.f32.mrf.mxu0
        %v3660 = vadd.f32 %v3489, %v3659
        %v3661 = vand.u32 %v2619, 4294901760
        %3662 = vmatmul.f32.gmra.mxu0 %v3661
        %v3663 = vpop.f32.mrf.mxu0
        %v3664 = vadd.f32 %v3495, %v3663
        %3665 = vdwg.mxu0
        %3666 = vmatpush.msra.mxu0 0.0
        %3667 = vmatpush.msra.mxu0 0.0
        %3668 = vmatpush.msra.mxu0 0.0
        %3669 = vmatpush.msra.mxu0 0.0
        %3670 = vmatpush.msra.mxu0 0.0
        %3671 = vmatpush.msra.mxu0 0.0
        %3672 = vmatpush.msra.mxu0 0.0
        %3673 = vmatpush.msra.mxu0 0.0
        %v3674 = vand.u32 %v2524, 4294901760
        %3675 = vmatpush.msra.mxu0 %v3674
        %v3676 = vand.u32 %v2523, 4294901760
        %3677 = vmatpush.msra.mxu0 %v3676
        %v3678 = vand.u32 %v2522, 4294901760
        %3679 = vmatpush.msra.mxu0 %v3678
        %v3680 = vand.u32 %v2521, 4294901760
        %3681 = vmatpush.msra.mxu0 %v3680
        %v3682 = vand.u32 %v2520, 4294901760
        %3683 = vmatpush.msra.mxu0 %v3682
        %v3684 = vand.u32 %v2519, 4294901760
        %3685 = vmatpush.msra.mxu0 %v3684
        %v3686 = vand.u32 %v2518, 4294901760
        %3687 = vmatpush.msra.mxu0 %v3686
        %v3688 = vand.u32 %v2517, 4294901760
        %3689 = vmatpush.msra.mxu0 %v3688
        %v3690 = vand.u32 %v2526, 4294901760
        %3691 = vmatmul.f32.gmra.mxu0 %v3690
        %v3692 = vpop.f32.mrf.mxu0
        %v3693 = vadd.f32 %v3540, %v3692
        %v3694 = vand.u32 %v2529, 4294901760
        %3695 = vmatmul.f32.gmra.mxu0 %v3694
        %v3696 = vpop.f32.mrf.mxu0
        %v3697 = vadd.f32 %v3544, %v3696
        %v3698 = vand.u32 %v2532, 4294901760
        %3699 = vmatmul.f32.gmra.mxu0 %v3698
        %v3700 = vpop.f32.mrf.mxu0
        %v3701 = vadd.f32 %v3548, %v3700
        %v3702 = vand.u32 %v2535, 4294901760
        %3703 = vmatmul.f32.gmra.mxu0 %v3702
        %v3704 = vpop.f32.mrf.mxu0
        %v3705 = vadd.f32 %v3552, %v3704
        %v3706 = vand.u32 %v2538, 4294901760
        %3707 = vmatmul.f32.gmra.mxu0 %v3706
        %v3708 = vpop.f32.mrf.mxu0
        %v3709 = vadd.f32 %v3556, %v3708
        %v3710 = vand.u32 %v2541, 4294901760
        %3711 = vmatmul.f32.gmra.mxu0 %v3710
        %v3712 = vpop.f32.mrf.mxu0
        %v3713 = vadd.f32 %v3560, %v3712
        %v3714 = vand.u32 %v2544, 4294901760
        %3715 = vmatmul.f32.gmra.mxu0 %v3714
        %v3716 = vpop.f32.mrf.mxu0
        %v3717 = vadd.f32 %v3564, %v3716
        %v3718 = vand.u32 %v2547, 4294901760
        %3719 = vmatmul.f32.gmra.mxu0 %v3718
        %v3720 = vpop.f32.mrf.mxu0
        %v3721 = vadd.f32 %v3568, %v3720
        %v3722 = vand.u32 %v2550, 4294901760
        %3723 = vmatmul.f32.gmra.mxu0 %v3722
        %v3724 = vpop.f32.mrf.mxu0
        %v3725 = vadd.f32 %v3572, %v3724
        %v3726 = vand.u32 %v2553, 4294901760
        %3727 = vmatmul.f32.gmra.mxu0 %v3726
        %v3728 = vpop.f32.mrf.mxu0
        %v3729 = vadd.f32 %v3576, %v3728
        %v3730 = vand.u32 %v2556, 4294901760
        %3731 = vmatmul.f32.gmra.mxu0 %v3730
        %v3732 = vpop.f32.mrf.mxu0
        %v3733 = vadd.f32 %v3580, %v3732
        %v3734 = vand.u32 %v2559, 4294901760
        %3735 = vmatmul.f32.gmra.mxu0 %v3734
        %v3736 = vpop.f32.mrf.mxu0
        %v3737 = vadd.f32 %v3584, %v3736
        %v3738 = vand.u32 %v2562, 4294901760
        %3739 = vmatmul.f32.gmra.mxu0 %v3738
        %v3740 = vpop.f32.mrf.mxu0
        %v3741 = vadd.f32 %v3588, %v3740
        %v3742 = vand.u32 %v2565, 4294901760
        %3743 = vmatmul.f32.gmra.mxu0 %v3742
        %v3744 = vpop.f32.mrf.mxu0
        %v3745 = vadd.f32 %v3592, %v3744
        %v3746 = vand.u32 %v2568, 4294901760
        %3747 = vmatmul.f32.gmra.mxu0 %v3746
        %v3748 = vpop.f32.mrf.mxu0
        %v3749 = vadd.f32 %v3596, %v3748
        %v3750 = vand.u32 %v2571, 4294901760
        %3751 = vmatmul.f32.gmra.mxu0 %v3750
        %v3752 = vpop.f32.mrf.mxu0
        %v3753 = vadd.f32 %v3600, %v3752
        %v3754 = vand.u32 %v2574, 4294901760
        %3755 = vmatmul.f32.gmra.mxu0 %v3754
        %v3756 = vpop.f32.mrf.mxu0
        %v3757 = vadd.f32 %v3604, %v3756
        %v3758 = vand.u32 %v2577, 4294901760
        %3759 = vmatmul.f32.gmra.mxu0 %v3758
        %v3760 = vpop.f32.mrf.mxu0
        %v3761 = vadd.f32 %v3608, %v3760
        %v3762 = vand.u32 %v2580, 4294901760
        %3763 = vmatmul.f32.gmra.mxu0 %v3762
        %v3764 = vpop.f32.mrf.mxu0
        %v3765 = vadd.f32 %v3612, %v3764
        %v3766 = vand.u32 %v2583, 4294901760
        %3767 = vmatmul.f32.gmra.mxu0 %v3766
        %v3768 = vpop.f32.mrf.mxu0
        %v3769 = vadd.f32 %v3616, %v3768
        %v3770 = vand.u32 %v2586, 4294901760
        %3771 = vmatmul.f32.gmra.mxu0 %v3770
        %v3772 = vpop.f32.mrf.mxu0
        %v3773 = vadd.f32 %v3620, %v3772
        %v3774 = vand.u32 %v2589, 4294901760
        %3775 = vmatmul.f32.gmra.mxu0 %v3774
        %v3776 = vpop.f32.mrf.mxu0
        %v3777 = vadd.f32 %v3624, %v3776
        %v3778 = vand.u32 %v2592, 4294901760
        %3779 = vmatmul.f32.gmra.mxu0 %v3778
        %v3780 = vpop.f32.mrf.mxu0
        %v3781 = vadd.f32 %v3628, %v3780
        %v3782 = vand.u32 %v2595, 4294901760
        %3783 = vmatmul.f32.gmra.mxu0 %v3782
        %v3784 = vpop.f32.mrf.mxu0
        %v3785 = vadd.f32 %v3632, %v3784
        %v3786 = vand.u32 %v2598, 4294901760
        %3787 = vmatmul.f32.gmra.mxu0 %v3786
        %v3788 = vpop.f32.mrf.mxu0
        %v3789 = vadd.f32 %v3636, %v3788
        %v3790 = vand.u32 %v2601, 4294901760
        %3791 = vmatmul.f32.gmra.mxu0 %v3790
        %v3792 = vpop.f32.mrf.mxu0
        %v3793 = vadd.f32 %v3640, %v3792
        %v3794 = vand.u32 %v2604, 4294901760
        %3795 = vmatmul.f32.gmra.mxu0 %v3794
        %v3796 = vpop.f32.mrf.mxu0
        %v3797 = vadd.f32 %v3644, %v3796
        %v3798 = vand.u32 %v2607, 4294901760
        %3799 = vmatmul.f32.gmra.mxu0 %v3798
        %v3800 = vpop.f32.mrf.mxu0
        %v3801 = vadd.f32 %v3648, %v3800
        %v3802 = vand.u32 %v2610, 4294901760
        %3803 = vmatmul.f32.gmra.mxu0 %v3802
        %v3804 = vpop.f32.mrf.mxu0
        %v3805 = vadd.f32 %v3652, %v3804
        %v3806 = vand.u32 %v2613, 4294901760
        %3807 = vmatmul.f32.gmra.mxu0 %v3806
        %v3808 = vpop.f32.mrf.mxu0
        %v3809 = vadd.f32 %v3656, %v3808
        %v3810 = vand.u32 %v2616, 4294901760
        %3811 = vmatmul.f32.gmra.mxu0 %v3810
        %v3812 = vpop.f32.mrf.mxu0
        %v3813 = vadd.f32 %v3660, %v3812
        %v3814 = vand.u32 %v2619, 4294901760
        %3815 = vmatmul.f32.gmra.mxu0 %v3814
        %v3816 = vpop.f32.mrf.mxu0
        %v3817 = vadd.f32 %v3664, %v3816
        %3818 = vdwg.mxu0
        %v3819 = vmax.f32 %v3693, 1e-30
        %v3820 = vmax.f32 %v3697, 1e-30
        %v3821 = vmax.f32 %v3701, 1e-30
        %v3822 = vmax.f32 %v3705, 1e-30
        %v3823 = vmax.f32 %v3709, 1e-30
        %v3824 = vmax.f32 %v3713, 1e-30
        %v3825 = vmax.f32 %v3717, 1e-30
        %v3826 = vmax.f32 %v3721, 1e-30
        %v3827 = vmax.f32 %v3725, 1e-30
        %v3828 = vmax.f32 %v3729, 1e-30
        %v3829 = vmax.f32 %v3733, 1e-30
        %v3830 = vmax.f32 %v3737, 1e-30
        %v3831 = vmax.f32 %v3741, 1e-30
        %v3832 = vmax.f32 %v3745, 1e-30
        %v3833 = vmax.f32 %v3749, 1e-30
        %v3834 = vmax.f32 %v3753, 1e-30
        %v3835 = vmax.f32 %v3757, 1e-30
        %v3836 = vmax.f32 %v3761, 1e-30
        %v3837 = vmax.f32 %v3765, 1e-30
        %v3838 = vmax.f32 %v3769, 1e-30
        %v3839 = vmax.f32 %v3773, 1e-30
        %v3840 = vmax.f32 %v3777, 1e-30
        %v3841 = vmax.f32 %v3781, 1e-30
        %v3842 = vmax.f32 %v3785, 1e-30
        %v3843 = vmax.f32 %v3789, 1e-30
        %v3844 = vmax.f32 %v3793, 1e-30
        %v3845 = vmax.f32 %v3797, 1e-30
        %v3846 = vmax.f32 %v3801, 1e-30
        %v3847 = vmax.f32 %v3805, 1e-30
        %v3848 = vmax.f32 %v3809, 1e-30
        %v3849 = vmax.f32 %v3813, 1e-30
        %v3850 = vmax.f32 %v3817, 1e-30
        %v3851 = vlog2.pop %v3819
        %v3852 = vmul.f32 %v3851, 0.6931472
        %v3853 = vlog2.pop %v3820
        %v3854 = vmul.f32 %v3853, 0.6931472
        %v3855 = vlog2.pop %v3821
        %v3856 = vmul.f32 %v3855, 0.6931472
        %v3857 = vlog2.pop %v3822
        %v3858 = vmul.f32 %v3857, 0.6931472
        %v3859 = vlog2.pop %v3823
        %v3860 = vmul.f32 %v3859, 0.6931472
        %v3861 = vlog2.pop %v3824
        %v3862 = vmul.f32 %v3861, 0.6931472
        %v3863 = vlog2.pop %v3825
        %v3864 = vmul.f32 %v3863, 0.6931472
        %v3865 = vlog2.pop %v3826
        %v3866 = vmul.f32 %v3865, 0.6931472
        %v3867 = vlog2.pop %v3827
        %v3868 = vmul.f32 %v3867, 0.6931472
        %v3869 = vlog2.pop %v3828
        %v3870 = vmul.f32 %v3869, 0.6931472
        %v3871 = vlog2.pop %v3829
        %v3872 = vmul.f32 %v3871, 0.6931472
        %v3873 = vlog2.pop %v3830
        %v3874 = vmul.f32 %v3873, 0.6931472
        %v3875 = vlog2.pop %v3831
        %v3876 = vmul.f32 %v3875, 0.6931472
        %v3877 = vlog2.pop %v3832
        %v3878 = vmul.f32 %v3877, 0.6931472
        %v3879 = vlog2.pop %v3833
        %v3880 = vmul.f32 %v3879, 0.6931472
        %v3881 = vlog2.pop %v3834
        %v3882 = vmul.f32 %v3881, 0.6931472
        %v3883 = vlog2.pop %v3835
        %v3884 = vmul.f32 %v3883, 0.6931472
        %v3885 = vlog2.pop %v3836
        %v3886 = vmul.f32 %v3885, 0.6931472
        %v3887 = vlog2.pop %v3837
        %v3888 = vmul.f32 %v3887, 0.6931472
        %v3889 = vlog2.pop %v3838
        %v3890 = vmul.f32 %v3889, 0.6931472
        %v3891 = vlog2.pop %v3839
        %v3892 = vmul.f32 %v3891, 0.6931472
        %v3893 = vlog2.pop %v3840
        %v3894 = vmul.f32 %v3893, 0.6931472
        %v3895 = vlog2.pop %v3841
        %v3896 = vmul.f32 %v3895, 0.6931472
        %v3897 = vlog2.pop %v3842
        %v3898 = vmul.f32 %v3897, 0.6931472
        %v3899 = vlog2.pop %v3843
        %v3900 = vmul.f32 %v3899, 0.6931472
        %v3901 = vlog2.pop %v3844
        %v3902 = vmul.f32 %v3901, 0.6931472
        %v3903 = vlog2.pop %v3845
        %v3904 = vmul.f32 %v3903, 0.6931472
        %v3905 = vlog2.pop %v3846
        %v3906 = vmul.f32 %v3905, 0.6931472
        %v3907 = vlog2.pop %v3847
        %v3908 = vmul.f32 %v3907, 0.6931472
        %v3909 = vlog2.pop %v3848
        %v3910 = vmul.f32 %v3909, 0.6931472
        %v3911 = vlog2.pop %v3849
        %v3912 = vmul.f32 %v3911, 0.6931472
        %v3913 = vlog2.pop %v3850
        %v3914 = vmul.f32 %v3913, 0.6931472
        %v3915 = vmul.f32 %v3852, 0.0625
        %v3916 = vmul.f32 %v3854, 0.0625
        %v3917 = vmul.f32 %v3856, 0.0625
        %v3918 = vmul.f32 %v3858, 0.0625
        %v3919 = vmul.f32 %v3860, 0.0625
        %v3920 = vmul.f32 %v3862, 0.0625
        %v3921 = vmul.f32 %v3864, 0.0625
        %v3922 = vmul.f32 %v3866, 0.0625
        %v3923 = vmul.f32 %v3868, 0.0625
        %v3924 = vmul.f32 %v3870, 0.0625
        %v3925 = vmul.f32 %v3872, 0.0625
        %v3926 = vmul.f32 %v3874, 0.0625
        %v3927 = vmul.f32 %v3876, 0.0625
        %v3928 = vmul.f32 %v3878, 0.0625
        %v3929 = vmul.f32 %v3880, 0.0625
        %v3930 = vmul.f32 %v3882, 0.0625
        %v3931 = vmul.f32 %v3884, 0.0625
        %v3932 = vmul.f32 %v3886, 0.0625
        %v3933 = vmul.f32 %v3888, 0.0625
        %v3934 = vmul.f32 %v3890, 0.0625
        %v3935 = vmul.f32 %v3892, 0.0625
        %v3936 = vmul.f32 %v3894, 0.0625
        %v3937 = vmul.f32 %v3896, 0.0625
        %v3938 = vmul.f32 %v3898, 0.0625
        %v3939 = vmul.f32 %v3900, 0.0625
        %v3940 = vmul.f32 %v3902, 0.0625
        %v3941 = vmul.f32 %v3904, 0.0625
        %v3942 = vmul.f32 %v3906, 0.0625
        %v3943 = vmul.f32 %v3908, 0.0625
        %v3944 = vmul.f32 %v3910, 0.0625
        %v3945 = vmul.f32 %v3912, 0.0625
        %v3946 = vmul.f32 %v3914, 0.0625
        %v3947 = vmul.f32 %v2203, %v709
        %v3948 = vmul.f32 %v2204, %v710
        %v3949 = vmul.f32 %v2205, %v711
        %v3950 = vmul.f32 %v2206, %v712
        %v3951 = vmul.f32 %v2207, %v713
        %v3952 = vmul.f32 %v2208, %v714
        %v3953 = vmul.f32 %v2209, %v715
        %v3954 = vmul.f32 %v2210, %v716
        %v3955 = vmul.f32 %v2211, %v717
        %v3956 = vmul.f32 %v2212, %v718
        %v3957 = vmul.f32 %v2213, %v719
        %v3958 = vmul.f32 %v2214, %v720
        %v3959 = vmul.f32 %v2215, %v721
        %v3960 = vmul.f32 %v2216, %v722
        %v3961 = vmul.f32 %v2217, %v723
        %v3962 = vmul.f32 %v2218, %v724
        %v3963 = vmul.f32 %v2219, %v725
        %v3964 = vmul.f32 %v2220, %v726
        %v3965 = vmul.f32 %v2221, %v727
        %v3966 = vmul.f32 %v2222, %v728
        %v3967 = vmul.f32 %v2223, %v729
        %v3968 = vmul.f32 %v2224, %v730
        %v3969 = vmul.f32 %v2225, %v731
        %v3970 = vmul.f32 %v2226, %v732
        %v3971 = vmul.f32 %v2227, %v733
        %v3972 = vmul.f32 %v2228, %v734
        %v3973 = vmul.f32 %v2229, %v735
        %v3974 = vmul.f32 %v2230, %v736
        %v3975 = vmul.f32 %v2231, %v737
        %v3976 = vmul.f32 %v2232, %v738
        %v3977 = vmul.f32 %v2233, %v739
        %v3978 = vmul.f32 %v2234, %v740
        %v3979 = vsub.f32 %v3915, %v3947
        %v3980 = vsub.f32 %v3916, %v3948
        %v3981 = vsub.f32 %v3917, %v3949
        %v3982 = vsub.f32 %v3918, %v3950
        %v3983 = vsub.f32 %v3919, %v3951
        %v3984 = vsub.f32 %v3920, %v3952
        %v3985 = vsub.f32 %v3921, %v3953
        %v3986 = vsub.f32 %v3922, %v3954
        %v3987 = vsub.f32 %v3923, %v3955
        %v3988 = vsub.f32 %v3924, %v3956
        %v3989 = vsub.f32 %v3925, %v3957
        %v3990 = vsub.f32 %v3926, %v3958
        %v3991 = vsub.f32 %v3927, %v3959
        %v3992 = vsub.f32 %v3928, %v3960
        %v3993 = vsub.f32 %v3929, %v3961
        %v3994 = vsub.f32 %v3930, %v3962
        %v3995 = vsub.f32 %v3931, %v3963
        %v3996 = vsub.f32 %v3932, %v3964
        %v3997 = vsub.f32 %v3933, %v3965
        %v3998 = vsub.f32 %v3934, %v3966
        %v3999 = vsub.f32 %v3935, %v3967
        %v4000 = vsub.f32 %v3936, %v3968
        %v4001 = vsub.f32 %v3937, %v3969
        %v4002 = vsub.f32 %v3938, %v3970
        %v4003 = vsub.f32 %v3939, %v3971
        %v4004 = vsub.f32 %v3940, %v3972
        %v4005 = vsub.f32 %v3941, %v3973
        %v4006 = vsub.f32 %v3942, %v3974
        %v4007 = vsub.f32 %v3943, %v3975
        %v4008 = vsub.f32 %v3944, %v3976
        %v4009 = vsub.f32 %v3945, %v3977
        %v4010 = vsub.f32 %v3946, %v3978
        %vm4011 = vcmp.gt.f32.partialorder %v805, 0.0
        %vm4012 = vcmp.gt.f32.partialorder %v806, 0.0
        %vm4013 = vcmp.gt.f32.partialorder %v807, 0.0
        %vm4014 = vcmp.gt.f32.partialorder %v808, 0.0
        %vm4015 = vcmp.gt.f32.partialorder %v809, 0.0
        %vm4016 = vcmp.gt.f32.partialorder %v810, 0.0
        %vm4017 = vcmp.gt.f32.partialorder %v811, 0.0
        %vm4018 = vcmp.gt.f32.partialorder %v812, 0.0
        %vm4019 = vcmp.gt.f32.partialorder %v813, 0.0
        %vm4020 = vcmp.gt.f32.partialorder %v814, 0.0
        %vm4021 = vcmp.gt.f32.partialorder %v815, 0.0
        %vm4022 = vcmp.gt.f32.partialorder %v816, 0.0
        %vm4023 = vcmp.gt.f32.partialorder %v817, 0.0
        %vm4024 = vcmp.gt.f32.partialorder %v818, 0.0
        %vm4025 = vcmp.gt.f32.partialorder %v819, 0.0
        %vm4026 = vcmp.gt.f32.partialorder %v820, 0.0
        %vm4027 = vcmp.gt.f32.partialorder %v821, 0.0
        %vm4028 = vcmp.gt.f32.partialorder %v822, 0.0
        %vm4029 = vcmp.gt.f32.partialorder %v823, 0.0
        %vm4030 = vcmp.gt.f32.partialorder %v824, 0.0
        %vm4031 = vcmp.gt.f32.partialorder %v825, 0.0
        %vm4032 = vcmp.gt.f32.partialorder %v826, 0.0
        %vm4033 = vcmp.gt.f32.partialorder %v827, 0.0
        %vm4034 = vcmp.gt.f32.partialorder %v828, 0.0
        %vm4035 = vcmp.gt.f32.partialorder %v829, 0.0
        %vm4036 = vcmp.gt.f32.partialorder %v830, 0.0
        %vm4037 = vcmp.gt.f32.partialorder %v831, 0.0
        %vm4038 = vcmp.gt.f32.partialorder %v832, 0.0
        %vm4039 = vcmp.gt.f32.partialorder %v833, 0.0
        %vm4040 = vcmp.gt.f32.partialorder %v834, 0.0
        %vm4041 = vcmp.gt.f32.partialorder %v835, 0.0
        %vm4042 = vcmp.gt.f32.partialorder %v836, 0.0
        %v4043 = vmul.f32 %v805, %v2238
        %v4044 = vmul.f32 %v806, %v2241
        %v4045 = vmul.f32 %v807, %v2244
        %v4046 = vmul.f32 %v808, %v2247
        %v4047 = vmul.f32 %v809, %v2250
        %v4048 = vmul.f32 %v810, %v2253
        %v4049 = vmul.f32 %v811, %v2256
        %v4050 = vmul.f32 %v812, %v2259
        %v4051 = vmul.f32 %v813, %v2262
        %v4052 = vmul.f32 %v814, %v2265
        %v4053 = vmul.f32 %v815, %v2268
        %v4054 = vmul.f32 %v816, %v2271
        %v4055 = vmul.f32 %v817, %v2274
        %v4056 = vmul.f32 %v818, %v2277
        %v4057 = vmul.f32 %v819, %v2280
        %v4058 = vmul.f32 %v820, %v2283
        %v4059 = vmul.f32 %v821, %v2286
        %v4060 = vmul.f32 %v822, %v2289
        %v4061 = vmul.f32 %v823, %v2292
        %v4062 = vmul.f32 %v824, %v2295
        %v4063 = vmul.f32 %v825, %v2298
        %v4064 = vmul.f32 %v826, %v2301
        %v4065 = vmul.f32 %v827, %v2304
        %v4066 = vmul.f32 %v828, %v2307
        %v4067 = vmul.f32 %v829, %v2310
        %v4068 = vmul.f32 %v830, %v2313
        %v4069 = vmul.f32 %v831, %v2316
        %v4070 = vmul.f32 %v832, %v2319
        %v4071 = vmul.f32 %v833, %v2322
        %v4072 = vmul.f32 %v834, %v2325
        %v4073 = vmul.f32 %v835, %v2328
        %v4074 = vmul.f32 %v836, %v2331
        %v4075 = vsel %vm4011, %v4043, 0.0
        %v4076 = vsel %vm4012, %v4044, 0.0
        %v4077 = vsel %vm4013, %v4045, 0.0
        %v4078 = vsel %vm4014, %v4046, 0.0
        %v4079 = vsel %vm4015, %v4047, 0.0
        %v4080 = vsel %vm4016, %v4048, 0.0
        %v4081 = vsel %vm4017, %v4049, 0.0
        %v4082 = vsel %vm4018, %v4050, 0.0
        %v4083 = vsel %vm4019, %v4051, 0.0
        %v4084 = vsel %vm4020, %v4052, 0.0
        %v4085 = vsel %vm4021, %v4053, 0.0
        %v4086 = vsel %vm4022, %v4054, 0.0
        %v4087 = vsel %vm4023, %v4055, 0.0
        %v4088 = vsel %vm4024, %v4056, 0.0
        %v4089 = vsel %vm4025, %v4057, 0.0
        %v4090 = vsel %vm4026, %v4058, 0.0
        %v4091 = vsel %vm4027, %v4059, 0.0
        %v4092 = vsel %vm4028, %v4060, 0.0
        %v4093 = vsel %vm4029, %v4061, 0.0
        %v4094 = vsel %vm4030, %v4062, 0.0
        %v4095 = vsel %vm4031, %v4063, 0.0
        %v4096 = vsel %vm4032, %v4064, 0.0
        %v4097 = vsel %vm4033, %v4065, 0.0
        %v4098 = vsel %vm4034, %v4066, 0.0
        %v4099 = vsel %vm4035, %v4067, 0.0
        %v4100 = vsel %vm4036, %v4068, 0.0
        %v4101 = vsel %vm4037, %v4069, 0.0
        %v4102 = vsel %vm4038, %v4070, 0.0
        %v4103 = vsel %vm4039, %v4071, 0.0
        %v4104 = vsel %vm4040, %v4072, 0.0
        %v4105 = vsel %vm4041, %v4073, 0.0
        %v4106 = vsel %vm4042, %v4074, 0.0
        %vm4107 = vcmask 7168
        %v4108 = vsel %vm4107, %v4075, 0.0
        %v4109 = vsel %vm4107, %v4076, 0.0
        %v4110 = vadd.f32 %v4108, %v4109
        %v4111 = vsel %vm4107, %v4077, 0.0
        %v4112 = vadd.f32 %v4110, %v4111
        %v4113 = vsel %vm4107, %v4078, 0.0
        %v4114 = vadd.f32 %v4112, %v4113
        %v4115 = vsel %vm4107, %v4079, 0.0
        %v4116 = vadd.f32 %v4114, %v4115
        %v4117 = vsel %vm4107, %v4080, 0.0
        %v4118 = vadd.f32 %v4116, %v4117
        %v4119 = vsel %vm4107, %v4081, 0.0
        %v4120 = vadd.f32 %v4118, %v4119
        %v4121 = vsel %vm4107, %v4082, 0.0
        %v4122 = vadd.f32 %v4120, %v4121
        %v4123 = vsel %vm4107, %v4083, 0.0
        %v4124 = vadd.f32 %v4122, %v4123
        %v4125 = vsel %vm4107, %v4084, 0.0
        %v4126 = vadd.f32 %v4124, %v4125
        %v4127 = vsel %vm4107, %v4085, 0.0
        %v4128 = vadd.f32 %v4126, %v4127
        %v4129 = vsel %vm4107, %v4086, 0.0
        %v4130 = vadd.f32 %v4128, %v4129
        %v4131 = vsel %vm4107, %v4087, 0.0
        %v4132 = vadd.f32 %v4130, %v4131
        %v4133 = vsel %vm4107, %v4088, 0.0
        %v4134 = vadd.f32 %v4132, %v4133
        %v4135 = vsel %vm4107, %v4089, 0.0
        %v4136 = vadd.f32 %v4134, %v4135
        %v4137 = vsel %vm4107, %v4090, 0.0
        %v4138 = vadd.f32 %v4136, %v4137
        %v4139 = vsel %vm4107, %v4091, 0.0
        %v4140 = vadd.f32 %v4138, %v4139
        %v4141 = vsel %vm4107, %v4092, 0.0
        %v4142 = vadd.f32 %v4140, %v4141
        %v4143 = vsel %vm4107, %v4093, 0.0
        %v4144 = vadd.f32 %v4142, %v4143
        %v4145 = vsel %vm4107, %v4094, 0.0
        %v4146 = vadd.f32 %v4144, %v4145
        %v4147 = vsel %vm4107, %v4095, 0.0
        %v4148 = vadd.f32 %v4146, %v4147
        %v4149 = vsel %vm4107, %v4096, 0.0
        %v4150 = vadd.f32 %v4148, %v4149
        %v4151 = vsel %vm4107, %v4097, 0.0
        %v4152 = vadd.f32 %v4150, %v4151
        %v4153 = vsel %vm4107, %v4098, 0.0
        %v4154 = vadd.f32 %v4152, %v4153
        %v4155 = vsel %vm4107, %v4099, 0.0
        %v4156 = vadd.f32 %v4154, %v4155
        %v4157 = vsel %vm4107, %v4100, 0.0
        %v4158 = vadd.f32 %v4156, %v4157
        %v4159 = vsel %vm4107, %v4101, 0.0
        %v4160 = vadd.f32 %v4158, %v4159
        %v4161 = vsel %vm4107, %v4102, 0.0
        %v4162 = vadd.f32 %v4160, %v4161
        %v4163 = vsel %vm4107, %v4103, 0.0
        %v4164 = vadd.f32 %v4162, %v4163
        %v4165 = vsel %vm4107, %v4104, 0.0
        %v4166 = vadd.f32 %v4164, %v4165
        %v4167 = vsel %vm4107, %v4105, 0.0
        %v4168 = vadd.f32 %v4166, %v4167
        %v4169 = vsel %vm4107, %v4106, 0.0
        %v4170 = vadd.f32 %v4168, %v4169
        %4171 = vadd.xlane.f32.xlu0 %v4170
        %v4172 = vpop.xlane.xlu0 %4171
        %v4173 = vrot.slane %v4172, 4
        %v4174 = vadd.f32 %v4172, %v4173
        %v4175 = vrot.slane %v4174, 2
        %v4176 = vadd.f32 %v4174, %v4175
        %v4177 = vrot.slane %v4176, 1
        %v4178 = vadd.f32 %v4176, %v4177
        %s4179 = vtos %v4178
        %4181 = vset.pattern.permute.xlu0 0
        %4182 = vperm.xlu0 %4181, %v805
        %v4183 = vpop.permute.xlu0 %4182
        %4186 = vset.pattern.permute.xlu0 0
        %4187 = vperm.xlu0 %4186, %v806
        %v4188 = vpop.permute.xlu0 %4187
        %4191 = vset.pattern.permute.xlu0 0
        %4192 = vperm.xlu0 %4191, %v807
        %v4193 = vpop.permute.xlu0 %4192
        %4196 = vset.pattern.permute.xlu0 0
        %4197 = vperm.xlu0 %4196, %v808
        %v4198 = vpop.permute.xlu0 %4197
        %4201 = vset.pattern.permute.xlu0 0
        %4202 = vperm.xlu0 %4201, %v809
        %v4203 = vpop.permute.xlu0 %4202
        %4206 = vset.pattern.permute.xlu0 0
        %4207 = vperm.xlu0 %4206, %v810
        %v4208 = vpop.permute.xlu0 %4207
        %4211 = vset.pattern.permute.xlu0 0
        %4212 = vperm.xlu0 %4211, %v811
        %v4213 = vpop.permute.xlu0 %4212
        %4216 = vset.pattern.permute.xlu0 0
        %4217 = vperm.xlu0 %4216, %v812
        %v4218 = vpop.permute.xlu0 %4217
        %4221 = vset.pattern.permute.xlu0 0
        %4222 = vperm.xlu0 %4221, %v813
        %v4223 = vpop.permute.xlu0 %4222
        %4226 = vset.pattern.permute.xlu0 0
        %4227 = vperm.xlu0 %4226, %v814
        %v4228 = vpop.permute.xlu0 %4227
        %4231 = vset.pattern.permute.xlu0 0
        %4232 = vperm.xlu0 %4231, %v815
        %v4233 = vpop.permute.xlu0 %4232
        %4236 = vset.pattern.permute.xlu0 0
        %4237 = vperm.xlu0 %4236, %v816
        %v4238 = vpop.permute.xlu0 %4237
        %4241 = vset.pattern.permute.xlu0 0
        %4242 = vperm.xlu0 %4241, %v817
        %v4243 = vpop.permute.xlu0 %4242
        %4246 = vset.pattern.permute.xlu0 0
        %4247 = vperm.xlu0 %4246, %v818
        %v4248 = vpop.permute.xlu0 %4247
        %4251 = vset.pattern.permute.xlu0 0
        %4252 = vperm.xlu0 %4251, %v819
        %v4253 = vpop.permute.xlu0 %4252
        %4256 = vset.pattern.permute.xlu0 0
        %4257 = vperm.xlu0 %4256, %v820
        %v4258 = vpop.permute.xlu0 %4257
        %4261 = vset.pattern.permute.xlu0 0
        %4262 = vperm.xlu0 %4261, %v821
        %v4263 = vpop.permute.xlu0 %4262
        %4266 = vset.pattern.permute.xlu0 0
        %4267 = vperm.xlu0 %4266, %v822
        %v4268 = vpop.permute.xlu0 %4267
        %4271 = vset.pattern.permute.xlu0 0
        %4272 = vperm.xlu0 %4271, %v823
        %v4273 = vpop.permute.xlu0 %4272
        %4276 = vset.pattern.permute.xlu0 0
        %4277 = vperm.xlu0 %4276, %v824
        %v4278 = vpop.permute.xlu0 %4277
        %4281 = vset.pattern.permute.xlu0 0
        %4282 = vperm.xlu0 %4281, %v825
        %v4283 = vpop.permute.xlu0 %4282
        %4286 = vset.pattern.permute.xlu0 0
        %4287 = vperm.xlu0 %4286, %v826
        %v4288 = vpop.permute.xlu0 %4287
        %4291 = vset.pattern.permute.xlu0 0
        %4292 = vperm.xlu0 %4291, %v827
        %v4293 = vpop.permute.xlu0 %4292
        %4296 = vset.pattern.permute.xlu0 0
        %4297 = vperm.xlu0 %4296, %v828
        %v4298 = vpop.permute.xlu0 %4297
        %4301 = vset.pattern.permute.xlu0 0
        %4302 = vperm.xlu0 %4301, %v829
        %v4303 = vpop.permute.xlu0 %4302
        %4306 = vset.pattern.permute.xlu0 0
        %4307 = vperm.xlu0 %4306, %v830
        %v4308 = vpop.permute.xlu0 %4307
        %4311 = vset.pattern.permute.xlu0 0
        %4312 = vperm.xlu0 %4311, %v831
        %v4313 = vpop.permute.xlu0 %4312
        %4316 = vset.pattern.permute.xlu0 0
        %4317 = vperm.xlu0 %4316, %v832
        %v4318 = vpop.permute.xlu0 %4317
        %4321 = vset.pattern.permute.xlu0 0
        %4322 = vperm.xlu0 %4321, %v833
        %v4323 = vpop.permute.xlu0 %4322
        %4326 = vset.pattern.permute.xlu0 0
        %4327 = vperm.xlu0 %4326, %v834
        %v4328 = vpop.permute.xlu0 %4327
        %4331 = vset.pattern.permute.xlu0 0
        %4332 = vperm.xlu0 %4331, %v835
        %v4333 = vpop.permute.xlu0 %4332
        %4336 = vset.pattern.permute.xlu0 0
        %4337 = vperm.xlu0 %4336, %v836
        %v4338 = vpop.permute.xlu0 %4337
        %v4340 = vmul.f32 %v4183, %v3979
        %v4341 = vmul.f32 %v4188, %v3980
        %v4342 = vmul.f32 %v4193, %v3981
        %v4343 = vmul.f32 %v4198, %v3982
        %v4344 = vmul.f32 %v4203, %v3983
        %v4345 = vmul.f32 %v4208, %v3984
        %v4346 = vmul.f32 %v4213, %v3985
        %v4347 = vmul.f32 %v4218, %v3986
        %v4348 = vmul.f32 %v4223, %v3987
        %v4349 = vmul.f32 %v4228, %v3988
        %v4350 = vmul.f32 %v4233, %v3989
        %v4351 = vmul.f32 %v4238, %v3990
        %v4352 = vmul.f32 %v4243, %v3991
        %v4353 = vmul.f32 %v4248, %v3992
        %v4354 = vmul.f32 %v4253, %v3993
        %v4355 = vmul.f32 %v4258, %v3994
        %v4356 = vmul.f32 %v4263, %v3995
        %v4357 = vmul.f32 %v4268, %v3996
        %v4358 = vmul.f32 %v4273, %v3997
        %v4359 = vmul.f32 %v4278, %v3998
        %v4360 = vmul.f32 %v4283, %v3999
        %v4361 = vmul.f32 %v4288, %v4000
        %v4362 = vmul.f32 %v4293, %v4001
        %v4363 = vmul.f32 %v4298, %v4002
        %v4364 = vmul.f32 %v4303, %v4003
        %v4365 = vmul.f32 %v4308, %v4004
        %v4366 = vmul.f32 %v4313, %v4005
        %v4367 = vmul.f32 %v4318, %v4006
        %v4368 = vmul.f32 %v4323, %v4007
        %v4369 = vmul.f32 %v4328, %v4008
        %v4370 = vmul.f32 %v4333, %v4009
        %v4371 = vmul.f32 %v4338, %v4010
        %v4372 = vsel %vm4011, 1, 0
        %v4373 = vsel %vm4012, 1, 0
        %v4374 = vsel %vm4013, 1, 0
        %v4375 = vsel %vm4014, 1, 0
        %v4376 = vsel %vm4015, 1, 0
        %v4377 = vsel %vm4016, 1, 0
        %v4378 = vsel %vm4017, 1, 0
        %v4379 = vsel %vm4018, 1, 0
        %v4380 = vsel %vm4019, 1, 0
        %v4381 = vsel %vm4020, 1, 0
        %v4382 = vsel %vm4021, 1, 0
        %v4383 = vsel %vm4022, 1, 0
        %v4384 = vsel %vm4023, 1, 0
        %v4385 = vsel %vm4024, 1, 0
        %v4386 = vsel %vm4025, 1, 0
        %v4387 = vsel %vm4026, 1, 0
        %v4388 = vsel %vm4027, 1, 0
        %v4389 = vsel %vm4028, 1, 0
        %v4390 = vsel %vm4029, 1, 0
        %v4391 = vsel %vm4030, 1, 0
        %v4392 = vsel %vm4031, 1, 0
        %v4393 = vsel %vm4032, 1, 0
        %v4394 = vsel %vm4033, 1, 0
        %v4395 = vsel %vm4034, 1, 0
        %v4396 = vsel %vm4035, 1, 0
        %v4397 = vsel %vm4036, 1, 0
        %v4398 = vsel %vm4037, 1, 0
        %v4399 = vsel %vm4038, 1, 0
        %v4400 = vsel %vm4039, 1, 0
        %v4401 = vsel %vm4040, 1, 0
        %v4402 = vsel %vm4041, 1, 0
        %v4403 = vsel %vm4042, 1, 0
        %4404 = vset.pattern.permute.xlu0 0
        %4405 = vperm.xlu0 %4404, %v4372
        %v4406 = vpop.permute.xlu0 %4405
        %4407 = vset.pattern.permute.xlu0 0
        %4408 = vperm.xlu0 %4407, %v4373
        %v4409 = vpop.permute.xlu0 %4408
        %4410 = vset.pattern.permute.xlu0 0
        %4411 = vperm.xlu0 %4410, %v4374
        %v4412 = vpop.permute.xlu0 %4411
        %4413 = vset.pattern.permute.xlu0 0
        %4414 = vperm.xlu0 %4413, %v4375
        %v4415 = vpop.permute.xlu0 %4414
        %4416 = vset.pattern.permute.xlu0 0
        %4417 = vperm.xlu0 %4416, %v4376
        %v4418 = vpop.permute.xlu0 %4417
        %4419 = vset.pattern.permute.xlu0 0
        %4420 = vperm.xlu0 %4419, %v4377
        %v4421 = vpop.permute.xlu0 %4420
        %4422 = vset.pattern.permute.xlu0 0
        %4423 = vperm.xlu0 %4422, %v4378
        %v4424 = vpop.permute.xlu0 %4423
        %4425 = vset.pattern.permute.xlu0 0
        %4426 = vperm.xlu0 %4425, %v4379
        %v4427 = vpop.permute.xlu0 %4426
        %4428 = vset.pattern.permute.xlu0 0
        %4429 = vperm.xlu0 %4428, %v4380
        %v4430 = vpop.permute.xlu0 %4429
        %4431 = vset.pattern.permute.xlu0 0
        %4432 = vperm.xlu0 %4431, %v4381
        %v4433 = vpop.permute.xlu0 %4432
        %4434 = vset.pattern.permute.xlu0 0
        %4435 = vperm.xlu0 %4434, %v4382
        %v4436 = vpop.permute.xlu0 %4435
        %4437 = vset.pattern.permute.xlu0 0
        %4438 = vperm.xlu0 %4437, %v4383
        %v4439 = vpop.permute.xlu0 %4438
        %4440 = vset.pattern.permute.xlu0 0
        %4441 = vperm.xlu0 %4440, %v4384
        %v4442 = vpop.permute.xlu0 %4441
        %4443 = vset.pattern.permute.xlu0 0
        %4444 = vperm.xlu0 %4443, %v4385
        %v4445 = vpop.permute.xlu0 %4444
        %4446 = vset.pattern.permute.xlu0 0
        %4447 = vperm.xlu0 %4446, %v4386
        %v4448 = vpop.permute.xlu0 %4447
        %4449 = vset.pattern.permute.xlu0 0
        %4450 = vperm.xlu0 %4449, %v4387
        %v4451 = vpop.permute.xlu0 %4450
        %4452 = vset.pattern.permute.xlu0 0
        %4453 = vperm.xlu0 %4452, %v4388
        %v4454 = vpop.permute.xlu0 %4453
        %4455 = vset.pattern.permute.xlu0 0
        %4456 = vperm.xlu0 %4455, %v4389
        %v4457 = vpop.permute.xlu0 %4456
        %4458 = vset.pattern.permute.xlu0 0
        %4459 = vperm.xlu0 %4458, %v4390
        %v4460 = vpop.permute.xlu0 %4459
        %4461 = vset.pattern.permute.xlu0 0
        %4462 = vperm.xlu0 %4461, %v4391
        %v4463 = vpop.permute.xlu0 %4462
        %4464 = vset.pattern.permute.xlu0 0
        %4465 = vperm.xlu0 %4464, %v4392
        %v4466 = vpop.permute.xlu0 %4465
        %4467 = vset.pattern.permute.xlu0 0
        %4468 = vperm.xlu0 %4467, %v4393
        %v4469 = vpop.permute.xlu0 %4468
        %4470 = vset.pattern.permute.xlu0 0
        %4471 = vperm.xlu0 %4470, %v4394
        %v4472 = vpop.permute.xlu0 %4471
        %4473 = vset.pattern.permute.xlu0 0
        %4474 = vperm.xlu0 %4473, %v4395
        %v4475 = vpop.permute.xlu0 %4474
        %4476 = vset.pattern.permute.xlu0 0
        %4477 = vperm.xlu0 %4476, %v4396
        %v4478 = vpop.permute.xlu0 %4477
        %4479 = vset.pattern.permute.xlu0 0
        %4480 = vperm.xlu0 %4479, %v4397
        %v4481 = vpop.permute.xlu0 %4480
        %4482 = vset.pattern.permute.xlu0 0
        %4483 = vperm.xlu0 %4482, %v4398
        %v4484 = vpop.permute.xlu0 %4483
        %4485 = vset.pattern.permute.xlu0 0
        %4486 = vperm.xlu0 %4485, %v4399
        %v4487 = vpop.permute.xlu0 %4486
        %4488 = vset.pattern.permute.xlu0 0
        %4489 = vperm.xlu0 %4488, %v4400
        %v4490 = vpop.permute.xlu0 %4489
        %4491 = vset.pattern.permute.xlu0 0
        %4492 = vperm.xlu0 %4491, %v4401
        %v4493 = vpop.permute.xlu0 %4492
        %4494 = vset.pattern.permute.xlu0 0
        %4495 = vperm.xlu0 %4494, %v4402
        %v4496 = vpop.permute.xlu0 %4495
        %4497 = vset.pattern.permute.xlu0 0
        %4498 = vperm.xlu0 %4497, %v4403
        %v4499 = vpop.permute.xlu0 %4498
        %vm4500 = vcmp.eq.s32.totalorder %v4406, 1
        %vm4501 = vcmp.eq.s32.totalorder %v4409, 1
        %vm4502 = vcmp.eq.s32.totalorder %v4412, 1
        %vm4503 = vcmp.eq.s32.totalorder %v4415, 1
        %vm4504 = vcmp.eq.s32.totalorder %v4418, 1
        %vm4505 = vcmp.eq.s32.totalorder %v4421, 1
        %vm4506 = vcmp.eq.s32.totalorder %v4424, 1
        %vm4507 = vcmp.eq.s32.totalorder %v4427, 1
        %vm4508 = vcmp.eq.s32.totalorder %v4430, 1
        %vm4509 = vcmp.eq.s32.totalorder %v4433, 1
        %vm4510 = vcmp.eq.s32.totalorder %v4436, 1
        %vm4511 = vcmp.eq.s32.totalorder %v4439, 1
        %vm4512 = vcmp.eq.s32.totalorder %v4442, 1
        %vm4513 = vcmp.eq.s32.totalorder %v4445, 1
        %vm4514 = vcmp.eq.s32.totalorder %v4448, 1
        %vm4515 = vcmp.eq.s32.totalorder %v4451, 1
        %vm4516 = vcmp.eq.s32.totalorder %v4454, 1
        %vm4517 = vcmp.eq.s32.totalorder %v4457, 1
        %vm4518 = vcmp.eq.s32.totalorder %v4460, 1
        %vm4519 = vcmp.eq.s32.totalorder %v4463, 1
        %vm4520 = vcmp.eq.s32.totalorder %v4466, 1
        %vm4521 = vcmp.eq.s32.totalorder %v4469, 1
        %vm4522 = vcmp.eq.s32.totalorder %v4472, 1
        %vm4523 = vcmp.eq.s32.totalorder %v4475, 1
        %vm4524 = vcmp.eq.s32.totalorder %v4478, 1
        %vm4525 = vcmp.eq.s32.totalorder %v4481, 1
        %vm4526 = vcmp.eq.s32.totalorder %v4484, 1
        %vm4527 = vcmp.eq.s32.totalorder %v4487, 1
        %vm4528 = vcmp.eq.s32.totalorder %v4490, 1
        %vm4529 = vcmp.eq.s32.totalorder %v4493, 1
        %vm4530 = vcmp.eq.s32.totalorder %v4496, 1
        %vm4531 = vcmp.eq.s32.totalorder %v4499, 1
        %v4532 = vsel %vm4500, %v4340, 0.0
        %v4533 = vsel %vm4501, %v4341, 0.0
        %v4534 = vsel %vm4502, %v4342, 0.0
        %v4535 = vsel %vm4503, %v4343, 0.0
        %v4536 = vsel %vm4504, %v4344, 0.0
        %v4537 = vsel %vm4505, %v4345, 0.0
        %v4538 = vsel %vm4506, %v4346, 0.0
        %v4539 = vsel %vm4507, %v4347, 0.0
        %v4540 = vsel %vm4508, %v4348, 0.0
        %v4541 = vsel %vm4509, %v4349, 0.0
        %v4542 = vsel %vm4510, %v4350, 0.0
        %v4543 = vsel %vm4511, %v4351, 0.0
        %v4544 = vsel %vm4512, %v4352, 0.0
        %v4545 = vsel %vm4513, %v4353, 0.0
        %v4546 = vsel %vm4514, %v4354, 0.0
        %v4547 = vsel %vm4515, %v4355, 0.0
        %v4548 = vsel %vm4516, %v4356, 0.0
        %v4549 = vsel %vm4517, %v4357, 0.0
        %v4550 = vsel %vm4518, %v4358, 0.0
        %v4551 = vsel %vm4519, %v4359, 0.0
        %v4552 = vsel %vm4520, %v4360, 0.0
        %v4553 = vsel %vm4521, %v4361, 0.0
        %v4554 = vsel %vm4522, %v4362, 0.0
        %v4555 = vsel %vm4523, %v4363, 0.0
        %v4556 = vsel %vm4524, %v4364, 0.0
        %v4557 = vsel %vm4525, %v4365, 0.0
        %v4558 = vsel %vm4526, %v4366, 0.0
        %v4559 = vsel %vm4527, %v4367, 0.0
        %v4560 = vsel %vm4528, %v4368, 0.0
        %v4561 = vsel %vm4529, %v4369, 0.0
        %v4562 = vsel %vm4530, %v4370, 0.0
        %v4563 = vsel %vm4531, %v4371, 0.0
        %v4564 = vsel %vm2235, %v4532, 0.0
        %v4565 = vsel %vm2235, %v4533, 0.0
        %v4566 = vadd.f32 %v4564, %v4565
        %v4567 = vsel %vm2235, %v4534, 0.0
        %v4568 = vadd.f32 %v4566, %v4567
        %v4569 = vsel %vm2235, %v4535, 0.0
        %v4570 = vadd.f32 %v4568, %v4569
        %v4571 = vsel %vm2235, %v4536, 0.0
        %v4572 = vadd.f32 %v4570, %v4571
        %v4573 = vsel %vm2235, %v4537, 0.0
        %v4574 = vadd.f32 %v4572, %v4573
        %v4575 = vsel %vm2235, %v4538, 0.0
        %v4576 = vadd.f32 %v4574, %v4575
        %v4577 = vsel %vm2235, %v4539, 0.0
        %v4578 = vadd.f32 %v4576, %v4577
        %v4579 = vsel %vm2235, %v4540, 0.0
        %v4580 = vadd.f32 %v4578, %v4579
        %v4581 = vsel %vm2235, %v4541, 0.0
        %v4582 = vadd.f32 %v4580, %v4581
        %v4583 = vsel %vm2235, %v4542, 0.0
        %v4584 = vadd.f32 %v4582, %v4583
        %v4585 = vsel %vm2235, %v4543, 0.0
        %v4586 = vadd.f32 %v4584, %v4585
        %v4587 = vsel %vm2235, %v4544, 0.0
        %v4588 = vadd.f32 %v4586, %v4587
        %v4589 = vsel %vm2235, %v4545, 0.0
        %v4590 = vadd.f32 %v4588, %v4589
        %v4591 = vsel %vm2235, %v4546, 0.0
        %v4592 = vadd.f32 %v4590, %v4591
        %v4593 = vsel %vm2235, %v4547, 0.0
        %v4594 = vadd.f32 %v4592, %v4593
        %v4595 = vsel %vm2235, %v4548, 0.0
        %v4596 = vadd.f32 %v4594, %v4595
        %v4597 = vsel %vm2235, %v4549, 0.0
        %v4598 = vadd.f32 %v4596, %v4597
        %v4599 = vsel %vm2235, %v4550, 0.0
        %v4600 = vadd.f32 %v4598, %v4599
        %v4601 = vsel %vm2235, %v4551, 0.0
        %v4602 = vadd.f32 %v4600, %v4601
        %v4603 = vsel %vm2235, %v4552, 0.0
        %v4604 = vadd.f32 %v4602, %v4603
        %v4605 = vsel %vm2235, %v4553, 0.0
        %v4606 = vadd.f32 %v4604, %v4605
        %v4607 = vsel %vm2235, %v4554, 0.0
        %v4608 = vadd.f32 %v4606, %v4607
        %v4609 = vsel %vm2235, %v4555, 0.0
        %v4610 = vadd.f32 %v4608, %v4609
        %v4611 = vsel %vm2235, %v4556, 0.0
        %v4612 = vadd.f32 %v4610, %v4611
        %v4613 = vsel %vm2235, %v4557, 0.0
        %v4614 = vadd.f32 %v4612, %v4613
        %v4615 = vsel %vm2235, %v4558, 0.0
        %v4616 = vadd.f32 %v4614, %v4615
        %v4617 = vsel %vm2235, %v4559, 0.0
        %v4618 = vadd.f32 %v4616, %v4617
        %v4619 = vsel %vm2235, %v4560, 0.0
        %v4620 = vadd.f32 %v4618, %v4619
        %v4621 = vsel %vm2235, %v4561, 0.0
        %v4622 = vadd.f32 %v4620, %v4621
        %v4623 = vsel %vm2235, %v4562, 0.0
        %v4624 = vadd.f32 %v4622, %v4623
        %v4625 = vsel %vm2235, %v4563, 0.0
        %v4626 = vadd.f32 %v4624, %v4625
        %4627 = vadd.xlane.f32.xlu0 %v4626
        %v4628 = vpop.xlane.xlu0 %4627
        %v4629 = vrot.slane %v4628, 4
        %v4630 = vadd.f32 %v4628, %v4629
        %v4631 = vrot.slane %v4630, 2
        %v4632 = vadd.f32 %v4630, %v4631
        %v4633 = vrot.slane %v4632, 1
        %v4634 = vadd.f32 %v4632, %v4633
        %s4635 = vtos %v4634
        %s4636 = smul.f32 %s4635, 0.25
        %s4637 = sadd.f32 %s4179, %s4636
        %s4638 = sld [smem:[#allocation2]]
        %s4639 = sadd.f32 %s4638, %s708
        %s4640 = scalar_lea.smem [#allocation2], 0
        %4641 = sst [smem:[%s4640]] %s4639
        %s4642 = sld [smem:[#allocation2 + $0x1]]
        %s4643 = sadd.f32 %s4642, %s4637
        %s4644 = scalar_lea.smem [#allocation2], 1
        %4645 = sst [smem:[%s4644]] %s4643
        // Predicated region
        $region53: #{tpu_custom_call.1} parent=47 // pred_check
          %p4646 = pneg %p507
        $region54: #{tpu_custom_call.1} parent=47 // pred_check_branch
          %4648 = sbr.rel (%p4646) target = $region56
        $region55: #{tpu_custom_call.1} parent=47 // pred_region
          %s4649 = sld [smem:[#allocation2]]
          %v4650 = vstv %s4649
          %4651 = vst [vmem:[%s444] sm:$0xff] %v4650
          %s4652 = sld [smem:[#allocation2 + $0x1]]
          %v4653 = vstv %s4652
          %4654 = vst [vmem:[%s451] sm:$0xff] %v4653
        $region56: #{tpu_custom_call.1} parent=47 // pred_fallthru
          _
        %s4655 = sand.u32 %s242, 1
        %s4656 = scalar_lea.sflag [#allocation4], %s4655
        %s4657 = sand.u32 %s242, 1
        %s4658 = smul.addr %s4657, 8
        %s4659 = scalar_lea.vmem [#allocation3], %s4658
        %s4660 = sand.u32 %s268, 1
        %s4661 = scalar_lea.sflag [#allocation6], %s4660
        %s4662 = sand.u32 %s268, 1
        %s4663 = smul.addr %s4662, 8
        %s4664 = scalar_lea.vmem [#allocation5], %s4663
        // Predicated region
        $region57: #{tpu_custom_call.1} parent=47 // pred_check
          %p4665 = pneg %p252
        $region58: #{tpu_custom_call.1} parent=47 // pred_check_branch
          %4667 = sbr.rel (%p4665) target = $region60
        $region59: #{tpu_custom_call.1} parent=47 // pred_region
          %4669 = vsyncadd %s4656, 0
          %s4670 = smul.addr %s30, 8
          %s4671 = scalar_lea.hbm %s7, %s4670
          %s4673 = sshll.u32 %s4659, 4
          %s4674 = int_to_ptr.vmem [resolvable:$true] %s4673
          %s4675 = sshll.u32 %s4671, 4
          %s4676 = int_to_ptr.hbm [resolvable:$true] %s4675
          %4678 = dma.vmem_to_hbm [thread:$0]  %s4674, 128, %s4676, %s4656
        $region60: #{tpu_custom_call.1} parent=47 // pred_fallthru
          _
        // Predicated region
        $region61: #{tpu_custom_call.1} parent=47 // pred_check
          %p4679 = pneg %p278
        $region62: #{tpu_custom_call.1} parent=47 // pred_check_branch
          %4681 = sbr.rel (%p4679) target = $region64
        $region63: #{tpu_custom_call.1} parent=47 // pred_region
          %4683 = vsyncadd %s4661, 0
          %s4684 = smul.addr %s30, 8
          %s4685 = scalar_lea.hbm %s8, %s4684
          %s4687 = sshll.u32 %s4664, 4
          %s4688 = int_to_ptr.vmem [resolvable:$true] %s4687
          %s4689 = sshll.u32 %s4685, 4
          %s4690 = int_to_ptr.hbm [resolvable:$true] %s4689
          %4692 = dma.vmem_to_hbm [thread:$0]  %s4688, 128, %s4690, %s4661
        $region64: #{tpu_custom_call.1} parent=47 // pred_fallthru
          _
      $region48: #{tpu_custom_call.1} parent=5 // pred_fallthru
        _
      %p4693 = scmp.le.s32.totalorder 2, %s21
      // Predicated region
      $region65: #{tpu_custom_call.1} parent=5 // pred_check
        %p4694 = pneg %p4693
      $region66: #{tpu_custom_call.1} parent=5 // pred_check_branch
        %4696 = sbr.rel (%p4694) target = $region68
      $region67: #{tpu_custom_call.1} parent=5 // pred_region
        %s4697 = ssub.s32 %s21, 2
        // Predicated region
        $region69: #{tpu_custom_call.1} parent=67 // pred_check
          %p4698 = pneg %p258
        $region70: #{tpu_custom_call.1} parent=67 // pred_check_branch
          %4700 = sbr.rel (%p4698) target = $region72
        $region71: #{tpu_custom_call.1} parent=67 // pred_region
          %s4701 = sand.u32 %s243, 1
          %s4702 = scalar_lea.sflag [#allocation4], %s4701
          %s4703 = sand.u32 %s243, 1
          %s4704 = smul.addr %s4703, 8
          %s4705 = scalar_lea.vmem [#allocation3], %s4704
          %4707 = dma.done %s4702, 128
        $region72: #{tpu_custom_call.1} parent=67 // pred_fallthru
          _
        // Predicated region
        $region73: #{tpu_custom_call.1} parent=67 // pred_check
          %p4708 = pneg %p284
        $region74: #{tpu_custom_call.1} parent=67 // pred_check_branch
          %4710 = sbr.rel (%p4708) target = $region76
        $region75: #{tpu_custom_call.1} parent=67 // pred_region
          %s4711 = sand.u32 %s269, 1
          %s4712 = scalar_lea.sflag [#allocation6], %s4711
          %s4713 = sand.u32 %s269, 1
          %s4714 = smul.addr %s4713, 8
          %s4715 = scalar_lea.vmem [#allocation5], %s4714
          %4717 = dma.done %s4712, 128
        $region76: #{tpu_custom_call.1} parent=67 // pred_fallthru
          _
      $region68: #{tpu_custom_call.1} parent=5 // pred_fallthru
        _
    $region6: #{tpu_custom_call.1} parent=1 // loop_footer
      %s25 = sadd.s32 1, %s21
    $region7: #{tpu_custom_call.1} parent=1 // loop_footer_branch
      %20 = sbr.rel target = $region3
    $region8: #{tpu_custom_call.1} parent=1 // loop_exit
      _
    %4718 = vsyncpa [#allocation4], 1
    %s4719 = scalar_lea.sflag [#allocation4], 1
    %4720 = vsyncpa %s4719, 1
    %4721 = vsyncpa [#allocation6], 1
    %s4722 = scalar_lea.sflag [#allocation6], 1
    %4723 = vsyncpa %s4722, 1

</llo_original>
